<compile_context>
chip_gen: v7x
topology: tpu7x:2x2x1
jax: 0.10.0
libtpu: 0.0.40
codegen_flags: <defaults>
</compile_context>

<pallas_src>
import math

import jax
import jax.numpy as jnp
from jax.experimental import pallas as pl
from jax.experimental.pallas import tpu as pltpu

LANE = 128          # lane width: pad all feature dims to a multiple of this
SUBLANE = 8         # sublane width: pad the batch dim to a multiple of this
MAX_BATCH_TILE = 256


def _round_up(x, m):
    return ((x + m - 1) // m) * m


def _encoder_kernel(x_ref,
                    w1_ref, b1_ref,
                    w2_ref, b2_ref,
                    w3_ref, b3_ref,
                    w4_ref, b4_ref,
                    o_ref):
    """Fused 4-layer MLP on one batch tile.  All operands are VMEM-resident."""
    # Layer 1: (TB, IN_P) @ (IN_P, 512) + b -> ReLU
    h = jnp.dot(x_ref[...], w1_ref[...], preferred_element_type=jnp.float32)
    h = jnp.maximum(h + b1_ref[...], 0.0)
    # Layer 2: (TB, 512) @ (512, 512) + b -> ReLU
    h = jnp.dot(h.astype(w2_ref.dtype), w2_ref[...],
                preferred_element_type=jnp.float32)
    h = jnp.maximum(h + b2_ref[...], 0.0)
    # Layer 3: (TB, 512) @ (512, 2048) + b -> ReLU
    h = jnp.dot(h.astype(w3_ref.dtype), w3_ref[...],
                preferred_element_type=jnp.float32)
    h = jnp.maximum(h + b3_ref[...], 0.0)
    # Layer 4: (TB, 2048) @ (2048, OUT_P) + b   (no ReLU)
    h = jnp.dot(h.astype(w4_ref.dtype), w4_ref[...],
                preferred_element_type=jnp.float32)
    h = h + b4_ref[...]
    o_ref[...] = h.astype(o_ref.dtype)


def init_encoder_params(key, input_dim, feature_dim, dtype=jnp.float32):
    """PyTorch-style uniform(-1/sqrt(fan_in)) init, stored pre-padded.

    Weights are stored transposed as (in, out) and zero-padded so every dim is
    a multiple of 128.  Biases are stored as (1, out_padded).  Zero padding is
    mathematically exact: padded input columns / hidden units contribute 0.
    Returns (params, dims) where dims are the true (unpadded) layer sizes.
    """
    dims = [input_dim, 500, 500, 2000, feature_dim]
    padded = [_round_up(d, LANE) for d in dims]
    params = []
    for i in range(4):
        fan_in, fan_out = dims[i], dims[i + 1]
        pin, pout = padded[i], padded[i + 1]
        key, kw, kb = jax.random.split(key, 3)
        bound = 1.0 / math.sqrt(fan_in)
        w = jax.random.uniform(kw, (fan_in, fan_out), dtype, -bound, bound)
        b = jax.random.uniform(kb, (fan_out,), dtype, -bound, bound)
        w_pad = jnp.zeros((pin, pout), dtype).at[:fan_in, :fan_out].set(w)
        b_pad = jnp.zeros((1, pout), dtype).at[0, :fan_out].set(b)
        params.append((w_pad, b_pad))
    return params, dims


def encoder_forward(x, params, feature_dim, *, max_batch_tile=MAX_BATCH_TILE):
    """Runs the fused 4-layer encoder kernel; returns (B, feature_dim)."""
    B, in_dim = x.shape
    in_p = params[0][0].shape[0]
    out_p = params[-1][0].shape[1]

    # Batch tiling: TB is a multiple of 8, capped at max_batch_tile; the batch
    # is zero-padded up to a multiple of TB.
    b8 = _round_up(B, SUBLANE)
    if b8 <= max_batch_tile:
        tb = b8
        b_pad = b8
    else:
        tb = max_batch_tile
        b_pad = _round_up(B, tb)

    x_pad = jnp.zeros((b_pad, in_p), x.dtype).at[:B, :in_dim].set(x)

    # Activation tile walks the batch axis; weights/biases use a constant
    # index_map so they stay resident in VMEM across the whole grid.
    in_specs = [pl.BlockSpec((tb, in_p), lambda i: (i, 0))]
    flat_params = []
    for (w, b) in params:
        flat_params += [w, b]
        in_specs.append(pl.BlockSpec(w.shape, lambda i: (0, 0)))
        in_specs.append(pl.BlockSpec(b.shape, lambda i: (0, 0)))

    out = pl.pallas_call(
        _encoder_kernel,
        out_shape=jax.ShapeDtypeStruct((b_pad, out_p), x.dtype),
        grid=(b_pad // tb,),
        in_specs=in_specs,
        out_specs=pl.BlockSpec((tb, out_p), lambda i: (i, 0)),
        compiler_params=pltpu.CompilerParams(
            dimension_semantics=("parallel",),
            # Weights (~6.5 MB f32, double-buffered) + batch tiles +
            # intermediates stay well under this on v5e/v6e/v7x.
            vmem_limit_bytes=48 * 1024 * 1024,
        ),
    )(x_pad, *flat_params)

    return out[:B, :feature_dim]


def encoder_reference(x, params, dims):
    """Pure-JAX reference on the unpadded weights."""
    h = x
    n = len(params)
    for i, (w_pad, b_pad) in enumerate(params):
        w = w_pad[:dims[i], :dims[i + 1]]
        b = b_pad[0, :dims[i + 1]]
        h = h @ w + b
        if i < n - 1:
            h = jnp.maximum(h, 0.0)
    return h


if __name__ == "__main__":
    input_dim = 32
    feature_dim = 16
    batch = 8

    key = jax.random.PRNGKey(0)
    key_x, key_p = jax.random.split(key)
    x = jax.random.normal(key_x, (batch, input_dim), dtype=jnp.float32)
    params, dims = init_encoder_params(key_p, input_dim, feature_dim)

    out = encoder_forward(x, params, feature_dim)
    out = jax.block_until_ready(out)

    ref = encoder_reference(x, params, dims)
    assert out.shape == (batch, feature_dim)
    assert jnp.allclose(out, ref, atol=1e-4, rtol=1e-4)

    print("KERNEL_OK")
</pallas_src>

<mosaic_0001>
module attributes {stable_mosaic.version = 11 : i64} {
  func.func @_encoder_kernel(%arg0: i32, %arg1: memref<8x128xf32, #tpu.memory_space<vmem>>, %arg2: memref<128x512xf32, #tpu.memory_space<vmem>>, %arg3: memref<1x512xf32, #tpu.memory_space<vmem>>, %arg4: memref<512x512xf32, #tpu.memory_space<vmem>>, %arg5: memref<1x512xf32, #tpu.memory_space<vmem>>, %arg6: memref<512x2048xf32, #tpu.memory_space<vmem>>, %arg7: memref<1x2048xf32, #tpu.memory_space<vmem>>, %arg8: memref<2048x128xf32, #tpu.memory_space<vmem>>, %arg9: memref<1x128xf32, #tpu.memory_space<vmem>>, %arg10: memref<8x128xf32, #tpu.memory_space<vmem>>) attributes {dimension_semantics = [#tpu.dimension_semantics<parallel>], iteration_bounds = array<i64: 1>, scalar_prefetch = 0 : i64, scratch_operands = 0 : i64, tpu.core_type = #tpu.core_type<tc>, window_params = [{transform_indices = @transform_0, window_bounds = array<i64: 8, 128>}, {pipeline_mode = #tpu.pipeline_mode<synchronous>, transform_indices = @transform_1, window_bounds = array<i64: 128, 512>}, {pipeline_mode = #tpu.pipeline_mode<synchronous>, transform_indices = @transform_2, window_bounds = array<i64: 1, 512>}, {pipeline_mode = #tpu.pipeline_mode<synchronous>, transform_indices = @transform_3, window_bounds = array<i64: 512, 512>}, {pipeline_mode = #tpu.pipeline_mode<synchronous>, transform_indices = @transform_4, window_bounds = array<i64: 1, 512>}, {pipeline_mode = #tpu.pipeline_mode<synchronous>, transform_indices = @transform_5, window_bounds = array<i64: 512, 2048>}, {pipeline_mode = #tpu.pipeline_mode<synchronous>, transform_indices = @transform_6, window_bounds = array<i64: 1, 2048>}, {pipeline_mode = #tpu.pipeline_mode<synchronous>, transform_indices = @transform_7, window_bounds = array<i64: 2048, 128>}, {pipeline_mode = #tpu.pipeline_mode<synchronous>, transform_indices = @transform_8, window_bounds = array<i64: 1, 128>}, {transform_indices = @transform_9, window_bounds = array<i64: 8, 128>}]} {
    %c0 = arith.constant 0 : index
    %c0_0 = arith.constant 0 : index
    %0 = vector.load %arg1[%c0, %c0_0] : memref<8x128xf32, #tpu.memory_space<vmem>>, vector<8x128xf32>
    %c0_1 = arith.constant 0 : index
    %c0_2 = arith.constant 0 : index
    %1 = vector.load %arg2[%c0_1, %c0_2] : memref<128x512xf32, #tpu.memory_space<vmem>>, vector<128x512xf32>
    %cst = arith.constant dense<0.000000e+00> : vector<8x512xf32>
    %2 = tpu.matmul %0, %1, %cst {dimension_numbers = #tpu.dot_dimension_numbers<[1], [0], [0], [1], [0, 0, 1, 1], [], []>} : vector<8x128xf32>, vector<128x512xf32>, vector<8x512xf32> -> vector<8x512xf32>
    %c0_3 = arith.constant 0 : index
    %c0_4 = arith.constant 0 : index
    %3 = vector.load %arg3[%c0_3, %c0_4] : memref<1x512xf32, #tpu.memory_space<vmem>>, vector<1x512xf32>
    %4 = vector.broadcast %3 : vector<1x512xf32> to vector<8x512xf32>
    %5 = arith.addf %2, %4 : vector<8x512xf32>
    %cst_5 = arith.constant 0.000000e+00 : f32
    %6 = vector.broadcast %cst_5 : f32 to vector<8x512xf32>
    %7 = arith.maximumf %5, %6 : vector<8x512xf32>
    %c0_6 = arith.constant 0 : index
    %c0_7 = arith.constant 0 : index
    %8 = vector.load %arg4[%c0_6, %c0_7] : memref<512x512xf32, #tpu.memory_space<vmem>>, vector<512x512xf32>
    %cst_8 = arith.constant dense<0.000000e+00> : vector<8x512xf32>
    %9 = tpu.matmul %7, %8, %cst_8 {dimension_numbers = #tpu.dot_dimension_numbers<[1], [0], [0], [1], [0, 0, 1, 1], [], []>} : vector<8x512xf32>, vector<512x512xf32>, vector<8x512xf32> -> vector<8x512xf32>
    %c0_9 = arith.constant 0 : index
    %c0_10 = arith.constant 0 : index
    %10 = vector.load %arg5[%c0_9, %c0_10] : memref<1x512xf32, #tpu.memory_space<vmem>>, vector<1x512xf32>
    %11 = vector.broadcast %10 : vector<1x512xf32> to vector<8x512xf32>
    %12 = arith.addf %9, %11 : vector<8x512xf32>
    %cst_11 = arith.constant 0.000000e+00 : f32
    %13 = vector.broadcast %cst_11 : f32 to vector<8x512xf32>
    %14 = arith.maximumf %12, %13 : vector<8x512xf32>
    %c0_12 = arith.constant 0 : index
    %c0_13 = arith.constant 0 : index
    %15 = vector.load %arg6[%c0_12, %c0_13] : memref<512x2048xf32, #tpu.memory_space<vmem>>, vector<512x2048xf32>
    %cst_14 = arith.constant dense<0.000000e+00> : vector<8x2048xf32>
    %16 = tpu.matmul %14, %15, %cst_14 {dimension_numbers = #tpu.dot_dimension_numbers<[1], [0], [0], [1], [0, 0, 1, 1], [], []>} : vector<8x512xf32>, vector<512x2048xf32>, vector<8x2048xf32> -> vector<8x2048xf32>
    %c0_15 = arith.constant 0 : index
    %c0_16 = arith.constant 0 : index
    %17 = vector.load %arg7[%c0_15, %c0_16] : memref<1x2048xf32, #tpu.memory_space<vmem>>, vector<1x2048xf32>
    %18 = vector.broadcast %17 : vector<1x2048xf32> to vector<8x2048xf32>
    %19 = arith.addf %16, %18 : vector<8x2048xf32>
    %cst_17 = arith.constant 0.000000e+00 : f32
    %20 = vector.broadcast %cst_17 : f32 to vector<8x2048xf32>
    %21 = arith.maximumf %19, %20 : vector<8x2048xf32>
    %c0_18 = arith.constant 0 : index
    %c0_19 = arith.constant 0 : index
    %22 = vector.load %arg8[%c0_18, %c0_19] : memref<2048x128xf32, #tpu.memory_space<vmem>>, vector<2048x128xf32>
    %cst_20 = arith.constant dense<0.000000e+00> : vector<8x128xf32>
    %23 = tpu.matmul %21, %22, %cst_20 {dimension_numbers = #tpu.dot_dimension_numbers<[1], [0], [0], [1], [0, 0, 1, 1], [], []>} : vector<8x2048xf32>, vector<2048x128xf32>, vector<8x128xf32> -> vector<8x128xf32>
    %c0_21 = arith.constant 0 : index
    %c0_22 = arith.constant 0 : index
    %24 = vector.load %arg9[%c0_21, %c0_22] : memref<1x128xf32, #tpu.memory_space<vmem>>, vector<1x128xf32>
    %25 = vector.broadcast %24 : vector<1x128xf32> to vector<8x128xf32>
    %26 = arith.addf %23, %25 : vector<8x128xf32>
    %c0_23 = arith.constant 0 : index
    %c0_24 = arith.constant 0 : index
    %27 = vector.load %arg10[%c0_23, %c0_24] : memref<8x128xf32, #tpu.memory_space<vmem>>, vector<8x128xf32>
    tpu.vector_store %arg10[%c0_23, %c0_24], %26 {strides = array<i32>} : memref<8x128xf32, #tpu.memory_space<vmem>>, vector<8x128xf32>,
    return
  }
  func.func @transform_0(%arg0: i32) -> (i32, i32) {
    %c0_i32 = arith.constant 0 : i32
    %c0_i32_0 = arith.constant 0 : i32
    return %arg0, %c0_i32 : i32, i32
  }
  func.func @transform_1(%arg0: i32) -> (i32, i32) {
    %c0_i32 = arith.constant 0 : i32
    %c0_i32_0 = arith.constant 0 : i32
    %c0_i32_1 = arith.constant 0 : i32
    return %c0_i32, %c0_i32_0 : i32, i32
  }
  func.func @transform_2(%arg0: i32) -> (i32, i32) {
    %c0_i32 = arith.constant 0 : i32
    %c0_i32_0 = arith.constant 0 : i32
    %c0_i32_1 = arith.constant 0 : i32
    return %c0_i32, %c0_i32_0 : i32, i32
  }
  func.func @transform_3(%arg0: i32) -> (i32, i32) {
    %c0_i32 = arith.constant 0 : i32
    %c0_i32_0 = arith.constant 0 : i32
    %c0_i32_1 = arith.constant 0 : i32
    return %c0_i32, %c0_i32_0 : i32, i32
  }
  func.func @transform_4(%arg0: i32) -> (i32, i32) {
    %c0_i32 = arith.constant 0 : i32
    %c0_i32_0 = arith.constant 0 : i32
    %c0_i32_1 = arith.constant 0 : i32
    return %c0_i32, %c0_i32_0 : i32, i32
  }
  func.func @transform_5(%arg0: i32) -> (i32, i32) {
    %c0_i32 = arith.constant 0 : i32
    %c0_i32_0 = arith.constant 0 : i32
    %c0_i32_1 = arith.constant 0 : i32
    return %c0_i32, %c0_i32_0 : i32, i32
  }
  func.func @transform_6(%arg0: i32) -> (i32, i32) {
    %c0_i32 = arith.constant 0 : i32
    %c0_i32_0 = arith.constant 0 : i32
    %c0_i32_1 = arith.constant 0 : i32
    return %c0_i32, %c0_i32_0 : i32, i32
  }
  func.func @transform_7(%arg0: i32) -> (i32, i32) {
    %c0_i32 = arith.constant 0 : i32
    %c0_i32_0 = arith.constant 0 : i32
    %c0_i32_1 = arith.constant 0 : i32
    return %c0_i32, %c0_i32_0 : i32, i32
  }
  func.func @transform_8(%arg0: i32) -> (i32, i32) {
    %c0_i32 = arith.constant 0 : i32
    %c0_i32_0 = arith.constant 0 : i32
    %c0_i32_1 = arith.constant 0 : i32
    return %c0_i32, %c0_i32_0 : i32, i32
  }
  func.func @transform_9(%arg0: i32) -> (i32, i32) {
    %c0_i32 = arith.constant 0 : i32
    %c0_i32_0 = arith.constant 0 : i32
    return %arg0, %c0_i32 : i32, i32
  }
}

</mosaic_0001>

<llo_original>
// kernel: tpu_custom_call.1
$region0: #{tpu_custom_call.1}
  #allocation0 [shape = 'u32[]', space=smem, size = 0x4, offset = 0x4, fixed_abs, tag = 'smem constant byte address 0x4 - core index']
  #allocation1 [shape = 'u32[144,128]{1,0:T(1,128)}', space=vmem, size = 0x12000, scoped, tag = 'internal scratch']
  %s0 = inlined_call_operand.hbm [shape: f32[8,128], index: 0, kind: input, shape index: {}]
  %s1 = inlined_call_operand.hbm [shape: f32[128,512], index: 1, kind: input, shape index: {}]
  %s2 = inlined_call_operand.hbm [shape: f32[1,512], index: 2, kind: input, shape index: {}]
  %s3 = inlined_call_operand.hbm [shape: f32[512,512], index: 3, kind: input, shape index: {}]
  %s4 = inlined_call_operand.hbm [shape: f32[1,512], index: 4, kind: input, shape index: {}]
  %s5 = inlined_call_operand.hbm [shape: f32[512,2048], index: 5, kind: input, shape index: {}]
  %s6 = inlined_call_operand.hbm [shape: f32[1,2048], index: 6, kind: input, shape index: {}]
  %s7 = inlined_call_operand.hbm [shape: f32[2048,128], index: 7, kind: input, shape index: {}]
  %s8 = inlined_call_operand.hbm [shape: f32[1,128], index: 8, kind: input, shape index: {}]
  %s9 = inlined_call_operand.hbm [shape: f32[8,128], index: 9, kind: output, shape index: {}]
  %s10 = sld [smem:[#allocation0]]
  $region82: #{tpu_custom_call.1} parent=0
    _
  %s12 = ssub.s32 1, %s10
  %s13 = scalar_select 0, %s12, %s10
  $region1: #{tpu_custom_call.1} parent=0
    #allocation2 [shape = 'u8[4096]{0}', space=vmem, size = 0x1000, scoped, tag = 'input window, operand 0, single buffered']
    #allocation3 [shape = 's32[1]{0}', space=sflag, size = 0x4, scoped, tag = 'scoped memory for tpu_custom_call.1']
    #allocation4 [shape = 's32[1]{0}', space=sflag, size = 0x4, scoped, tag = 'scoped memory for tpu_custom_call.1']
    #allocation5 [shape = 'u8[262144]{0}', space=vmem, size = 0x40000, scoped, tag = 'input window, operand 1, single buffered']
    #allocation6 [shape = 's32[1]{0}', space=sflag, size = 0x4, scoped, tag = 'scoped memory for tpu_custom_call.1']
    #allocation7 [shape = 'u8[2048]{0}', space=vmem, size = 0x800, scoped, tag = 'input window, operand 2, single buffered']
    #allocation8 [shape = 'u8[1048576]{0}', space=vmem, size = 0x100000, scoped, tag = 'input window, operand 3, single buffered']
    #allocation9 [shape = 's32[1]{0}', space=sflag, size = 0x4, scoped, tag = 'scoped memory for tpu_custom_call.1']
    #allocation10 [shape = 'u8[2048]{0}', space=vmem, size = 0x800, scoped, tag = 'input window, operand 4, single buffered']
    #allocation11 [shape = 'u8[4194304]{0}', space=vmem, size = 0x400000, scoped, tag = 'input window, operand 5, single buffered']
    #allocation12 [shape = 's32[1]{0}', space=sflag, size = 0x4, scoped, tag = 'scoped memory for tpu_custom_call.1']
    #allocation13 [shape = 'u8[8192]{0}', space=vmem, size = 0x2000, scoped, tag = 'input window, operand 6, single buffered']
    #allocation14 [shape = 'u8[1048576]{0}', space=vmem, size = 0x100000, scoped, tag = 'input window, operand 7, single buffered']
    #allocation15 [shape = 's32[1]{0}', space=sflag, size = 0x4, scoped, tag = 'scoped memory for tpu_custom_call.1']
    #allocation16 [shape = 'u8[512]{0}', space=vmem, size = 0x400, scoped, tag = 'input window, operand 8, single buffered']
    #allocation17 [shape = 'u8[4096]{0}', space=vmem, size = 0x1000, scoped, tag = 'output window, operand 0, single buffered']
    %14 = vsyncpa [#allocation3], 0
    %15 = vsyncpa [#allocation6], 0
    %16 = vsyncpa [#allocation9], 0
    %17 = vsyncpa [#allocation12], 0
    %18 = vsyncpa [#allocation15], 0
    %19 = vsyncpa [#allocation4], 0
    // Predicated region
    $region2: #{tpu_custom_call.1} parent=1 // pred_check
      _
    $region3: #{tpu_custom_call.1} parent=1 // pred_check_branch
      %21 = sbr.rel (0) target = $region5
    $region4: #{tpu_custom_call.1} parent=1 // pred_region
      %s23 = ssub.s32 128, 128
      %24 = vsyncadd [#allocation3], %s23
      %s26 = sshll.u32 [#allocation2], 4
      %s27 = int_to_ptr.vmem [resolvable:$true] %s26
      %29 = dma.hbm_to_vmem [thread:$0]  %s0, 128, %s27, [#allocation3]
    $region5: #{tpu_custom_call.1} parent=1 // pred_fallthru
      _
    // Predicated region
    $region6: #{tpu_custom_call.1} parent=1 // pred_check
      _
    $region7: #{tpu_custom_call.1} parent=1 // pred_check_branch
      %31 = sbr.rel (0) target = $region9
    $region8: #{tpu_custom_call.1} parent=1 // pred_region
      %s33 = ssub.s32 8192, 8192
      %34 = vsyncadd [#allocation6], %s33
      %s35 = sshll.u32 [#allocation5], 4
      %s36 = int_to_ptr.vmem [resolvable:$true] %s35
      %41 = dma.hbm_to_vmem [thread:$0]  %s1, 8192, %s36, [#allocation6], 512, 512, 32
    $region9: #{tpu_custom_call.1} parent=1 // pred_fallthru
      _
    // Predicated region
    $region10: #{tpu_custom_call.1} parent=1 // pred_check
      _
    $region11: #{tpu_custom_call.1} parent=1 // pred_check_branch
      %43 = sbr.rel (0) target = $region13
    $region12: #{tpu_custom_call.1} parent=1 // pred_region
      %s45 = ssub.s32 64, 64
      %46 = vsyncadd [#allocation6], %s45
      %s48 = sshll.u32 [#allocation7], 4
      %s49 = int_to_ptr.vmem [resolvable:$true] %s48
      %51 = dma.hbm_to_vmem [thread:$0]  %s2, 64, %s49, [#allocation6]
    $region13: #{tpu_custom_call.1} parent=1 // pred_fallthru
      _
    // Predicated region
    $region14: #{tpu_custom_call.1} parent=1 // pred_check
      _
    $region15: #{tpu_custom_call.1} parent=1 // pred_check_branch
      %53 = sbr.rel (0) target = $region17
    $region16: #{tpu_custom_call.1} parent=1 // pred_region
      %s55 = ssub.s32 32768, 32768
      %56 = vsyncadd [#allocation9], %s55
      %s57 = sshll.u32 [#allocation8], 4
      %s58 = int_to_ptr.vmem [resolvable:$true] %s57
      %63 = dma.hbm_to_vmem [thread:$0]  %s3, 32768, %s58, [#allocation9], 512, 512, 32
    $region17: #{tpu_custom_call.1} parent=1 // pred_fallthru
      _
    // Predicated region
    $region18: #{tpu_custom_call.1} parent=1 // pred_check
      _
    $region19: #{tpu_custom_call.1} parent=1 // pred_check_branch
      %65 = sbr.rel (0) target = $region21
    $region20: #{tpu_custom_call.1} parent=1 // pred_region
      %s67 = ssub.s32 64, 64
      %68 = vsyncadd [#allocation9], %s67
      %s70 = sshll.u32 [#allocation10], 4
      %s71 = int_to_ptr.vmem [resolvable:$true] %s70
      %73 = dma.hbm_to_vmem [thread:$0]  %s4, 64, %s71, [#allocation9]
    $region21: #{tpu_custom_call.1} parent=1 // pred_fallthru
      _
    // Predicated region
    $region22: #{tpu_custom_call.1} parent=1 // pred_check
      _
    $region23: #{tpu_custom_call.1} parent=1 // pred_check_branch
      %75 = sbr.rel (0) target = $region25
    $region24: #{tpu_custom_call.1} parent=1 // pred_region
      %s77 = ssub.s32 131072, 131072
      %78 = vsyncadd [#allocation12], %s77
      %s79 = sshll.u32 [#allocation11], 4
      %s80 = int_to_ptr.vmem [resolvable:$true] %s79
      %85 = dma.hbm_to_vmem [thread:$0]  %s5, 131072, %s80, [#allocation12], 2048, 2048, 128
    $region25: #{tpu_custom_call.1} parent=1 // pred_fallthru
      _
    // Predicated region
    $region26: #{tpu_custom_call.1} parent=1 // pred_check
      _
    $region27: #{tpu_custom_call.1} parent=1 // pred_check_branch
      %87 = sbr.rel (0) target = $region29
    $region28: #{tpu_custom_call.1} parent=1 // pred_region
      %s89 = ssub.s32 256, 256
      %90 = vsyncadd [#allocation12], %s89
      %s92 = sshll.u32 [#allocation13], 4
      %s93 = int_to_ptr.vmem [resolvable:$true] %s92
      %95 = dma.hbm_to_vmem [thread:$0]  %s6, 256, %s93, [#allocation12]
    $region29: #{tpu_custom_call.1} parent=1 // pred_fallthru
      _
    // Predicated region
    $region30: #{tpu_custom_call.1} parent=1 // pred_check
      _
    $region31: #{tpu_custom_call.1} parent=1 // pred_check_branch
      %97 = sbr.rel (0) target = $region33
    $region32: #{tpu_custom_call.1} parent=1 // pred_region
      %s99 = ssub.s32 32768, 32768
      %100 = vsyncadd [#allocation15], %s99
      %s101 = sshll.u32 [#allocation14], 4
      %s102 = int_to_ptr.vmem [resolvable:$true] %s101
      %107 = dma.hbm_to_vmem [thread:$0]  %s7, 32768, %s102, [#allocation15], 128, 128, 8
    $region33: #{tpu_custom_call.1} parent=1 // pred_fallthru
      _
    // Predicated region
    $region34: #{tpu_custom_call.1} parent=1 // pred_check
      _
    $region35: #{tpu_custom_call.1} parent=1 // pred_check_branch
      %109 = sbr.rel (0) target = $region37
    $region36: #{tpu_custom_call.1} parent=1 // pred_region
      %s111 = ssub.s32 16, 16
      %112 = vsyncadd [#allocation15], %s111
      %s114 = sshll.u32 [#allocation16], 4
      %s115 = int_to_ptr.vmem [resolvable:$true] %s114
      %117 = dma.hbm_to_vmem [thread:$0]  %s8, 16, %s115, [#allocation15]
    $region37: #{tpu_custom_call.1} parent=1 // pred_fallthru
      _
    // Predicated region
    $region38: #{tpu_custom_call.1} parent=1 // pred_check
      _
    $region39: #{tpu_custom_call.1} parent=1 // pred_check_branch
      %119 = sbr.rel (0) target = $region41
    $region40: #{tpu_custom_call.1} parent=1 // pred_region
      %120 = dma.done [#allocation3], 128
    $region41: #{tpu_custom_call.1} parent=1 // pred_fallthru
      _
    // Predicated region
    $region42: #{tpu_custom_call.1} parent=1 // pred_check
      _
    $region43: #{tpu_custom_call.1} parent=1 // pred_check_branch
      %122 = sbr.rel (0) target = $region45
    $region44: #{tpu_custom_call.1} parent=1 // pred_region
      %123 = dma.done [#allocation6], 8192
    $region45: #{tpu_custom_call.1} parent=1 // pred_fallthru
      _
    // Predicated region
    $region46: #{tpu_custom_call.1} parent=1 // pred_check
      _
    $region47: #{tpu_custom_call.1} parent=1 // pred_check_branch
      %125 = sbr.rel (0) target = $region49
    $region48: #{tpu_custom_call.1} parent=1 // pred_region
      %126 = dma.done [#allocation6], 64
    $region49: #{tpu_custom_call.1} parent=1 // pred_fallthru
      _
    // Predicated region
    $region50: #{tpu_custom_call.1} parent=1 // pred_check
      _
    $region51: #{tpu_custom_call.1} parent=1 // pred_check_branch
      %128 = sbr.rel (0) target = $region53
    $region52: #{tpu_custom_call.1} parent=1 // pred_region
      %129 = dma.done [#allocation9], 32768
    $region53: #{tpu_custom_call.1} parent=1 // pred_fallthru
      _
    // Predicated region
    $region54: #{tpu_custom_call.1} parent=1 // pred_check
      _
    $region55: #{tpu_custom_call.1} parent=1 // pred_check_branch
      %131 = sbr.rel (0) target = $region57
    $region56: #{tpu_custom_call.1} parent=1 // pred_region
      %132 = dma.done [#allocation9], 64
    $region57: #{tpu_custom_call.1} parent=1 // pred_fallthru
      _
    // Predicated region
    $region58: #{tpu_custom_call.1} parent=1 // pred_check
      _
    $region59: #{tpu_custom_call.1} parent=1 // pred_check_branch
      %134 = sbr.rel (0) target = $region61
    $region60: #{tpu_custom_call.1} parent=1 // pred_region
      %135 = dma.done [#allocation12], 131072
    $region61: #{tpu_custom_call.1} parent=1 // pred_fallthru
      _
    // Predicated region
    $region62: #{tpu_custom_call.1} parent=1 // pred_check
      _
    $region63: #{tpu_custom_call.1} parent=1 // pred_check_branch
      %137 = sbr.rel (0) target = $region65
    $region64: #{tpu_custom_call.1} parent=1 // pred_region
      %138 = dma.done [#allocation12], 256
    $region65: #{tpu_custom_call.1} parent=1 // pred_fallthru
      _
    // Predicated region
    $region66: #{tpu_custom_call.1} parent=1 // pred_check
      _
    $region67: #{tpu_custom_call.1} parent=1 // pred_check_branch
      %140 = sbr.rel (0) target = $region69
    $region68: #{tpu_custom_call.1} parent=1 // pred_region
      %141 = dma.done [#allocation15], 32768
    $region69: #{tpu_custom_call.1} parent=1 // pred_fallthru
      _
    // Predicated region
    $region70: #{tpu_custom_call.1} parent=1 // pred_check
      _
    $region71: #{tpu_custom_call.1} parent=1 // pred_check_branch
      %143 = sbr.rel (0) target = $region73
    $region72: #{tpu_custom_call.1} parent=1 // pred_region
      %144 = dma.done [#allocation15], 16
    $region73: #{tpu_custom_call.1} parent=1 // pred_fallthru
      _
    %v145 = vld [vmem:[#allocation2] sm:$0xff]
    %v146 = vld [vmem:[#allocation5] sm:$0xff]
    %v147 = vld [vmem:[#allocation5 + $0x8] sm:$0xff]
    %v148 = vld [vmem:[#allocation5 + $0x10] sm:$0xff]
    %v149 = vld [vmem:[#allocation5 + $0x18] sm:$0xff]
    %v150 = vld [vmem:[#allocation5 + $0x20] sm:$0xff]
    %v151 = vld [vmem:[#allocation5 + $0x28] sm:$0xff]
    %v152 = vld [vmem:[#allocation5 + $0x30] sm:$0xff]
    %v153 = vld [vmem:[#allocation5 + $0x38] sm:$0xff]
    %v154 = vld [vmem:[#allocation5 + $0x40] sm:$0xff]
    %v155 = vld [vmem:[#allocation5 + $0x48] sm:$0xff]
    %v156 = vld [vmem:[#allocation5 + $0x50] sm:$0xff]
    %v157 = vld [vmem:[#allocation5 + $0x58] sm:$0xff]
    %v158 = vld [vmem:[#allocation5 + $0x60] sm:$0xff]
    %v159 = vld [vmem:[#allocation5 + $0x68] sm:$0xff]
    %v160 = vld [vmem:[#allocation5 + $0x70] sm:$0xff]
    %v161 = vld [vmem:[#allocation5 + $0x78] sm:$0xff]
    %v162 = vld [vmem:[#allocation5 + $0x80] sm:$0xff]
    %v163 = vld [vmem:[#allocation5 + $0x88] sm:$0xff]
    %v164 = vld [vmem:[#allocation5 + $0x90] sm:$0xff]
    %v165 = vld [vmem:[#allocation5 + $0x98] sm:$0xff]
    %v166 = vld [vmem:[#allocation5 + $0xa0] sm:$0xff]
    %v167 = vld [vmem:[#allocation5 + $0xa8] sm:$0xff]
    %v168 = vld [vmem:[#allocation5 + $0xb0] sm:$0xff]
    %v169 = vld [vmem:[#allocation5 + $0xb8] sm:$0xff]
    %v170 = vld [vmem:[#allocation5 + $0xc0] sm:$0xff]
    %v171 = vld [vmem:[#allocation5 + $0xc8] sm:$0xff]
    %v172 = vld [vmem:[#allocation5 + $0xd0] sm:$0xff]
    %v173 = vld [vmem:[#allocation5 + $0xd8] sm:$0xff]
    %v174 = vld [vmem:[#allocation5 + $0xe0] sm:$0xff]
    %v175 = vld [vmem:[#allocation5 + $0xe8] sm:$0xff]
    %v176 = vld [vmem:[#allocation5 + $0xf0] sm:$0xff]
    %v177 = vld [vmem:[#allocation5 + $0xf8] sm:$0xff]
    %v178 = vld [vmem:[#allocation5 + $0x100] sm:$0xff]
    %v179 = vld [vmem:[#allocation5 + $0x108] sm:$0xff]
    %v180 = vld [vmem:[#allocation5 + $0x110] sm:$0xff]
    %v181 = vld [vmem:[#allocation5 + $0x118] sm:$0xff]
    %v182 = vld [vmem:[#allocation5 + $0x120] sm:$0xff]
    %v183 = vld [vmem:[#allocation5 + $0x128] sm:$0xff]
    %v184 = vld [vmem:[#allocation5 + $0x130] sm:$0xff]
    %v185 = vld [vmem:[#allocation5 + $0x138] sm:$0xff]
    %v186 = vld [vmem:[#allocation5 + $0x140] sm:$0xff]
    %v187 = vld [vmem:[#allocation5 + $0x148] sm:$0xff]
    %v188 = vld [vmem:[#allocation5 + $0x150] sm:$0xff]
    %v189 = vld [vmem:[#allocation5 + $0x158] sm:$0xff]
    %v190 = vld [vmem:[#allocation5 + $0x160] sm:$0xff]
    %v191 = vld [vmem:[#allocation5 + $0x168] sm:$0xff]
    %v192 = vld [vmem:[#allocation5 + $0x170] sm:$0xff]
    %v193 = vld [vmem:[#allocation5 + $0x178] sm:$0xff]
    %v194 = vld [vmem:[#allocation5 + $0x180] sm:$0xff]
    %v195 = vld [vmem:[#allocation5 + $0x188] sm:$0xff]
    %v196 = vld [vmem:[#allocation5 + $0x190] sm:$0xff]
    %v197 = vld [vmem:[#allocation5 + $0x198] sm:$0xff]
    %v198 = vld [vmem:[#allocation5 + $0x1a0] sm:$0xff]
    %v199 = vld [vmem:[#allocation5 + $0x1a8] sm:$0xff]
    %v200 = vld [vmem:[#allocation5 + $0x1b0] sm:$0xff]
    %v201 = vld [vmem:[#allocation5 + $0x1b8] sm:$0xff]
    %v202 = vld [vmem:[#allocation5 + $0x1c0] sm:$0xff]
    %v203 = vld [vmem:[#allocation5 + $0x1c8] sm:$0xff]
    %v204 = vld [vmem:[#allocation5 + $0x1d0] sm:$0xff]
    %v205 = vld [vmem:[#allocation5 + $0x1d8] sm:$0xff]
    %v206 = vld [vmem:[#allocation5 + $0x1e0] sm:$0xff]
    %v207 = vld [vmem:[#allocation5 + $0x1e8] sm:$0xff]
    %v208 = vld [vmem:[#allocation5 + $0x1f0] sm:$0xff]
    %v209 = vld [vmem:[#allocation5 + $0x1f8] sm:$0xff]
    %v210 = vld [vmem:[#allocation7] sm:$0xf]
    %v212 = vlaneseq
    %v213 = vshrl.u32 %v212, 7
    %v214 = vsub.s32 0, %v213
    %v215 = vrot.slane %v210, %v214
    %v216 = vlaneseq
    %v217 = vshrl.u32 %v216, 7
    %v218 = vsub.s32 1, %v217
    %v219 = vrot.slane %v210, %v218
    %v220 = vlaneseq
    %v221 = vshrl.u32 %v220, 7
    %v222 = vsub.s32 2, %v221
    %v223 = vrot.slane %v210, %v222
    %v224 = vlaneseq
    %v225 = vshrl.u32 %v224, 7
    %v226 = vsub.s32 3, %v225
    %v227 = vrot.slane %v210, %v226
    %232 = vmatprep.subr.mxu0 %v147
    %233 = vmatpush1.msra.mxu0 %v146
    %234 = vmatprep.subr.mxu0 %v151
    %235 = vmatpush1.msra.mxu0 %v150
    %236 = vmatprep.subr.mxu0 %v155
    %237 = vmatpush1.msra.mxu0 %v154
    %238 = vmatprep.subr.mxu0 %v159
    %239 = vmatpush1.msra.mxu0 %v158
    %240 = vmatprep.subr.mxu0 %v163
    %241 = vmatpush1.msra.mxu0 %v162
    %242 = vmatprep.subr.mxu0 %v167
    %243 = vmatpush1.msra.mxu0 %v166
    %244 = vmatprep.subr.mxu0 %v171
    %245 = vmatpush1.msra.mxu0 %v170
    %246 = vmatprep.subr.mxu0 %v175
    %247 = vmatpush1.msra.mxu0 %v174
    %248 = vmatprep.subr.mxu0 %v179
    %249 = vmatpush1.msra.mxu0 %v178
    %250 = vmatprep.subr.mxu0 %v183
    %251 = vmatpush1.msra.mxu0 %v182
    %252 = vmatprep.subr.mxu0 %v187
    %253 = vmatpush1.msra.mxu0 %v186
    %254 = vmatprep.subr.mxu0 %v191
    %255 = vmatpush1.msra.mxu0 %v190
    %256 = vmatprep.subr.mxu0 %v195
    %257 = vmatpush1.msra.mxu0 %v194
    %258 = vmatprep.subr.mxu0 %v199
    %259 = vmatpush1.msra.mxu0 %v198
    %260 = vmatprep.subr.mxu0 %v203
    %261 = vmatpush1.msra.mxu0 %v202
    %262 = vmatprep.subr.mxu0 %v207
    %263 = vmatpush1.msra.mxu0 %v206
    %264 = vmatprep.subr.mxu0 0.0
    %265 = vmatpush1.msra.mxu0 0.0
    %266 = vmatprep.subr.mxu0 0.0
    %267 = vmatpush1.msra.mxu0 0.0
    %268 = vmatprep.subr.mxu0 0.0
    %269 = vmatpush1.msra.mxu0 0.0
    %270 = vmatprep.subr.mxu0 0.0
    %271 = vmatpush1.msra.mxu0 0.0
    %272 = vmatprep.subr.mxu0 0.0
    %273 = vmatpush1.msra.mxu0 0.0
    %274 = vmatprep.subr.mxu0 0.0
    %275 = vmatpush1.msra.mxu0 0.0
    %276 = vmatprep.subr.mxu0 0.0
    %277 = vmatpush1.msra.mxu0 0.0
    %278 = vmatprep.subr.mxu0 0.0
    %279 = vmatpush1.msra.mxu0 0.0
    %280 = vmatprep.subr.mxu0 0.0
    %281 = vmatpush1.msra.mxu0 0.0
    %282 = vmatprep.subr.mxu0 0.0
    %283 = vmatpush1.msra.mxu0 0.0
    %284 = vmatprep.subr.mxu0 0.0
    %285 = vmatpush1.msra.mxu0 0.0
    %286 = vmatprep.subr.mxu0 0.0
    %287 = vmatpush1.msra.mxu0 0.0
    %288 = vmatprep.subr.mxu0 0.0
    %289 = vmatpush1.msra.mxu0 0.0
    %290 = vmatprep.subr.mxu0 0.0
    %291 = vmatpush1.msra.mxu0 0.0
    %292 = vmatprep.subr.mxu0 0.0
    %293 = vmatpush1.msra.mxu0 0.0
    %294 = vmatprep.subr.mxu0 0.0
    %295 = vmatpush1.msra.mxu0 0.0
    %296 = vmatprep.mubr.f32.mxu0 0.0
    %297 = vmatmul.mubr.f32.gmra.mrb[0].mxu0 %v145
    %v298 = vpop.f32.mrb[0].mxu0
    %v299 = vadd.f32 %v215, %v298
    %v300 = vpop.f32.mrb[0].mxu0
    %v301 = vadd.f32 %v219, %v300
    %302 = vdwg.mxu0
    %303 = vmatprep.subr.mxu0 %v149
    %304 = vmatpush1.msra.mxu0 %v148
    %305 = vmatprep.subr.mxu0 %v153
    %306 = vmatpush1.msra.mxu0 %v152
    %307 = vmatprep.subr.mxu0 %v157
    %308 = vmatpush1.msra.mxu0 %v156
    %309 = vmatprep.subr.mxu0 %v161
    %310 = vmatpush1.msra.mxu0 %v160
    %311 = vmatprep.subr.mxu0 %v165
    %312 = vmatpush1.msra.mxu0 %v164
    %313 = vmatprep.subr.mxu0 %v169
    %314 = vmatpush1.msra.mxu0 %v168
    %315 = vmatprep.subr.mxu0 %v173
    %316 = vmatpush1.msra.mxu0 %v172
    %317 = vmatprep.subr.mxu0 %v177
    %318 = vmatpush1.msra.mxu0 %v176
    %319 = vmatprep.subr.mxu0 %v181
    %320 = vmatpush1.msra.mxu0 %v180
    %321 = vmatprep.subr.mxu0 %v185
    %322 = vmatpush1.msra.mxu0 %v184
    %323 = vmatprep.subr.mxu0 %v189
    %324 = vmatpush1.msra.mxu0 %v188
    %325 = vmatprep.subr.mxu0 %v193
    %326 = vmatpush1.msra.mxu0 %v192
    %327 = vmatprep.subr.mxu0 %v197
    %328 = vmatpush1.msra.mxu0 %v196
    %329 = vmatprep.subr.mxu0 %v201
    %330 = vmatpush1.msra.mxu0 %v200
    %331 = vmatprep.subr.mxu0 %v205
    %332 = vmatpush1.msra.mxu0 %v204
    %333 = vmatprep.subr.mxu0 %v209
    %334 = vmatpush1.msra.mxu0 %v208
    %335 = vmatprep.subr.mxu0 0.0
    %336 = vmatpush1.msra.mxu0 0.0
    %337 = vmatprep.subr.mxu0 0.0
    %338 = vmatpush1.msra.mxu0 0.0
    %339 = vmatprep.subr.mxu0 0.0
    %340 = vmatpush1.msra.mxu0 0.0
    %341 = vmatprep.subr.mxu0 0.0
    %342 = vmatpush1.msra.mxu0 0.0
    %343 = vmatprep.subr.mxu0 0.0
    %344 = vmatpush1.msra.mxu0 0.0
    %345 = vmatprep.subr.mxu0 0.0
    %346 = vmatpush1.msra.mxu0 0.0
    %347 = vmatprep.subr.mxu0 0.0
    %348 = vmatpush1.msra.mxu0 0.0
    %349 = vmatprep.subr.mxu0 0.0
    %350 = vmatpush1.msra.mxu0 0.0
    %351 = vmatprep.subr.mxu0 0.0
    %352 = vmatpush1.msra.mxu0 0.0
    %353 = vmatprep.subr.mxu0 0.0
    %354 = vmatpush1.msra.mxu0 0.0
    %355 = vmatprep.subr.mxu0 0.0
    %356 = vmatpush1.msra.mxu0 0.0
    %357 = vmatprep.subr.mxu0 0.0
    %358 = vmatpush1.msra.mxu0 0.0
    %359 = vmatprep.subr.mxu0 0.0
    %360 = vmatpush1.msra.mxu0 0.0
    %361 = vmatprep.subr.mxu0 0.0
    %362 = vmatpush1.msra.mxu0 0.0
    %363 = vmatprep.subr.mxu0 0.0
    %364 = vmatpush1.msra.mxu0 0.0
    %365 = vmatprep.subr.mxu0 0.0
    %366 = vmatpush1.msra.mxu0 0.0
    %367 = vmatprep.mubr.f32.mxu0 0.0
    %368 = vmatmul.mubr.f32.gmra.mrb[0].mxu0 %v145
    %v369 = vpop.f32.mrb[0].mxu0
    %v370 = vadd.f32 %v223, %v369
    %v371 = vpop.f32.mrb[0].mxu0
    %v372 = vadd.f32 %v227, %v371
    %373 = vdwg.mxu0
    %v374 = vmax.f32 %v299, 0.0
    %v375 = vmax.f32 %v301, 0.0
    %v376 = vmax.f32 %v370, 0.0
    %v377 = vmax.f32 %v372, 0.0
    %v378 = vld [vmem:[#allocation8] sm:$0xff]
    %v379 = vld [vmem:[#allocation8 + $0x8] sm:$0xff]
    %v380 = vld [vmem:[#allocation8 + $0x10] sm:$0xff]
    %v381 = vld [vmem:[#allocation8 + $0x18] sm:$0xff]
    %v382 = vld [vmem:[#allocation8 + $0x20] sm:$0xff]
    %v383 = vld [vmem:[#allocation8 + $0x28] sm:$0xff]
    %v384 = vld [vmem:[#allocation8 + $0x30] sm:$0xff]
    %v385 = vld [vmem:[#allocation8 + $0x38] sm:$0xff]
    %v386 = vld [vmem:[#allocation8 + $0x40] sm:$0xff]
    %v387 = vld [vmem:[#allocation8 + $0x48] sm:$0xff]
    %v388 = vld [vmem:[#allocation8 + $0x50] sm:$0xff]
    %v389 = vld [vmem:[#allocation8 + $0x58] sm:$0xff]
    %v390 = vld [vmem:[#allocation8 + $0x60] sm:$0xff]
    %v391 = vld [vmem:[#allocation8 + $0x68] sm:$0xff]
    %v392 = vld [vmem:[#allocation8 + $0x70] sm:$0xff]
    %v393 = vld [vmem:[#allocation8 + $0x78] sm:$0xff]
    %v394 = vld [vmem:[#allocation8 + $0x80] sm:$0xff]
    %v395 = vld [vmem:[#allocation8 + $0x88] sm:$0xff]
    %v396 = vld [vmem:[#allocation8 + $0x90] sm:$0xff]
    %v397 = vld [vmem:[#allocation8 + $0x98] sm:$0xff]
    %v398 = vld [vmem:[#allocation8 + $0xa0] sm:$0xff]
    %v399 = vld [vmem:[#allocation8 + $0xa8] sm:$0xff]
    %v400 = vld [vmem:[#allocation8 + $0xb0] sm:$0xff]
    %v401 = vld [vmem:[#allocation8 + $0xb8] sm:$0xff]
    %v402 = vld [vmem:[#allocation8 + $0xc0] sm:$0xff]
    %v403 = vld [vmem:[#allocation8 + $0xc8] sm:$0xff]
    %v404 = vld [vmem:[#allocation8 + $0xd0] sm:$0xff]
    %v405 = vld [vmem:[#allocation8 + $0xd8] sm:$0xff]
    %v406 = vld [vmem:[#allocation8 + $0xe0] sm:$0xff]
    %v407 = vld [vmem:[#allocation8 + $0xe8] sm:$0xff]
    %v408 = vld [vmem:[#allocation8 + $0xf0] sm:$0xff]
    %v409 = vld [vmem:[#allocation8 + $0xf8] sm:$0xff]
    %v410 = vld [vmem:[#allocation8 + $0x100] sm:$0xff]
    %v411 = vld [vmem:[#allocation8 + $0x108] sm:$0xff]
    %v412 = vld [vmem:[#allocation8 + $0x110] sm:$0xff]
    %v413 = vld [vmem:[#allocation8 + $0x118] sm:$0xff]
    %v414 = vld [vmem:[#allocation8 + $0x120] sm:$0xff]
    %v415 = vld [vmem:[#allocation8 + $0x128] sm:$0xff]
    %v416 = vld [vmem:[#allocation8 + $0x130] sm:$0xff]
    %v417 = vld [vmem:[#allocation8 + $0x138] sm:$0xff]
    %v418 = vld [vmem:[#allocation8 + $0x140] sm:$0xff]
    %v419 = vld [vmem:[#allocation8 + $0x148] sm:$0xff]
    %v420 = vld [vmem:[#allocation8 + $0x150] sm:$0xff]
    %v421 = vld [vmem:[#allocation8 + $0x158] sm:$0xff]
    %v422 = vld [vmem:[#allocation8 + $0x160] sm:$0xff]
    %v423 = vld [vmem:[#allocation8 + $0x168] sm:$0xff]
    %v424 = vld [vmem:[#allocation8 + $0x170] sm:$0xff]
    %v425 = vld [vmem:[#allocation8 + $0x178] sm:$0xff]
    %v426 = vld [vmem:[#allocation8 + $0x180] sm:$0xff]
    %v427 = vld [vmem:[#allocation8 + $0x188] sm:$0xff]
    %v428 = vld [vmem:[#allocation8 + $0x190] sm:$0xff]
    %v429 = vld [vmem:[#allocation8 + $0x198] sm:$0xff]
    %v430 = vld [vmem:[#allocation8 + $0x1a0] sm:$0xff]
    %v431 = vld [vmem:[#allocation8 + $0x1a8] sm:$0xff]
    %v432 = vld [vmem:[#allocation8 + $0x1b0] sm:$0xff]
    %v433 = vld [vmem:[#allocation8 + $0x1b8] sm:$0xff]
    %v434 = vld [vmem:[#allocation8 + $0x1c0] sm:$0xff]
    %v435 = vld [vmem:[#allocation8 + $0x1c8] sm:$0xff]
    %v436 = vld [vmem:[#allocation8 + $0x1d0] sm:$0xff]
    %v437 = vld [vmem:[#allocation8 + $0x1d8] sm:$0xff]
    %v438 = vld [vmem:[#allocation8 + $0x1e0] sm:$0xff]
    %v439 = vld [vmem:[#allocation8 + $0x1e8] sm:$0xff]
    %v440 = vld [vmem:[#allocation8 + $0x1f0] sm:$0xff]
    %v441 = vld [vmem:[#allocation8 + $0x1f8] sm:$0xff]
    %v442 = vld [vmem:[#allocation8 + $0x200] sm:$0xff]
    %v443 = vld [vmem:[#allocation8 + $0x208] sm:$0xff]
    %v444 = vld [vmem:[#allocation8 + $0x210] sm:$0xff]
    %v445 = vld [vmem:[#allocation8 + $0x218] sm:$0xff]
    %v446 = vld [vmem:[#allocation8 + $0x220] sm:$0xff]
    %v447 = vld [vmem:[#allocation8 + $0x228] sm:$0xff]
    %v448 = vld [vmem:[#allocation8 + $0x230] sm:$0xff]
    %v449 = vld [vmem:[#allocation8 + $0x238] sm:$0xff]
    %v450 = vld [vmem:[#allocation8 + $0x240] sm:$0xff]
    %v451 = vld [vmem:[#allocation8 + $0x248] sm:$0xff]
    %v452 = vld [vmem:[#allocation8 + $0x250] sm:$0xff]
    %v453 = vld [vmem:[#allocation8 + $0x258] sm:$0xff]
    %v454 = vld [vmem:[#allocation8 + $0x260] sm:$0xff]
    %v455 = vld [vmem:[#allocation8 + $0x268] sm:$0xff]
    %v456 = vld [vmem:[#allocation8 + $0x270] sm:$0xff]
    %v457 = vld [vmem:[#allocation8 + $0x278] sm:$0xff]
    %v458 = vld [vmem:[#allocation8 + $0x280] sm:$0xff]
    %v459 = vld [vmem:[#allocation8 + $0x288] sm:$0xff]
    %v460 = vld [vmem:[#allocation8 + $0x290] sm:$0xff]
    %v461 = vld [vmem:[#allocation8 + $0x298] sm:$0xff]
    %v462 = vld [vmem:[#allocation8 + $0x2a0] sm:$0xff]
    %v463 = vld [vmem:[#allocation8 + $0x2a8] sm:$0xff]
    %v464 = vld [vmem:[#allocation8 + $0x2b0] sm:$0xff]
    %v465 = vld [vmem:[#allocation8 + $0x2b8] sm:$0xff]
    %v466 = vld [vmem:[#allocation8 + $0x2c0] sm:$0xff]
    %v467 = vld [vmem:[#allocation8 + $0x2c8] sm:$0xff]
    %v468 = vld [vmem:[#allocation8 + $0x2d0] sm:$0xff]
    %v469 = vld [vmem:[#allocation8 + $0x2d8] sm:$0xff]
    %v470 = vld [vmem:[#allocation8 + $0x2e0] sm:$0xff]
    %v471 = vld [vmem:[#allocation8 + $0x2e8] sm:$0xff]
    %v472 = vld [vmem:[#allocation8 + $0x2f0] sm:$0xff]
    %v473 = vld [vmem:[#allocation8 + $0x2f8] sm:$0xff]
    %v474 = vld [vmem:[#allocation8 + $0x300] sm:$0xff]
    %v475 = vld [vmem:[#allocation8 + $0x308] sm:$0xff]
    %v476 = vld [vmem:[#allocation8 + $0x310] sm:$0xff]
    %v477 = vld [vmem:[#allocation8 + $0x318] sm:$0xff]
    %v478 = vld [vmem:[#allocation8 + $0x320] sm:$0xff]
    %v479 = vld [vmem:[#allocation8 + $0x328] sm:$0xff]
    %v480 = vld [vmem:[#allocation8 + $0x330] sm:$0xff]
    %v481 = vld [vmem:[#allocation8 + $0x338] sm:$0xff]
    %v482 = vld [vmem:[#allocation8 + $0x340] sm:$0xff]
    %v483 = vld [vmem:[#allocation8 + $0x348] sm:$0xff]
    %v484 = vld [vmem:[#allocation8 + $0x350] sm:$0xff]
    %v485 = vld [vmem:[#allocation8 + $0x358] sm:$0xff]
    %v486 = vld [vmem:[#allocation8 + $0x360] sm:$0xff]
    %v487 = vld [vmem:[#allocation8 + $0x368] sm:$0xff]
    %v488 = vld [vmem:[#allocation8 + $0x370] sm:$0xff]
    %v489 = vld [vmem:[#allocation8 + $0x378] sm:$0xff]
    %v490 = vld [vmem:[#allocation8 + $0x380] sm:$0xff]
    %v491 = vld [vmem:[#allocation8 + $0x388] sm:$0xff]
    %v492 = vld [vmem:[#allocation8 + $0x390] sm:$0xff]
    %v493 = vld [vmem:[#allocation8 + $0x398] sm:$0xff]
    %v494 = vld [vmem:[#allocation8 + $0x3a0] sm:$0xff]
    %v495 = vld [vmem:[#allocation8 + $0x3a8] sm:$0xff]
    %v496 = vld [vmem:[#allocation8 + $0x3b0] sm:$0xff]
    %v497 = vld [vmem:[#allocation8 + $0x3b8] sm:$0xff]
    %v498 = vld [vmem:[#allocation8 + $0x3c0] sm:$0xff]
    %v499 = vld [vmem:[#allocation8 + $0x3c8] sm:$0xff]
    %v500 = vld [vmem:[#allocation8 + $0x3d0] sm:$0xff]
    %v501 = vld [vmem:[#allocation8 + $0x3d8] sm:$0xff]
    %v502 = vld [vmem:[#allocation8 + $0x3e0] sm:$0xff]
    %v503 = vld [vmem:[#allocation8 + $0x3e8] sm:$0xff]
    %v504 = vld [vmem:[#allocation8 + $0x3f0] sm:$0xff]
    %v505 = vld [vmem:[#allocation8 + $0x3f8] sm:$0xff]
    %v506 = vld [vmem:[#allocation8 + $0x400] sm:$0xff]
    %v507 = vld [vmem:[#allocation8 + $0x408] sm:$0xff]
    %v508 = vld [vmem:[#allocation8 + $0x410] sm:$0xff]
    %v509 = vld [vmem:[#allocation8 + $0x418] sm:$0xff]
    %v510 = vld [vmem:[#allocation8 + $0x420] sm:$0xff]
    %v511 = vld [vmem:[#allocation8 + $0x428] sm:$0xff]
    %v512 = vld [vmem:[#allocation8 + $0x430] sm:$0xff]
    %v513 = vld [vmem:[#allocation8 + $0x438] sm:$0xff]
    %v514 = vld [vmem:[#allocation8 + $0x440] sm:$0xff]
    %v515 = vld [vmem:[#allocation8 + $0x448] sm:$0xff]
    %v516 = vld [vmem:[#allocation8 + $0x450] sm:$0xff]
    %v517 = vld [vmem:[#allocation8 + $0x458] sm:$0xff]
    %v518 = vld [vmem:[#allocation8 + $0x460] sm:$0xff]
    %v519 = vld [vmem:[#allocation8 + $0x468] sm:$0xff]
    %v520 = vld [vmem:[#allocation8 + $0x470] sm:$0xff]
    %v521 = vld [vmem:[#allocation8 + $0x478] sm:$0xff]
    %v522 = vld [vmem:[#allocation8 + $0x480] sm:$0xff]
    %v523 = vld [vmem:[#allocation8 + $0x488] sm:$0xff]
    %v524 = vld [vmem:[#allocation8 + $0x490] sm:$0xff]
    %v525 = vld [vmem:[#allocation8 + $0x498] sm:$0xff]
    %v526 = vld [vmem:[#allocation8 + $0x4a0] sm:$0xff]
    %v527 = vld [vmem:[#allocation8 + $0x4a8] sm:$0xff]
    %v528 = vld [vmem:[#allocation8 + $0x4b0] sm:$0xff]
    %v529 = vld [vmem:[#allocation8 + $0x4b8] sm:$0xff]
    %v530 = vld [vmem:[#allocation8 + $0x4c0] sm:$0xff]
    %v531 = vld [vmem:[#allocation8 + $0x4c8] sm:$0xff]
    %v532 = vld [vmem:[#allocation8 + $0x4d0] sm:$0xff]
    %v533 = vld [vmem:[#allocation8 + $0x4d8] sm:$0xff]
    %v534 = vld [vmem:[#allocation8 + $0x4e0] sm:$0xff]
    %v535 = vld [vmem:[#allocation8 + $0x4e8] sm:$0xff]
    %v536 = vld [vmem:[#allocation8 + $0x4f0] sm:$0xff]
    %v537 = vld [vmem:[#allocation8 + $0x4f8] sm:$0xff]
    %v538 = vld [vmem:[#allocation8 + $0x500] sm:$0xff]
    %v539 = vld [vmem:[#allocation8 + $0x508] sm:$0xff]
    %v540 = vld [vmem:[#allocation8 + $0x510] sm:$0xff]
    %v541 = vld [vmem:[#allocation8 + $0x518] sm:$0xff]
    %v542 = vld [vmem:[#allocation8 + $0x520] sm:$0xff]
    %v543 = vld [vmem:[#allocation8 + $0x528] sm:$0xff]
    %v544 = vld [vmem:[#allocation8 + $0x530] sm:$0xff]
    %v545 = vld [vmem:[#allocation8 + $0x538] sm:$0xff]
    %v546 = vld [vmem:[#allocation8 + $0x540] sm:$0xff]
    %v547 = vld [vmem:[#allocation8 + $0x548] sm:$0xff]
    %v548 = vld [vmem:[#allocation8 + $0x550] sm:$0xff]
    %v549 = vld [vmem:[#allocation8 + $0x558] sm:$0xff]
    %v550 = vld [vmem:[#allocation8 + $0x560] sm:$0xff]
    %v551 = vld [vmem:[#allocation8 + $0x568] sm:$0xff]
    %v552 = vld [vmem:[#allocation8 + $0x570] sm:$0xff]
    %v553 = vld [vmem:[#allocation8 + $0x578] sm:$0xff]
    %v554 = vld [vmem:[#allocation8 + $0x580] sm:$0xff]
    %v555 = vld [vmem:[#allocation8 + $0x588] sm:$0xff]
    %v556 = vld [vmem:[#allocation8 + $0x590] sm:$0xff]
    %v557 = vld [vmem:[#allocation8 + $0x598] sm:$0xff]
    %v558 = vld [vmem:[#allocation8 + $0x5a0] sm:$0xff]
    %v559 = vld [vmem:[#allocation8 + $0x5a8] sm:$0xff]
    %v560 = vld [vmem:[#allocation8 + $0x5b0] sm:$0xff]
    %v561 = vld [vmem:[#allocation8 + $0x5b8] sm:$0xff]
    %v562 = vld [vmem:[#allocation8 + $0x5c0] sm:$0xff]
    %v563 = vld [vmem:[#allocation8 + $0x5c8] sm:$0xff]
    %v564 = vld [vmem:[#allocation8 + $0x5d0] sm:$0xff]
    %v565 = vld [vmem:[#allocation8 + $0x5d8] sm:$0xff]
    %v566 = vld [vmem:[#allocation8 + $0x5e0] sm:$0xff]
    %v567 = vld [vmem:[#allocation8 + $0x5e8] sm:$0xff]
    %v568 = vld [vmem:[#allocation8 + $0x5f0] sm:$0xff]
    %v569 = vld [vmem:[#allocation8 + $0x5f8] sm:$0xff]
    %v570 = vld [vmem:[#allocation8 + $0x600] sm:$0xff]
    %v571 = vld [vmem:[#allocation8 + $0x608] sm:$0xff]
    %v572 = vld [vmem:[#allocation8 + $0x610] sm:$0xff]
    %v573 = vld [vmem:[#allocation8 + $0x618] sm:$0xff]
    %v574 = vld [vmem:[#allocation8 + $0x620] sm:$0xff]
    %v575 = vld [vmem:[#allocation8 + $0x628] sm:$0xff]
    %v576 = vld [vmem:[#allocation8 + $0x630] sm:$0xff]
    %v577 = vld [vmem:[#allocation8 + $0x638] sm:$0xff]
    %v578 = vld [vmem:[#allocation8 + $0x640] sm:$0xff]
    %v579 = vld [vmem:[#allocation8 + $0x648] sm:$0xff]
    %v580 = vld [vmem:[#allocation8 + $0x650] sm:$0xff]
    %v581 = vld [vmem:[#allocation8 + $0x658] sm:$0xff]
    %v582 = vld [vmem:[#allocation8 + $0x660] sm:$0xff]
    %v583 = vld [vmem:[#allocation8 + $0x668] sm:$0xff]
    %v584 = vld [vmem:[#allocation8 + $0x670] sm:$0xff]
    %v585 = vld [vmem:[#allocation8 + $0x678] sm:$0xff]
    %v586 = vld [vmem:[#allocation8 + $0x680] sm:$0xff]
    %v587 = vld [vmem:[#allocation8 + $0x688] sm:$0xff]
    %v588 = vld [vmem:[#allocation8 + $0x690] sm:$0xff]
    %v589 = vld [vmem:[#allocation8 + $0x698] sm:$0xff]
    %v590 = vld [vmem:[#allocation8 + $0x6a0] sm:$0xff]
    %v591 = vld [vmem:[#allocation8 + $0x6a8] sm:$0xff]
    %v592 = vld [vmem:[#allocation8 + $0x6b0] sm:$0xff]
    %v593 = vld [vmem:[#allocation8 + $0x6b8] sm:$0xff]
    %v594 = vld [vmem:[#allocation8 + $0x6c0] sm:$0xff]
    %v595 = vld [vmem:[#allocation8 + $0x6c8] sm:$0xff]
    %v596 = vld [vmem:[#allocation8 + $0x6d0] sm:$0xff]
    %v597 = vld [vmem:[#allocation8 + $0x6d8] sm:$0xff]
    %v598 = vld [vmem:[#allocation8 + $0x6e0] sm:$0xff]
    %v599 = vld [vmem:[#allocation8 + $0x6e8] sm:$0xff]
    %v600 = vld [vmem:[#allocation8 + $0x6f0] sm:$0xff]
    %v601 = vld [vmem:[#allocation8 + $0x6f8] sm:$0xff]
    %v602 = vld [vmem:[#allocation8 + $0x700] sm:$0xff]
    %v603 = vld [vmem:[#allocation8 + $0x708] sm:$0xff]
    %v604 = vld [vmem:[#allocation8 + $0x710] sm:$0xff]
    %v605 = vld [vmem:[#allocation8 + $0x718] sm:$0xff]
    %v606 = vld [vmem:[#allocation8 + $0x720] sm:$0xff]
    %v607 = vld [vmem:[#allocation8 + $0x728] sm:$0xff]
    %v608 = vld [vmem:[#allocation8 + $0x730] sm:$0xff]
    %v609 = vld [vmem:[#allocation8 + $0x738] sm:$0xff]
    %v610 = vld [vmem:[#allocation8 + $0x740] sm:$0xff]
    %v611 = vld [vmem:[#allocation8 + $0x748] sm:$0xff]
    %v612 = vld [vmem:[#allocation8 + $0x750] sm:$0xff]
    %v613 = vld [vmem:[#allocation8 + $0x758] sm:$0xff]
    %v614 = vld [vmem:[#allocation8 + $0x760] sm:$0xff]
    %v615 = vld [vmem:[#allocation8 + $0x768] sm:$0xff]
    %v616 = vld [vmem:[#allocation8 + $0x770] sm:$0xff]
    %v617 = vld [vmem:[#allocation8 + $0x778] sm:$0xff]
    %v618 = vld [vmem:[#allocation8 + $0x780] sm:$0xff]
    %v619 = vld [vmem:[#allocation8 + $0x788] sm:$0xff]
    %v620 = vld [vmem:[#allocation8 + $0x790] sm:$0xff]
    %v621 = vld [vmem:[#allocation8 + $0x798] sm:$0xff]
    %v622 = vld [vmem:[#allocation8 + $0x7a0] sm:$0xff]
    %v623 = vld [vmem:[#allocation8 + $0x7a8] sm:$0xff]
    %v624 = vld [vmem:[#allocation8 + $0x7b0] sm:$0xff]
    %v625 = vld [vmem:[#allocation8 + $0x7b8] sm:$0xff]
    %v626 = vld [vmem:[#allocation8 + $0x7c0] sm:$0xff]
    %v627 = vld [vmem:[#allocation8 + $0x7c8] sm:$0xff]
    %v628 = vld [vmem:[#allocation8 + $0x7d0] sm:$0xff]
    %v629 = vld [vmem:[#allocation8 + $0x7d8] sm:$0xff]
    %v630 = vld [vmem:[#allocation8 + $0x7e0] sm:$0xff]
    %v631 = vld [vmem:[#allocation8 + $0x7e8] sm:$0xff]
    %v632 = vld [vmem:[#allocation8 + $0x7f0] sm:$0xff]
    %v633 = vld [vmem:[#allocation8 + $0x7f8] sm:$0xff]
    %v634 = vld [vmem:[#allocation10] sm:$0xf]
    %v636 = vlaneseq
    %v637 = vshrl.u32 %v636, 7
    %v638 = vsub.s32 0, %v637
    %v639 = vrot.slane %v634, %v638
    %v640 = vlaneseq
    %v641 = vshrl.u32 %v640, 7
    %v642 = vsub.s32 1, %v641
    %v643 = vrot.slane %v634, %v642
    %v644 = vlaneseq
    %v645 = vshrl.u32 %v644, 7
    %v646 = vsub.s32 2, %v645
    %v647 = vrot.slane %v634, %v646
    %v648 = vlaneseq
    %v649 = vshrl.u32 %v648, 7
    %v650 = vsub.s32 3, %v649
    %v651 = vrot.slane %v634, %v650
    %656 = vmatprep.subr.mxu0 %v379
    %657 = vmatpush1.msra.mxu0 %v378
    %658 = vmatprep.subr.mxu0 %v383
    %659 = vmatpush1.msra.mxu0 %v382
    %660 = vmatprep.subr.mxu0 %v387
    %661 = vmatpush1.msra.mxu0 %v386
    %662 = vmatprep.subr.mxu0 %v391
    %663 = vmatpush1.msra.mxu0 %v390
    %664 = vmatprep.subr.mxu0 %v395
    %665 = vmatpush1.msra.mxu0 %v394
    %666 = vmatprep.subr.mxu0 %v399
    %667 = vmatpush1.msra.mxu0 %v398
    %668 = vmatprep.subr.mxu0 %v403
    %669 = vmatpush1.msra.mxu0 %v402
    %670 = vmatprep.subr.mxu0 %v407
    %671 = vmatpush1.msra.mxu0 %v406
    %672 = vmatprep.subr.mxu0 %v411
    %673 = vmatpush1.msra.mxu0 %v410
    %674 = vmatprep.subr.mxu0 %v415
    %675 = vmatpush1.msra.mxu0 %v414
    %676 = vmatprep.subr.mxu0 %v419
    %677 = vmatpush1.msra.mxu0 %v418
    %678 = vmatprep.subr.mxu0 %v423
    %679 = vmatpush1.msra.mxu0 %v422
    %680 = vmatprep.subr.mxu0 %v427
    %681 = vmatpush1.msra.mxu0 %v426
    %682 = vmatprep.subr.mxu0 %v431
    %683 = vmatpush1.msra.mxu0 %v430
    %684 = vmatprep.subr.mxu0 %v435
    %685 = vmatpush1.msra.mxu0 %v434
    %686 = vmatprep.subr.mxu0 %v439
    %687 = vmatpush1.msra.mxu0 %v438
    %688 = vmatprep.subr.mxu0 %v443
    %689 = vmatpush1.msra.mxu0 %v442
    %690 = vmatprep.subr.mxu0 %v447
    %691 = vmatpush1.msra.mxu0 %v446
    %692 = vmatprep.subr.mxu0 %v451
    %693 = vmatpush1.msra.mxu0 %v450
    %694 = vmatprep.subr.mxu0 %v455
    %695 = vmatpush1.msra.mxu0 %v454
    %696 = vmatprep.subr.mxu0 %v459
    %697 = vmatpush1.msra.mxu0 %v458
    %698 = vmatprep.subr.mxu0 %v463
    %699 = vmatpush1.msra.mxu0 %v462
    %700 = vmatprep.subr.mxu0 %v467
    %701 = vmatpush1.msra.mxu0 %v466
    %702 = vmatprep.subr.mxu0 %v471
    %703 = vmatpush1.msra.mxu0 %v470
    %704 = vmatprep.subr.mxu0 %v475
    %705 = vmatpush1.msra.mxu0 %v474
    %706 = vmatprep.subr.mxu0 %v479
    %707 = vmatpush1.msra.mxu0 %v478
    %708 = vmatprep.subr.mxu0 %v483
    %709 = vmatpush1.msra.mxu0 %v482
    %710 = vmatprep.subr.mxu0 %v487
    %711 = vmatpush1.msra.mxu0 %v486
    %712 = vmatprep.subr.mxu0 %v491
    %713 = vmatpush1.msra.mxu0 %v490
    %714 = vmatprep.subr.mxu0 %v495
    %715 = vmatpush1.msra.mxu0 %v494
    %716 = vmatprep.subr.mxu0 %v499
    %717 = vmatpush1.msra.mxu0 %v498
    %718 = vmatprep.subr.mxu0 %v503
    %719 = vmatpush1.msra.mxu0 %v502
    %720 = vmatprep.mubr.f32.mxu0 %v375
    %721 = vmatmul.mubr.f32.gmra.mrb[0].mxu0 %v374
    %v722 = vpop.f32.mrb[0].mxu0
    %v723 = vadd.f32 %v639, %v722
    %v724 = vpop.f32.mrb[0].mxu0
    %v725 = vadd.f32 %v643, %v724
    %726 = vdwg.mxu0
    %727 = vmatprep.subr.mxu0 %v507
    %728 = vmatpush1.msra.mxu0 %v506
    %729 = vmatprep.subr.mxu0 %v511
    %730 = vmatpush1.msra.mxu0 %v510
    %731 = vmatprep.subr.mxu0 %v515
    %732 = vmatpush1.msra.mxu0 %v514
    %733 = vmatprep.subr.mxu0 %v519
    %734 = vmatpush1.msra.mxu0 %v518
    %735 = vmatprep.subr.mxu0 %v523
    %736 = vmatpush1.msra.mxu0 %v522
    %737 = vmatprep.subr.mxu0 %v527
    %738 = vmatpush1.msra.mxu0 %v526
    %739 = vmatprep.subr.mxu0 %v531
    %740 = vmatpush1.msra.mxu0 %v530
    %741 = vmatprep.subr.mxu0 %v535
    %742 = vmatpush1.msra.mxu0 %v534
    %743 = vmatprep.subr.mxu0 %v539
    %744 = vmatpush1.msra.mxu0 %v538
    %745 = vmatprep.subr.mxu0 %v543
    %746 = vmatpush1.msra.mxu0 %v542
    %747 = vmatprep.subr.mxu0 %v547
    %748 = vmatpush1.msra.mxu0 %v546
    %749 = vmatprep.subr.mxu0 %v551
    %750 = vmatpush1.msra.mxu0 %v550
    %751 = vmatprep.subr.mxu0 %v555
    %752 = vmatpush1.msra.mxu0 %v554
    %753 = vmatprep.subr.mxu0 %v559
    %754 = vmatpush1.msra.mxu0 %v558
    %755 = vmatprep.subr.mxu0 %v563
    %756 = vmatpush1.msra.mxu0 %v562
    %757 = vmatprep.subr.mxu0 %v567
    %758 = vmatpush1.msra.mxu0 %v566
    %759 = vmatprep.subr.mxu0 %v571
    %760 = vmatpush1.msra.mxu0 %v570
    %761 = vmatprep.subr.mxu0 %v575
    %762 = vmatpush1.msra.mxu0 %v574
    %763 = vmatprep.subr.mxu0 %v579
    %764 = vmatpush1.msra.mxu0 %v578
    %765 = vmatprep.subr.mxu0 %v583
    %766 = vmatpush1.msra.mxu0 %v582
    %767 = vmatprep.subr.mxu0 %v587
    %768 = vmatpush1.msra.mxu0 %v586
    %769 = vmatprep.subr.mxu0 %v591
    %770 = vmatpush1.msra.mxu0 %v590
    %771 = vmatprep.subr.mxu0 %v595
    %772 = vmatpush1.msra.mxu0 %v594
    %773 = vmatprep.subr.mxu0 %v599
    %774 = vmatpush1.msra.mxu0 %v598
    %775 = vmatprep.subr.mxu0 %v603
    %776 = vmatpush1.msra.mxu0 %v602
    %777 = vmatprep.subr.mxu0 %v607
    %778 = vmatpush1.msra.mxu0 %v606
    %779 = vmatprep.subr.mxu0 %v611
    %780 = vmatpush1.msra.mxu0 %v610
    %781 = vmatprep.subr.mxu0 %v615
    %782 = vmatpush1.msra.mxu0 %v614
    %783 = vmatprep.subr.mxu0 %v619
    %784 = vmatpush1.msra.mxu0 %v618
    %785 = vmatprep.subr.mxu0 %v623
    %786 = vmatpush1.msra.mxu0 %v622
    %787 = vmatprep.subr.mxu0 %v627
    %788 = vmatpush1.msra.mxu0 %v626
    %789 = vmatprep.subr.mxu0 %v631
    %790 = vmatpush1.msra.mxu0 %v630
    %791 = vmatprep.mubr.f32.mxu0 %v377
    %792 = vmatmul.mubr.f32.gmra.mrb[0].mxu0 %v376
    %v793 = vpop.f32.mrb[0].mxu0
    %v794 = vadd.f32 %v723, %v793
    %v795 = vpop.f32.mrb[0].mxu0
    %v796 = vadd.f32 %v725, %v795
    %797 = vdwg.mxu0
    %798 = vmatprep.subr.mxu0 %v381
    %799 = vmatpush1.msra.mxu0 %v380
    %800 = vmatprep.subr.mxu0 %v385
    %801 = vmatpush1.msra.mxu0 %v384
    %802 = vmatprep.subr.mxu0 %v389
    %803 = vmatpush1.msra.mxu0 %v388
    %804 = vmatprep.subr.mxu0 %v393
    %805 = vmatpush1.msra.mxu0 %v392
    %806 = vmatprep.subr.mxu0 %v397
    %807 = vmatpush1.msra.mxu0 %v396
    %808 = vmatprep.subr.mxu0 %v401
    %809 = vmatpush1.msra.mxu0 %v400
    %810 = vmatprep.subr.mxu0 %v405
    %811 = vmatpush1.msra.mxu0 %v404
    %812 = vmatprep.subr.mxu0 %v409
    %813 = vmatpush1.msra.mxu0 %v408
    %814 = vmatprep.subr.mxu0 %v413
    %815 = vmatpush1.msra.mxu0 %v412
    %816 = vmatprep.subr.mxu0 %v417
    %817 = vmatpush1.msra.mxu0 %v416
    %818 = vmatprep.subr.mxu0 %v421
    %819 = vmatpush1.msra.mxu0 %v420
    %820 = vmatprep.subr.mxu0 %v425
    %821 = vmatpush1.msra.mxu0 %v424
    %822 = vmatprep.subr.mxu0 %v429
    %823 = vmatpush1.msra.mxu0 %v428
    %824 = vmatprep.subr.mxu0 %v433
    %825 = vmatpush1.msra.mxu0 %v432
    %826 = vmatprep.subr.mxu0 %v437
    %827 = vmatpush1.msra.mxu0 %v436
    %828 = vmatprep.subr.mxu0 %v441
    %829 = vmatpush1.msra.mxu0 %v440
    %830 = vmatprep.subr.mxu0 %v445
    %831 = vmatpush1.msra.mxu0 %v444
    %832 = vmatprep.subr.mxu0 %v449
    %833 = vmatpush1.msra.mxu0 %v448
    %834 = vmatprep.subr.mxu0 %v453
    %835 = vmatpush1.msra.mxu0 %v452
    %836 = vmatprep.subr.mxu0 %v457
    %837 = vmatpush1.msra.mxu0 %v456
    %838 = vmatprep.subr.mxu0 %v461
    %839 = vmatpush1.msra.mxu0 %v460
    %840 = vmatprep.subr.mxu0 %v465
    %841 = vmatpush1.msra.mxu0 %v464
    %842 = vmatprep.subr.mxu0 %v469
    %843 = vmatpush1.msra.mxu0 %v468
    %844 = vmatprep.subr.mxu0 %v473
    %845 = vmatpush1.msra.mxu0 %v472
    %846 = vmatprep.subr.mxu0 %v477
    %847 = vmatpush1.msra.mxu0 %v476
    %848 = vmatprep.subr.mxu0 %v481
    %849 = vmatpush1.msra.mxu0 %v480
    %850 = vmatprep.subr.mxu0 %v485
    %851 = vmatpush1.msra.mxu0 %v484
    %852 = vmatprep.subr.mxu0 %v489
    %853 = vmatpush1.msra.mxu0 %v488
    %854 = vmatprep.subr.mxu0 %v493
    %855 = vmatpush1.msra.mxu0 %v492
    %856 = vmatprep.subr.mxu0 %v497
    %857 = vmatpush1.msra.mxu0 %v496
    %858 = vmatprep.subr.mxu0 %v501
    %859 = vmatpush1.msra.mxu0 %v500
    %860 = vmatprep.subr.mxu0 %v505
    %861 = vmatpush1.msra.mxu0 %v504
    %862 = vmatprep.mubr.f32.mxu0 %v375
    %863 = vmatmul.mubr.f32.gmra.mrb[0].mxu0 %v374
    %v864 = vpop.f32.mrb[0].mxu0
    %v865 = vadd.f32 %v647, %v864
    %v866 = vpop.f32.mrb[0].mxu0
    %v867 = vadd.f32 %v651, %v866
    %868 = vdwg.mxu0
    %869 = vmatprep.subr.mxu0 %v509
    %870 = vmatpush1.msra.mxu0 %v508
    %871 = vmatprep.subr.mxu0 %v513
    %872 = vmatpush1.msra.mxu0 %v512
    %873 = vmatprep.subr.mxu0 %v517
    %874 = vmatpush1.msra.mxu0 %v516
    %875 = vmatprep.subr.mxu0 %v521
    %876 = vmatpush1.msra.mxu0 %v520
    %877 = vmatprep.subr.mxu0 %v525
    %878 = vmatpush1.msra.mxu0 %v524
    %879 = vmatprep.subr.mxu0 %v529
    %880 = vmatpush1.msra.mxu0 %v528
    %881 = vmatprep.subr.mxu0 %v533
    %882 = vmatpush1.msra.mxu0 %v532
    %883 = vmatprep.subr.mxu0 %v537
    %884 = vmatpush1.msra.mxu0 %v536
    %885 = vmatprep.subr.mxu0 %v541
    %886 = vmatpush1.msra.mxu0 %v540
    %887 = vmatprep.subr.mxu0 %v545
    %888 = vmatpush1.msra.mxu0 %v544
    %889 = vmatprep.subr.mxu0 %v549
    %890 = vmatpush1.msra.mxu0 %v548
    %891 = vmatprep.subr.mxu0 %v553
    %892 = vmatpush1.msra.mxu0 %v552
    %893 = vmatprep.subr.mxu0 %v557
    %894 = vmatpush1.msra.mxu0 %v556
    %895 = vmatprep.subr.mxu0 %v561
    %896 = vmatpush1.msra.mxu0 %v560
    %897 = vmatprep.subr.mxu0 %v565
    %898 = vmatpush1.msra.mxu0 %v564
    %899 = vmatprep.subr.mxu0 %v569
    %900 = vmatpush1.msra.mxu0 %v568
    %901 = vmatprep.subr.mxu0 %v573
    %902 = vmatpush1.msra.mxu0 %v572
    %903 = vmatprep.subr.mxu0 %v577
    %904 = vmatpush1.msra.mxu0 %v576
    %905 = vmatprep.subr.mxu0 %v581
    %906 = vmatpush1.msra.mxu0 %v580
    %907 = vmatprep.subr.mxu0 %v585
    %908 = vmatpush1.msra.mxu0 %v584
    %909 = vmatprep.subr.mxu0 %v589
    %910 = vmatpush1.msra.mxu0 %v588
    %911 = vmatprep.subr.mxu0 %v593
    %912 = vmatpush1.msra.mxu0 %v592
    %913 = vmatprep.subr.mxu0 %v597
    %914 = vmatpush1.msra.mxu0 %v596
    %915 = vmatprep.subr.mxu0 %v601
    %916 = vmatpush1.msra.mxu0 %v600
    %917 = vmatprep.subr.mxu0 %v605
    %918 = vmatpush1.msra.mxu0 %v604
    %919 = vmatprep.subr.mxu0 %v609
    %920 = vmatpush1.msra.mxu0 %v608
    %921 = vmatprep.subr.mxu0 %v613
    %922 = vmatpush1.msra.mxu0 %v612
    %923 = vmatprep.subr.mxu0 %v617
    %924 = vmatpush1.msra.mxu0 %v616
    %925 = vmatprep.subr.mxu0 %v621
    %926 = vmatpush1.msra.mxu0 %v620
    %927 = vmatprep.subr.mxu0 %v625
    %928 = vmatpush1.msra.mxu0 %v624
    %929 = vmatprep.subr.mxu0 %v629
    %930 = vmatpush1.msra.mxu0 %v628
    %931 = vmatprep.subr.mxu0 %v633
    %932 = vmatpush1.msra.mxu0 %v632
    %933 = vmatprep.mubr.f32.mxu0 %v377
    %934 = vmatmul.mubr.f32.gmra.mrb[0].mxu0 %v376
    %v935 = vpop.f32.mrb[0].mxu0
    %v936 = vadd.f32 %v865, %v935
    %v937 = vpop.f32.mrb[0].mxu0
    %v938 = vadd.f32 %v867, %v937
    %939 = vdwg.mxu0
    %v940 = vmax.f32 %v794, 0.0
    %v941 = vmax.f32 %v796, 0.0
    %v942 = vmax.f32 %v936, 0.0
    %v943 = vmax.f32 %v938, 0.0
    %v944 = vld [vmem:[#allocation11] sm:$0xff]
    %v945 = vld [vmem:[#allocation11 + $0x8] sm:$0xff]
    %v946 = vld [vmem:[#allocation11 + $0x10] sm:$0xff]
    %v947 = vld [vmem:[#allocation11 + $0x18] sm:$0xff]
    %v948 = vld [vmem:[#allocation11 + $0x20] sm:$0xff]
    %v949 = vld [vmem:[#allocation11 + $0x28] sm:$0xff]
    %v950 = vld [vmem:[#allocation11 + $0x30] sm:$0xff]
    %v951 = vld [vmem:[#allocation11 + $0x38] sm:$0xff]
    %v952 = vld [vmem:[#allocation11 + $0x40] sm:$0xff]
    %v953 = vld [vmem:[#allocation11 + $0x48] sm:$0xff]
    %v954 = vld [vmem:[#allocation11 + $0x50] sm:$0xff]
    %v955 = vld [vmem:[#allocation11 + $0x58] sm:$0xff]
    %v956 = vld [vmem:[#allocation11 + $0x60] sm:$0xff]
    %v957 = vld [vmem:[#allocation11 + $0x68] sm:$0xff]
    %v958 = vld [vmem:[#allocation11 + $0x70] sm:$0xff]
    %v959 = vld [vmem:[#allocation11 + $0x78] sm:$0xff]
    %v960 = vld [vmem:[#allocation11 + $0x80] sm:$0xff]
    %v961 = vld [vmem:[#allocation11 + $0x88] sm:$0xff]
    %v962 = vld [vmem:[#allocation11 + $0x90] sm:$0xff]
    %v963 = vld [vmem:[#allocation11 + $0x98] sm:$0xff]
    %v964 = vld [vmem:[#allocation11 + $0xa0] sm:$0xff]
    %v965 = vld [vmem:[#allocation11 + $0xa8] sm:$0xff]
    %v966 = vld [vmem:[#allocation11 + $0xb0] sm:$0xff]
    %v967 = vld [vmem:[#allocation11 + $0xb8] sm:$0xff]
    %v968 = vld [vmem:[#allocation11 + $0xc0] sm:$0xff]
    %v969 = vld [vmem:[#allocation11 + $0xc8] sm:$0xff]
    %v970 = vld [vmem:[#allocation11 + $0xd0] sm:$0xff]
    %v971 = vld [vmem:[#allocation11 + $0xd8] sm:$0xff]
    %v972 = vld [vmem:[#allocation11 + $0xe0] sm:$0xff]
    %v973 = vld [vmem:[#allocation11 + $0xe8] sm:$0xff]
    %v974 = vld [vmem:[#allocation11 + $0xf0] sm:$0xff]
    %v975 = vld [vmem:[#allocation11 + $0xf8] sm:$0xff]
    %v976 = vld [vmem:[#allocation11 + $0x100] sm:$0xff]
    %v977 = vld [vmem:[#allocation11 + $0x108] sm:$0xff]
    %v978 = vld [vmem:[#allocation11 + $0x110] sm:$0xff]
    %v979 = vld [vmem:[#allocation11 + $0x118] sm:$0xff]
    %v980 = vld [vmem:[#allocation11 + $0x120] sm:$0xff]
    %v981 = vld [vmem:[#allocation11 + $0x128] sm:$0xff]
    %v982 = vld [vmem:[#allocation11 + $0x130] sm:$0xff]
    %v983 = vld [vmem:[#allocation11 + $0x138] sm:$0xff]
    %v984 = vld [vmem:[#allocation11 + $0x140] sm:$0xff]
    %v985 = vld [vmem:[#allocation11 + $0x148] sm:$0xff]
    %v986 = vld [vmem:[#allocation11 + $0x150] sm:$0xff]
    %v987 = vld [vmem:[#allocation11 + $0x158] sm:$0xff]
    %v988 = vld [vmem:[#allocation11 + $0x160] sm:$0xff]
    %v989 = vld [vmem:[#allocation11 + $0x168] sm:$0xff]
    %v990 = vld [vmem:[#allocation11 + $0x170] sm:$0xff]
    %v991 = vld [vmem:[#allocation11 + $0x178] sm:$0xff]
    %v992 = vld [vmem:[#allocation11 + $0x180] sm:$0xff]
    %v993 = vld [vmem:[#allocation11 + $0x188] sm:$0xff]
    %v994 = vld [vmem:[#allocation11 + $0x190] sm:$0xff]
    %v995 = vld [vmem:[#allocation11 + $0x198] sm:$0xff]
    %v996 = vld [vmem:[#allocation11 + $0x1a0] sm:$0xff]
    %v997 = vld [vmem:[#allocation11 + $0x1a8] sm:$0xff]
    %v998 = vld [vmem:[#allocation11 + $0x1b0] sm:$0xff]
    %v999 = vld [vmem:[#allocation11 + $0x1b8] sm:$0xff]
    %v1000 = vld [vmem:[#allocation11 + $0x1c0] sm:$0xff]
    %v1001 = vld [vmem:[#allocation11 + $0x1c8] sm:$0xff]
    %v1002 = vld [vmem:[#allocation11 + $0x1d0] sm:$0xff]
    %v1003 = vld [vmem:[#allocation11 + $0x1d8] sm:$0xff]
    %v1004 = vld [vmem:[#allocation11 + $0x1e0] sm:$0xff]
    %v1005 = vld [vmem:[#allocation11 + $0x1e8] sm:$0xff]
    %v1006 = vld [vmem:[#allocation11 + $0x1f0] sm:$0xff]
    %v1007 = vld [vmem:[#allocation11 + $0x1f8] sm:$0xff]
    %v1008 = vld [vmem:[#allocation11 + $0x200] sm:$0xff]
    %v1009 = vld [vmem:[#allocation11 + $0x208] sm:$0xff]
    %v1010 = vld [vmem:[#allocation11 + $0x210] sm:$0xff]
    %v1011 = vld [vmem:[#allocation11 + $0x218] sm:$0xff]
    %v1012 = vld [vmem:[#allocation11 + $0x220] sm:$0xff]
    %v1013 = vld [vmem:[#allocation11 + $0x228] sm:$0xff]
    %v1014 = vld [vmem:[#allocation11 + $0x230] sm:$0xff]
    %v1015 = vld [vmem:[#allocation11 + $0x238] sm:$0xff]
    %v1016 = vld [vmem:[#allocation11 + $0x240] sm:$0xff]
    %v1017 = vld [vmem:[#allocation11 + $0x248] sm:$0xff]
    %v1018 = vld [vmem:[#allocation11 + $0x250] sm:$0xff]
    %v1019 = vld [vmem:[#allocation11 + $0x258] sm:$0xff]
    %v1020 = vld [vmem:[#allocation11 + $0x260] sm:$0xff]
    %v1021 = vld [vmem:[#allocation11 + $0x268] sm:$0xff]
    %v1022 = vld [vmem:[#allocation11 + $0x270] sm:$0xff]
    %v1023 = vld [vmem:[#allocation11 + $0x278] sm:$0xff]
    %v1024 = vld [vmem:[#allocation11 + $0x280] sm:$0xff]
    %v1025 = vld [vmem:[#allocation11 + $0x288] sm:$0xff]
    %v1026 = vld [vmem:[#allocation11 + $0x290] sm:$0xff]
    %v1027 = vld [vmem:[#allocation11 + $0x298] sm:$0xff]
    %v1028 = vld [vmem:[#allocation11 + $0x2a0] sm:$0xff]
    %v1029 = vld [vmem:[#allocation11 + $0x2a8] sm:$0xff]
    %v1030 = vld [vmem:[#allocation11 + $0x2b0] sm:$0xff]
    %v1031 = vld [vmem:[#allocation11 + $0x2b8] sm:$0xff]
    %v1032 = vld [vmem:[#allocation11 + $0x2c0] sm:$0xff]
    %v1033 = vld [vmem:[#allocation11 + $0x2c8] sm:$0xff]
    %v1034 = vld [vmem:[#allocation11 + $0x2d0] sm:$0xff]
    %v1035 = vld [vmem:[#allocation11 + $0x2d8] sm:$0xff]
    %v1036 = vld [vmem:[#allocation11 + $0x2e0] sm:$0xff]
    %v1037 = vld [vmem:[#allocation11 + $0x2e8] sm:$0xff]
    %v1038 = vld [vmem:[#allocation11 + $0x2f0] sm:$0xff]
    %v1039 = vld [vmem:[#allocation11 + $0x2f8] sm:$0xff]
    %v1040 = vld [vmem:[#allocation11 + $0x300] sm:$0xff]
    %v1041 = vld [vmem:[#allocation11 + $0x308] sm:$0xff]
    %v1042 = vld [vmem:[#allocation11 + $0x310] sm:$0xff]
    %v1043 = vld [vmem:[#allocation11 + $0x318] sm:$0xff]
    %v1044 = vld [vmem:[#allocation11 + $0x320] sm:$0xff]
    %v1045 = vld [vmem:[#allocation11 + $0x328] sm:$0xff]
    %v1046 = vld [vmem:[#allocation11 + $0x330] sm:$0xff]
    %v1047 = vld [vmem:[#allocation11 + $0x338] sm:$0xff]
    %v1048 = vld [vmem:[#allocation11 + $0x340] sm:$0xff]
    %v1049 = vld [vmem:[#allocation11 + $0x348] sm:$0xff]
    %v1050 = vld [vmem:[#allocation11 + $0x350] sm:$0xff]
    %v1051 = vld [vmem:[#allocation11 + $0x358] sm:$0xff]
    %v1052 = vld [vmem:[#allocation11 + $0x360] sm:$0xff]
    %v1053 = vld [vmem:[#allocation11 + $0x368] sm:$0xff]
    %v1054 = vld [vmem:[#allocation11 + $0x370] sm:$0xff]
    %v1055 = vld [vmem:[#allocation11 + $0x378] sm:$0xff]
    %v1056 = vld [vmem:[#allocation11 + $0x380] sm:$0xff]
    %v1057 = vld [vmem:[#allocation11 + $0x388] sm:$0xff]
    %v1058 = vld [vmem:[#allocation11 + $0x390] sm:$0xff]
    %v1059 = vld [vmem:[#allocation11 + $0x398] sm:$0xff]
    %v1060 = vld [vmem:[#allocation11 + $0x3a0] sm:$0xff]
    %v1061 = vld [vmem:[#allocation11 + $0x3a8] sm:$0xff]
    %v1062 = vld [vmem:[#allocation11 + $0x3b0] sm:$0xff]
    %v1063 = vld [vmem:[#allocation11 + $0x3b8] sm:$0xff]
    %v1064 = vld [vmem:[#allocation11 + $0x3c0] sm:$0xff]
    %v1065 = vld [vmem:[#allocation11 + $0x3c8] sm:$0xff]
    %v1066 = vld [vmem:[#allocation11 + $0x3d0] sm:$0xff]
    %v1067 = vld [vmem:[#allocation11 + $0x3d8] sm:$0xff]
    %v1068 = vld [vmem:[#allocation11 + $0x3e0] sm:$0xff]
    %v1069 = vld [vmem:[#allocation11 + $0x3e8] sm:$0xff]
    %v1070 = vld [vmem:[#allocation11 + $0x3f0] sm:$0xff]
    %v1071 = vld [vmem:[#allocation11 + $0x3f8] sm:$0xff]
    %v1072 = vld [vmem:[#allocation11 + $0x400] sm:$0xff]
    %v1073 = vld [vmem:[#allocation11 + $0x408] sm:$0xff]
    %v1074 = vld [vmem:[#allocation11 + $0x410] sm:$0xff]
    %v1075 = vld [vmem:[#allocation11 + $0x418] sm:$0xff]
    %v1076 = vld [vmem:[#allocation11 + $0x420] sm:$0xff]
    %v1077 = vld [vmem:[#allocation11 + $0x428] sm:$0xff]
    %v1078 = vld [vmem:[#allocation11 + $0x430] sm:$0xff]
    %v1079 = vld [vmem:[#allocation11 + $0x438] sm:$0xff]
    %v1080 = vld [vmem:[#allocation11 + $0x440] sm:$0xff]
    %v1081 = vld [vmem:[#allocation11 + $0x448] sm:$0xff]
    %v1082 = vld [vmem:[#allocation11 + $0x450] sm:$0xff]
    %v1083 = vld [vmem:[#allocation11 + $0x458] sm:$0xff]
    %v1084 = vld [vmem:[#allocation11 + $0x460] sm:$0xff]
    %v1085 = vld [vmem:[#allocation11 + $0x468] sm:$0xff]
    %v1086 = vld [vmem:[#allocation11 + $0x470] sm:$0xff]
    %v1087 = vld [vmem:[#allocation11 + $0x478] sm:$0xff]
    %v1088 = vld [vmem:[#allocation11 + $0x480] sm:$0xff]
    %v1089 = vld [vmem:[#allocation11 + $0x488] sm:$0xff]
    %v1090 = vld [vmem:[#allocation11 + $0x490] sm:$0xff]
    %v1091 = vld [vmem:[#allocation11 + $0x498] sm:$0xff]
    %v1092 = vld [vmem:[#allocation11 + $0x4a0] sm:$0xff]
    %v1093 = vld [vmem:[#allocation11 + $0x4a8] sm:$0xff]
    %v1094 = vld [vmem:[#allocation11 + $0x4b0] sm:$0xff]
    %v1095 = vld [vmem:[#allocation11 + $0x4b8] sm:$0xff]
    %v1096 = vld [vmem:[#allocation11 + $0x4c0] sm:$0xff]
    %v1097 = vld [vmem:[#allocation11 + $0x4c8] sm:$0xff]
    %v1098 = vld [vmem:[#allocation11 + $0x4d0] sm:$0xff]
    %v1099 = vld [vmem:[#allocation11 + $0x4d8] sm:$0xff]
    %v1100 = vld [vmem:[#allocation11 + $0x4e0] sm:$0xff]
    %v1101 = vld [vmem:[#allocation11 + $0x4e8] sm:$0xff]
    %v1102 = vld [vmem:[#allocation11 + $0x4f0] sm:$0xff]
    %v1103 = vld [vmem:[#allocation11 + $0x4f8] sm:$0xff]
    %v1104 = vld [vmem:[#allocation11 + $0x500] sm:$0xff]
    %v1105 = vld [vmem:[#allocation11 + $0x508] sm:$0xff]
    %v1106 = vld [vmem:[#allocation11 + $0x510] sm:$0xff]
    %v1107 = vld [vmem:[#allocation11 + $0x518] sm:$0xff]
    %v1108 = vld [vmem:[#allocation11 + $0x520] sm:$0xff]
    %v1109 = vld [vmem:[#allocation11 + $0x528] sm:$0xff]
    %v1110 = vld [vmem:[#allocation11 + $0x530] sm:$0xff]
    %v1111 = vld [vmem:[#allocation11 + $0x538] sm:$0xff]
    %v1112 = vld [vmem:[#allocation11 + $0x540] sm:$0xff]
    %v1113 = vld [vmem:[#allocation11 + $0x548] sm:$0xff]
    %v1114 = vld [vmem:[#allocation11 + $0x550] sm:$0xff]
    %v1115 = vld [vmem:[#allocation11 + $0x558] sm:$0xff]
    %v1116 = vld [vmem:[#allocation11 + $0x560] sm:$0xff]
    %v1117 = vld [vmem:[#allocation11 + $0x568] sm:$0xff]
    %v1118 = vld [vmem:[#allocation11 + $0x570] sm:$0xff]
    %v1119 = vld [vmem:[#allocation11 + $0x578] sm:$0xff]
    %v1120 = vld [vmem:[#allocation11 + $0x580] sm:$0xff]
    %v1121 = vld [vmem:[#allocation11 + $0x588] sm:$0xff]
    %v1122 = vld [vmem:[#allocation11 + $0x590] sm:$0xff]
    %v1123 = vld [vmem:[#allocation11 + $0x598] sm:$0xff]
    %v1124 = vld [vmem:[#allocation11 + $0x5a0] sm:$0xff]
    %v1125 = vld [vmem:[#allocation11 + $0x5a8] sm:$0xff]
    %v1126 = vld [vmem:[#allocation11 + $0x5b0] sm:$0xff]
    %v1127 = vld [vmem:[#allocation11 + $0x5b8] sm:$0xff]
    %v1128 = vld [vmem:[#allocation11 + $0x5c0] sm:$0xff]
    %v1129 = vld [vmem:[#allocation11 + $0x5c8] sm:$0xff]
    %v1130 = vld [vmem:[#allocation11 + $0x5d0] sm:$0xff]
    %v1131 = vld [vmem:[#allocation11 + $0x5d8] sm:$0xff]
    %v1132 = vld [vmem:[#allocation11 + $0x5e0] sm:$0xff]
    %v1133 = vld [vmem:[#allocation11 + $0x5e8] sm:$0xff]
    %v1134 = vld [vmem:[#allocation11 + $0x5f0] sm:$0xff]
    %v1135 = vld [vmem:[#allocation11 + $0x5f8] sm:$0xff]
    %v1136 = vld [vmem:[#allocation11 + $0x600] sm:$0xff]
    %v1137 = vld [vmem:[#allocation11 + $0x608] sm:$0xff]
    %v1138 = vld [vmem:[#allocation11 + $0x610] sm:$0xff]
    %v1139 = vld [vmem:[#allocation11 + $0x618] sm:$0xff]
    %v1140 = vld [vmem:[#allocation11 + $0x620] sm:$0xff]
    %v1141 = vld [vmem:[#allocation11 + $0x628] sm:$0xff]
    %v1142 = vld [vmem:[#allocation11 + $0x630] sm:$0xff]
    %v1143 = vld [vmem:[#allocation11 + $0x638] sm:$0xff]
    %v1144 = vld [vmem:[#allocation11 + $0x640] sm:$0xff]
    %v1145 = vld [vmem:[#allocation11 + $0x648] sm:$0xff]
    %v1146 = vld [vmem:[#allocation11 + $0x650] sm:$0xff]
    %v1147 = vld [vmem:[#allocation11 + $0x658] sm:$0xff]
    %v1148 = vld [vmem:[#allocation11 + $0x660] sm:$0xff]
    %v1149 = vld [vmem:[#allocation11 + $0x668] sm:$0xff]
    %v1150 = vld [vmem:[#allocation11 + $0x670] sm:$0xff]
    %v1151 = vld [vmem:[#allocation11 + $0x678] sm:$0xff]
    %v1152 = vld [vmem:[#allocation11 + $0x680] sm:$0xff]
    %v1153 = vld [vmem:[#allocation11 + $0x688] sm:$0xff]
    %v1154 = vld [vmem:[#allocation11 + $0x690] sm:$0xff]
    %v1155 = vld [vmem:[#allocation11 + $0x698] sm:$0xff]
    %v1156 = vld [vmem:[#allocation11 + $0x6a0] sm:$0xff]
    %v1157 = vld [vmem:[#allocation11 + $0x6a8] sm:$0xff]
    %v1158 = vld [vmem:[#allocation11 + $0x6b0] sm:$0xff]
    %v1159 = vld [vmem:[#allocation11 + $0x6b8] sm:$0xff]
    %v1160 = vld [vmem:[#allocation11 + $0x6c0] sm:$0xff]
    %v1161 = vld [vmem:[#allocation11 + $0x6c8] sm:$0xff]
    %v1162 = vld [vmem:[#allocation11 + $0x6d0] sm:$0xff]
    %v1163 = vld [vmem:[#allocation11 + $0x6d8] sm:$0xff]
    %v1164 = vld [vmem:[#allocation11 + $0x6e0] sm:$0xff]
    %v1165 = vld [vmem:[#allocation11 + $0x6e8] sm:$0xff]
    %v1166 = vld [vmem:[#allocation11 + $0x6f0] sm:$0xff]
    %v1167 = vld [vmem:[#allocation11 + $0x6f8] sm:$0xff]
    %v1168 = vld [vmem:[#allocation11 + $0x700] sm:$0xff]
    %v1169 = vld [vmem:[#allocation11 + $0x708] sm:$0xff]
    %v1170 = vld [vmem:[#allocation11 + $0x710] sm:$0xff]
    %v1171 = vld [vmem:[#allocation11 + $0x718] sm:$0xff]
    %v1172 = vld [vmem:[#allocation11 + $0x720] sm:$0xff]
    %v1173 = vld [vmem:[#allocation11 + $0x728] sm:$0xff]
    %v1174 = vld [vmem:[#allocation11 + $0x730] sm:$0xff]
    %v1175 = vld [vmem:[#allocation11 + $0x738] sm:$0xff]
    %v1176 = vld [vmem:[#allocation11 + $0x740] sm:$0xff]
    %v1177 = vld [vmem:[#allocation11 + $0x748] sm:$0xff]
    %v1178 = vld [vmem:[#allocation11 + $0x750] sm:$0xff]
    %v1179 = vld [vmem:[#allocation11 + $0x758] sm:$0xff]
    %v1180 = vld [vmem:[#allocation11 + $0x760] sm:$0xff]
    %v1181 = vld [vmem:[#allocation11 + $0x768] sm:$0xff]
    %v1182 = vld [vmem:[#allocation11 + $0x770] sm:$0xff]
    %v1183 = vld [vmem:[#allocation11 + $0x778] sm:$0xff]
    %v1184 = vld [vmem:[#allocation11 + $0x780] sm:$0xff]
    %v1185 = vld [vmem:[#allocation11 + $0x788] sm:$0xff]
    %v1186 = vld [vmem:[#allocation11 + $0x790] sm:$0xff]
    %v1187 = vld [vmem:[#allocation11 + $0x798] sm:$0xff]
    %v1188 = vld [vmem:[#allocation11 + $0x7a0] sm:$0xff]
    %v1189 = vld [vmem:[#allocation11 + $0x7a8] sm:$0xff]
    %v1190 = vld [vmem:[#allocation11 + $0x7b0] sm:$0xff]
    %v1191 = vld [vmem:[#allocation11 + $0x7b8] sm:$0xff]
    %v1192 = vld [vmem:[#allocation11 + $0x7c0] sm:$0xff]
    %v1193 = vld [vmem:[#allocation11 + $0x7c8] sm:$0xff]
    %v1194 = vld [vmem:[#allocation11 + $0x7d0] sm:$0xff]
    %v1195 = vld [vmem:[#allocation11 + $0x7d8] sm:$0xff]
    %v1196 = vld [vmem:[#allocation11 + $0x7e0] sm:$0xff]
    %v1197 = vld [vmem:[#allocation11 + $0x7e8] sm:$0xff]
    %v1198 = vld [vmem:[#allocation11 + $0x7f0] sm:$0xff]
    %v1199 = vld [vmem:[#allocation11 + $0x7f8] sm:$0xff]
    %v1200 = vld [vmem:[#allocation11 + $0x800] sm:$0xff]
    %v1201 = vld [vmem:[#allocation11 + $0x808] sm:$0xff]
    %v1202 = vld [vmem:[#allocation11 + $0x810] sm:$0xff]
    %v1203 = vld [vmem:[#allocation11 + $0x818] sm:$0xff]
    %v1204 = vld [vmem:[#allocation11 + $0x820] sm:$0xff]
    %v1205 = vld [vmem:[#allocation11 + $0x828] sm:$0xff]
    %v1206 = vld [vmem:[#allocation11 + $0x830] sm:$0xff]
    %v1207 = vld [vmem:[#allocation11 + $0x838] sm:$0xff]
    %v1208 = vld [vmem:[#allocation11 + $0x840] sm:$0xff]
    %v1209 = vld [vmem:[#allocation11 + $0x848] sm:$0xff]
    %v1210 = vld [vmem:[#allocation11 + $0x850] sm:$0xff]
    %v1211 = vld [vmem:[#allocation11 + $0x858] sm:$0xff]
    %v1212 = vld [vmem:[#allocation11 + $0x860] sm:$0xff]
    %v1213 = vld [vmem:[#allocation11 + $0x868] sm:$0xff]
    %v1214 = vld [vmem:[#allocation11 + $0x870] sm:$0xff]
    %v1215 = vld [vmem:[#allocation11 + $0x878] sm:$0xff]
    %v1216 = vld [vmem:[#allocation11 + $0x880] sm:$0xff]
    %v1217 = vld [vmem:[#allocation11 + $0x888] sm:$0xff]
    %v1218 = vld [vmem:[#allocation11 + $0x890] sm:$0xff]
    %v1219 = vld [vmem:[#allocation11 + $0x898] sm:$0xff]
    %v1220 = vld [vmem:[#allocation11 + $0x8a0] sm:$0xff]
    %v1221 = vld [vmem:[#allocation11 + $0x8a8] sm:$0xff]
    %v1222 = vld [vmem:[#allocation11 + $0x8b0] sm:$0xff]
    %v1223 = vld [vmem:[#allocation11 + $0x8b8] sm:$0xff]
    %v1224 = vld [vmem:[#allocation11 + $0x8c0] sm:$0xff]
    %v1225 = vld [vmem:[#allocation11 + $0x8c8] sm:$0xff]
    %v1226 = vld [vmem:[#allocation11 + $0x8d0] sm:$0xff]
    %v1227 = vld [vmem:[#allocation11 + $0x8d8] sm:$0xff]
    %v1228 = vld [vmem:[#allocation11 + $0x8e0] sm:$0xff]
    %v1229 = vld [vmem:[#allocation11 + $0x8e8] sm:$0xff]
    %v1230 = vld [vmem:[#allocation11 + $0x8f0] sm:$0xff]
    %v1231 = vld [vmem:[#allocation11 + $0x8f8] sm:$0xff]
    %v1232 = vld [vmem:[#allocation11 + $0x900] sm:$0xff]
    %v1233 = vld [vmem:[#allocation11 + $0x908] sm:$0xff]
    %v1234 = vld [vmem:[#allocation11 + $0x910] sm:$0xff]
    %v1235 = vld [vmem:[#allocation11 + $0x918] sm:$0xff]
    %v1236 = vld [vmem:[#allocation11 + $0x920] sm:$0xff]
    %v1237 = vld [vmem:[#allocation11 + $0x928] sm:$0xff]
    %v1238 = vld [vmem:[#allocation11 + $0x930] sm:$0xff]
    %v1239 = vld [vmem:[#allocation11 + $0x938] sm:$0xff]
    %v1240 = vld [vmem:[#allocation11 + $0x940] sm:$0xff]
    %v1241 = vld [vmem:[#allocation11 + $0x948] sm:$0xff]
    %v1242 = vld [vmem:[#allocation11 + $0x950] sm:$0xff]
    %v1243 = vld [vmem:[#allocation11 + $0x958] sm:$0xff]
    %v1244 = vld [vmem:[#allocation11 + $0x960] sm:$0xff]
    %v1245 = vld [vmem:[#allocation11 + $0x968] sm:$0xff]
    %v1246 = vld [vmem:[#allocation11 + $0x970] sm:$0xff]
    %v1247 = vld [vmem:[#allocation11 + $0x978] sm:$0xff]
    %v1248 = vld [vmem:[#allocation11 + $0x980] sm:$0xff]
    %v1249 = vld [vmem:[#allocation11 + $0x988] sm:$0xff]
    %v1250 = vld [vmem:[#allocation11 + $0x990] sm:$0xff]
    %v1251 = vld [vmem:[#allocation11 + $0x998] sm:$0xff]
    %v1252 = vld [vmem:[#allocation11 + $0x9a0] sm:$0xff]
    %v1253 = vld [vmem:[#allocation11 + $0x9a8] sm:$0xff]
    %v1254 = vld [vmem:[#allocation11 + $0x9b0] sm:$0xff]
    %v1255 = vld [vmem:[#allocation11 + $0x9b8] sm:$0xff]
    %v1256 = vld [vmem:[#allocation11 + $0x9c0] sm:$0xff]
    %v1257 = vld [vmem:[#allocation11 + $0x9c8] sm:$0xff]
    %v1258 = vld [vmem:[#allocation11 + $0x9d0] sm:$0xff]
    %v1259 = vld [vmem:[#allocation11 + $0x9d8] sm:$0xff]
    %v1260 = vld [vmem:[#allocation11 + $0x9e0] sm:$0xff]
    %v1261 = vld [vmem:[#allocation11 + $0x9e8] sm:$0xff]
    %v1262 = vld [vmem:[#allocation11 + $0x9f0] sm:$0xff]
    %v1263 = vld [vmem:[#allocation11 + $0x9f8] sm:$0xff]
    %v1264 = vld [vmem:[#allocation11 + $0xa00] sm:$0xff]
    %v1265 = vld [vmem:[#allocation11 + $0xa08] sm:$0xff]
    %v1266 = vld [vmem:[#allocation11 + $0xa10] sm:$0xff]
    %v1267 = vld [vmem:[#allocation11 + $0xa18] sm:$0xff]
    %v1268 = vld [vmem:[#allocation11 + $0xa20] sm:$0xff]
    %v1269 = vld [vmem:[#allocation11 + $0xa28] sm:$0xff]
    %v1270 = vld [vmem:[#allocation11 + $0xa30] sm:$0xff]
    %v1271 = vld [vmem:[#allocation11 + $0xa38] sm:$0xff]
    %v1272 = vld [vmem:[#allocation11 + $0xa40] sm:$0xff]
    %v1273 = vld [vmem:[#allocation11 + $0xa48] sm:$0xff]
    %v1274 = vld [vmem:[#allocation11 + $0xa50] sm:$0xff]
    %v1275 = vld [vmem:[#allocation11 + $0xa58] sm:$0xff]
    %v1276 = vld [vmem:[#allocation11 + $0xa60] sm:$0xff]
    %v1277 = vld [vmem:[#allocation11 + $0xa68] sm:$0xff]
    %v1278 = vld [vmem:[#allocation11 + $0xa70] sm:$0xff]
    %v1279 = vld [vmem:[#allocation11 + $0xa78] sm:$0xff]
    %v1280 = vld [vmem:[#allocation11 + $0xa80] sm:$0xff]
    %v1281 = vld [vmem:[#allocation11 + $0xa88] sm:$0xff]
    %v1282 = vld [vmem:[#allocation11 + $0xa90] sm:$0xff]
    %v1283 = vld [vmem:[#allocation11 + $0xa98] sm:$0xff]
    %v1284 = vld [vmem:[#allocation11 + $0xaa0] sm:$0xff]
    %v1285 = vld [vmem:[#allocation11 + $0xaa8] sm:$0xff]
    %v1286 = vld [vmem:[#allocation11 + $0xab0] sm:$0xff]
    %v1287 = vld [vmem:[#allocation11 + $0xab8] sm:$0xff]
    %v1288 = vld [vmem:[#allocation11 + $0xac0] sm:$0xff]
    %v1289 = vld [vmem:[#allocation11 + $0xac8] sm:$0xff]
    %v1290 = vld [vmem:[#allocation11 + $0xad0] sm:$0xff]
    %v1291 = vld [vmem:[#allocation11 + $0xad8] sm:$0xff]
    %v1292 = vld [vmem:[#allocation11 + $0xae0] sm:$0xff]
    %v1293 = vld [vmem:[#allocation11 + $0xae8] sm:$0xff]
    %v1294 = vld [vmem:[#allocation11 + $0xaf0] sm:$0xff]
    %v1295 = vld [vmem:[#allocation11 + $0xaf8] sm:$0xff]
    %v1296 = vld [vmem:[#allocation11 + $0xb00] sm:$0xff]
    %v1297 = vld [vmem:[#allocation11 + $0xb08] sm:$0xff]
    %v1298 = vld [vmem:[#allocation11 + $0xb10] sm:$0xff]
    %v1299 = vld [vmem:[#allocation11 + $0xb18] sm:$0xff]
    %v1300 = vld [vmem:[#allocation11 + $0xb20] sm:$0xff]
    %v1301 = vld [vmem:[#allocation11 + $0xb28] sm:$0xff]
    %v1302 = vld [vmem:[#allocation11 + $0xb30] sm:$0xff]
    %v1303 = vld [vmem:[#allocation11 + $0xb38] sm:$0xff]
    %v1304 = vld [vmem:[#allocation11 + $0xb40] sm:$0xff]
    %v1305 = vld [vmem:[#allocation11 + $0xb48] sm:$0xff]
    %v1306 = vld [vmem:[#allocation11 + $0xb50] sm:$0xff]
    %v1307 = vld [vmem:[#allocation11 + $0xb58] sm:$0xff]
    %v1308 = vld [vmem:[#allocation11 + $0xb60] sm:$0xff]
    %v1309 = vld [vmem:[#allocation11 + $0xb68] sm:$0xff]
    %v1310 = vld [vmem:[#allocation11 + $0xb70] sm:$0xff]
    %v1311 = vld [vmem:[#allocation11 + $0xb78] sm:$0xff]
    %v1312 = vld [vmem:[#allocation11 + $0xb80] sm:$0xff]
    %v1313 = vld [vmem:[#allocation11 + $0xb88] sm:$0xff]
    %v1314 = vld [vmem:[#allocation11 + $0xb90] sm:$0xff]
    %v1315 = vld [vmem:[#allocation11 + $0xb98] sm:$0xff]
    %v1316 = vld [vmem:[#allocation11 + $0xba0] sm:$0xff]
    %v1317 = vld [vmem:[#allocation11 + $0xba8] sm:$0xff]
    %v1318 = vld [vmem:[#allocation11 + $0xbb0] sm:$0xff]
    %v1319 = vld [vmem:[#allocation11 + $0xbb8] sm:$0xff]
    %v1320 = vld [vmem:[#allocation11 + $0xbc0] sm:$0xff]
    %v1321 = vld [vmem:[#allocation11 + $0xbc8] sm:$0xff]
    %v1322 = vld [vmem:[#allocation11 + $0xbd0] sm:$0xff]
    %v1323 = vld [vmem:[#allocation11 + $0xbd8] sm:$0xff]
    %v1324 = vld [vmem:[#allocation11 + $0xbe0] sm:$0xff]
    %v1325 = vld [vmem:[#allocation11 + $0xbe8] sm:$0xff]
    %v1326 = vld [vmem:[#allocation11 + $0xbf0] sm:$0xff]
    %v1327 = vld [vmem:[#allocation11 + $0xbf8] sm:$0xff]
    %v1328 = vld [vmem:[#allocation11 + $0xc00] sm:$0xff]
    %v1329 = vld [vmem:[#allocation11 + $0xc08] sm:$0xff]
    %v1330 = vld [vmem:[#allocation11 + $0xc10] sm:$0xff]
    %v1331 = vld [vmem:[#allocation11 + $0xc18] sm:$0xff]
    %v1332 = vld [vmem:[#allocation11 + $0xc20] sm:$0xff]
    %v1333 = vld [vmem:[#allocation11 + $0xc28] sm:$0xff]
    %v1334 = vld [vmem:[#allocation11 + $0xc30] sm:$0xff]
    %v1335 = vld [vmem:[#allocation11 + $0xc38] sm:$0xff]
    %v1336 = vld [vmem:[#allocation11 + $0xc40] sm:$0xff]
    %v1337 = vld [vmem:[#allocation11 + $0xc48] sm:$0xff]
    %v1338 = vld [vmem:[#allocation11 + $0xc50] sm:$0xff]
    %v1339 = vld [vmem:[#allocation11 + $0xc58] sm:$0xff]
    %v1340 = vld [vmem:[#allocation11 + $0xc60] sm:$0xff]
    %v1341 = vld [vmem:[#allocation11 + $0xc68] sm:$0xff]
    %v1342 = vld [vmem:[#allocation11 + $0xc70] sm:$0xff]
    %v1343 = vld [vmem:[#allocation11 + $0xc78] sm:$0xff]
    %v1344 = vld [vmem:[#allocation11 + $0xc80] sm:$0xff]
    %v1345 = vld [vmem:[#allocation11 + $0xc88] sm:$0xff]
    %v1346 = vld [vmem:[#allocation11 + $0xc90] sm:$0xff]
    %v1347 = vld [vmem:[#allocation11 + $0xc98] sm:$0xff]
    %v1348 = vld [vmem:[#allocation11 + $0xca0] sm:$0xff]
    %v1349 = vld [vmem:[#allocation11 + $0xca8] sm:$0xff]
    %v1350 = vld [vmem:[#allocation11 + $0xcb0] sm:$0xff]
    %v1351 = vld [vmem:[#allocation11 + $0xcb8] sm:$0xff]
    %v1352 = vld [vmem:[#allocation11 + $0xcc0] sm:$0xff]
    %v1353 = vld [vmem:[#allocation11 + $0xcc8] sm:$0xff]
    %v1354 = vld [vmem:[#allocation11 + $0xcd0] sm:$0xff]
    %v1355 = vld [vmem:[#allocation11 + $0xcd8] sm:$0xff]
    %v1356 = vld [vmem:[#allocation11 + $0xce0] sm:$0xff]
    %v1357 = vld [vmem:[#allocation11 + $0xce8] sm:$0xff]
    %v1358 = vld [vmem:[#allocation11 + $0xcf0] sm:$0xff]
    %v1359 = vld [vmem:[#allocation11 + $0xcf8] sm:$0xff]
    %v1360 = vld [vmem:[#allocation11 + $0xd00] sm:$0xff]
    %v1361 = vld [vmem:[#allocation11 + $0xd08] sm:$0xff]
    %v1362 = vld [vmem:[#allocation11 + $0xd10] sm:$0xff]
    %v1363 = vld [vmem:[#allocation11 + $0xd18] sm:$0xff]
    %v1364 = vld [vmem:[#allocation11 + $0xd20] sm:$0xff]
    %v1365 = vld [vmem:[#allocation11 + $0xd28] sm:$0xff]
    %v1366 = vld [vmem:[#allocation11 + $0xd30] sm:$0xff]
    %v1367 = vld [vmem:[#allocation11 + $0xd38] sm:$0xff]
    %v1368 = vld [vmem:[#allocation11 + $0xd40] sm:$0xff]
    %v1369 = vld [vmem:[#allocation11 + $0xd48] sm:$0xff]
    %v1370 = vld [vmem:[#allocation11 + $0xd50] sm:$0xff]
    %v1371 = vld [vmem:[#allocation11 + $0xd58] sm:$0xff]
    %v1372 = vld [vmem:[#allocation11 + $0xd60] sm:$0xff]
    %v1373 = vld [vmem:[#allocation11 + $0xd68] sm:$0xff]
    %v1374 = vld [vmem:[#allocation11 + $0xd70] sm:$0xff]
    %v1375 = vld [vmem:[#allocation11 + $0xd78] sm:$0xff]
    %v1376 = vld [vmem:[#allocation11 + $0xd80] sm:$0xff]
    %v1377 = vld [vmem:[#allocation11 + $0xd88] sm:$0xff]
    %v1378 = vld [vmem:[#allocation11 + $0xd90] sm:$0xff]
    %v1379 = vld [vmem:[#allocation11 + $0xd98] sm:$0xff]
    %v1380 = vld [vmem:[#allocation11 + $0xda0] sm:$0xff]
    %v1381 = vld [vmem:[#allocation11 + $0xda8] sm:$0xff]
    %v1382 = vld [vmem:[#allocation11 + $0xdb0] sm:$0xff]
    %v1383 = vld [vmem:[#allocation11 + $0xdb8] sm:$0xff]
    %v1384 = vld [vmem:[#allocation11 + $0xdc0] sm:$0xff]
    %v1385 = vld [vmem:[#allocation11 + $0xdc8] sm:$0xff]
    %v1386 = vld [vmem:[#allocation11 + $0xdd0] sm:$0xff]
    %v1387 = vld [vmem:[#allocation11 + $0xdd8] sm:$0xff]
    %v1388 = vld [vmem:[#allocation11 + $0xde0] sm:$0xff]
    %v1389 = vld [vmem:[#allocation11 + $0xde8] sm:$0xff]
    %v1390 = vld [vmem:[#allocation11 + $0xdf0] sm:$0xff]
    %v1391 = vld [vmem:[#allocation11 + $0xdf8] sm:$0xff]
    %v1392 = vld [vmem:[#allocation11 + $0xe00] sm:$0xff]
    %v1393 = vld [vmem:[#allocation11 + $0xe08] sm:$0xff]
    %v1394 = vld [vmem:[#allocation11 + $0xe10] sm:$0xff]
    %v1395 = vld [vmem:[#allocation11 + $0xe18] sm:$0xff]
    %v1396 = vld [vmem:[#allocation11 + $0xe20] sm:$0xff]
    %v1397 = vld [vmem:[#allocation11 + $0xe28] sm:$0xff]
    %v1398 = vld [vmem:[#allocation11 + $0xe30] sm:$0xff]
    %v1399 = vld [vmem:[#allocation11 + $0xe38] sm:$0xff]
    %v1400 = vld [vmem:[#allocation11 + $0xe40] sm:$0xff]
    %v1401 = vld [vmem:[#allocation11 + $0xe48] sm:$0xff]
    %v1402 = vld [vmem:[#allocation11 + $0xe50] sm:$0xff]
    %v1403 = vld [vmem:[#allocation11 + $0xe58] sm:$0xff]
    %v1404 = vld [vmem:[#allocation11 + $0xe60] sm:$0xff]
    %v1405 = vld [vmem:[#allocation11 + $0xe68] sm:$0xff]
    %v1406 = vld [vmem:[#allocation11 + $0xe70] sm:$0xff]
    %v1407 = vld [vmem:[#allocation11 + $0xe78] sm:$0xff]
    %v1408 = vld [vmem:[#allocation11 + $0xe80] sm:$0xff]
    %v1409 = vld [vmem:[#allocation11 + $0xe88] sm:$0xff]
    %v1410 = vld [vmem:[#allocation11 + $0xe90] sm:$0xff]
    %v1411 = vld [vmem:[#allocation11 + $0xe98] sm:$0xff]
    %v1412 = vld [vmem:[#allocation11 + $0xea0] sm:$0xff]
    %v1413 = vld [vmem:[#allocation11 + $0xea8] sm:$0xff]
    %v1414 = vld [vmem:[#allocation11 + $0xeb0] sm:$0xff]
    %v1415 = vld [vmem:[#allocation11 + $0xeb8] sm:$0xff]
    %v1416 = vld [vmem:[#allocation11 + $0xec0] sm:$0xff]
    %v1417 = vld [vmem:[#allocation11 + $0xec8] sm:$0xff]
    %v1418 = vld [vmem:[#allocation11 + $0xed0] sm:$0xff]
    %v1419 = vld [vmem:[#allocation11 + $0xed8] sm:$0xff]
    %v1420 = vld [vmem:[#allocation11 + $0xee0] sm:$0xff]
    %v1421 = vld [vmem:[#allocation11 + $0xee8] sm:$0xff]
    %v1422 = vld [vmem:[#allocation11 + $0xef0] sm:$0xff]
    %v1423 = vld [vmem:[#allocation11 + $0xef8] sm:$0xff]
    %v1424 = vld [vmem:[#allocation11 + $0xf00] sm:$0xff]
    %v1425 = vld [vmem:[#allocation11 + $0xf08] sm:$0xff]
    %v1426 = vld [vmem:[#allocation11 + $0xf10] sm:$0xff]
    %v1427 = vld [vmem:[#allocation11 + $0xf18] sm:$0xff]
    %v1428 = vld [vmem:[#allocation11 + $0xf20] sm:$0xff]
    %v1429 = vld [vmem:[#allocation11 + $0xf28] sm:$0xff]
    %v1430 = vld [vmem:[#allocation11 + $0xf30] sm:$0xff]
    %v1431 = vld [vmem:[#allocation11 + $0xf38] sm:$0xff]
    %v1432 = vld [vmem:[#allocation11 + $0xf40] sm:$0xff]
    %v1433 = vld [vmem:[#allocation11 + $0xf48] sm:$0xff]
    %v1434 = vld [vmem:[#allocation11 + $0xf50] sm:$0xff]
    %v1435 = vld [vmem:[#allocation11 + $0xf58] sm:$0xff]
    %v1436 = vld [vmem:[#allocation11 + $0xf60] sm:$0xff]
    %v1437 = vld [vmem:[#allocation11 + $0xf68] sm:$0xff]
    %v1438 = vld [vmem:[#allocation11 + $0xf70] sm:$0xff]
    %v1439 = vld [vmem:[#allocation11 + $0xf78] sm:$0xff]
    %v1440 = vld [vmem:[#allocation11 + $0xf80] sm:$0xff]
    %v1441 = vld [vmem:[#allocation11 + $0xf88] sm:$0xff]
    %v1442 = vld [vmem:[#allocation11 + $0xf90] sm:$0xff]
    %v1443 = vld [vmem:[#allocation11 + $0xf98] sm:$0xff]
    %v1444 = vld [vmem:[#allocation11 + $0xfa0] sm:$0xff]
    %v1445 = vld [vmem:[#allocation11 + $0xfa8] sm:$0xff]
    %v1446 = vld [vmem:[#allocation11 + $0xfb0] sm:$0xff]
    %v1447 = vld [vmem:[#allocation11 + $0xfb8] sm:$0xff]
    %v1448 = vld [vmem:[#allocation11 + $0xfc0] sm:$0xff]
    %v1449 = vld [vmem:[#allocation11 + $0xfc8] sm:$0xff]
    %v1450 = vld [vmem:[#allocation11 + $0xfd0] sm:$0xff]
    %v1451 = vld [vmem:[#allocation11 + $0xfd8] sm:$0xff]
    %v1452 = vld [vmem:[#allocation11 + $0xfe0] sm:$0xff]
    %v1453 = vld [vmem:[#allocation11 + $0xfe8] sm:$0xff]
    %v1454 = vld [vmem:[#allocation11 + $0xff0] sm:$0xff]
    %v1455 = vld [vmem:[#allocation11 + $0xff8] sm:$0xff]
    %v1456 = vld [vmem:[#allocation11 + $0x1000] sm:$0xff]
    %v1457 = vld [vmem:[#allocation11 + $0x1008] sm:$0xff]
    %v1458 = vld [vmem:[#allocation11 + $0x1010] sm:$0xff]
    %v1459 = vld [vmem:[#allocation11 + $0x1018] sm:$0xff]
    %v1460 = vld [vmem:[#allocation11 + $0x1020] sm:$0xff]
    %v1461 = vld [vmem:[#allocation11 + $0x1028] sm:$0xff]
    %v1462 = vld [vmem:[#allocation11 + $0x1030] sm:$0xff]
    %v1463 = vld [vmem:[#allocation11 + $0x1038] sm:$0xff]
    %v1464 = vld [vmem:[#allocation11 + $0x1040] sm:$0xff]
    %v1465 = vld [vmem:[#allocation11 + $0x1048] sm:$0xff]
    %v1466 = vld [vmem:[#allocation11 + $0x1050] sm:$0xff]
    %v1467 = vld [vmem:[#allocation11 + $0x1058] sm:$0xff]
    %v1468 = vld [vmem:[#allocation11 + $0x1060] sm:$0xff]
    %v1469 = vld [vmem:[#allocation11 + $0x1068] sm:$0xff]
    %v1470 = vld [vmem:[#allocation11 + $0x1070] sm:$0xff]
    %v1471 = vld [vmem:[#allocation11 + $0x1078] sm:$0xff]
    %v1472 = vld [vmem:[#allocation11 + $0x1080] sm:$0xff]
    %v1473 = vld [vmem:[#allocation11 + $0x1088] sm:$0xff]
    %v1474 = vld [vmem:[#allocation11 + $0x1090] sm:$0xff]
    %v1475 = vld [vmem:[#allocation11 + $0x1098] sm:$0xff]
    %v1476 = vld [vmem:[#allocation11 + $0x10a0] sm:$0xff]
    %v1477 = vld [vmem:[#allocation11 + $0x10a8] sm:$0xff]
    %v1478 = vld [vmem:[#allocation11 + $0x10b0] sm:$0xff]
    %v1479 = vld [vmem:[#allocation11 + $0x10b8] sm:$0xff]
    %v1480 = vld [vmem:[#allocation11 + $0x10c0] sm:$0xff]
    %v1481 = vld [vmem:[#allocation11 + $0x10c8] sm:$0xff]
    %v1482 = vld [vmem:[#allocation11 + $0x10d0] sm:$0xff]
    %v1483 = vld [vmem:[#allocation11 + $0x10d8] sm:$0xff]
    %v1484 = vld [vmem:[#allocation11 + $0x10e0] sm:$0xff]
    %v1485 = vld [vmem:[#allocation11 + $0x10e8] sm:$0xff]
    %v1486 = vld [vmem:[#allocation11 + $0x10f0] sm:$0xff]
    %v1487 = vld [vmem:[#allocation11 + $0x10f8] sm:$0xff]
    %v1488 = vld [vmem:[#allocation11 + $0x1100] sm:$0xff]
    %v1489 = vld [vmem:[#allocation11 + $0x1108] sm:$0xff]
    %v1490 = vld [vmem:[#allocation11 + $0x1110] sm:$0xff]
    %v1491 = vld [vmem:[#allocation11 + $0x1118] sm:$0xff]
    %v1492 = vld [vmem:[#allocation11 + $0x1120] sm:$0xff]
    %v1493 = vld [vmem:[#allocation11 + $0x1128] sm:$0xff]
    %v1494 = vld [vmem:[#allocation11 + $0x1130] sm:$0xff]
    %v1495 = vld [vmem:[#allocation11 + $0x1138] sm:$0xff]
    %v1496 = vld [vmem:[#allocation11 + $0x1140] sm:$0xff]
    %v1497 = vld [vmem:[#allocation11 + $0x1148] sm:$0xff]
    %v1498 = vld [vmem:[#allocation11 + $0x1150] sm:$0xff]
    %v1499 = vld [vmem:[#allocation11 + $0x1158] sm:$0xff]
    %v1500 = vld [vmem:[#allocation11 + $0x1160] sm:$0xff]
    %v1501 = vld [vmem:[#allocation11 + $0x1168] sm:$0xff]
    %v1502 = vld [vmem:[#allocation11 + $0x1170] sm:$0xff]
    %v1503 = vld [vmem:[#allocation11 + $0x1178] sm:$0xff]
    %v1504 = vld [vmem:[#allocation11 + $0x1180] sm:$0xff]
    %v1505 = vld [vmem:[#allocation11 + $0x1188] sm:$0xff]
    %v1506 = vld [vmem:[#allocation11 + $0x1190] sm:$0xff]
    %v1507 = vld [vmem:[#allocation11 + $0x1198] sm:$0xff]
    %v1508 = vld [vmem:[#allocation11 + $0x11a0] sm:$0xff]
    %v1509 = vld [vmem:[#allocation11 + $0x11a8] sm:$0xff]
    %v1510 = vld [vmem:[#allocation11 + $0x11b0] sm:$0xff]
    %v1511 = vld [vmem:[#allocation11 + $0x11b8] sm:$0xff]
    %v1512 = vld [vmem:[#allocation11 + $0x11c0] sm:$0xff]
    %v1513 = vld [vmem:[#allocation11 + $0x11c8] sm:$0xff]
    %v1514 = vld [vmem:[#allocation11 + $0x11d0] sm:$0xff]
    %v1515 = vld [vmem:[#allocation11 + $0x11d8] sm:$0xff]
    %v1516 = vld [vmem:[#allocation11 + $0x11e0] sm:$0xff]
    %v1517 = vld [vmem:[#allocation11 + $0x11e8] sm:$0xff]
    %v1518 = vld [vmem:[#allocation11 + $0x11f0] sm:$0xff]
    %v1519 = vld [vmem:[#allocation11 + $0x11f8] sm:$0xff]
    %v1520 = vld [vmem:[#allocation11 + $0x1200] sm:$0xff]
    %v1521 = vld [vmem:[#allocation11 + $0x1208] sm:$0xff]
    %v1522 = vld [vmem:[#allocation11 + $0x1210] sm:$0xff]
    %v1523 = vld [vmem:[#allocation11 + $0x1218] sm:$0xff]
    %v1524 = vld [vmem:[#allocation11 + $0x1220] sm:$0xff]
    %v1525 = vld [vmem:[#allocation11 + $0x1228] sm:$0xff]
    %v1526 = vld [vmem:[#allocation11 + $0x1230] sm:$0xff]
    %v1527 = vld [vmem:[#allocation11 + $0x1238] sm:$0xff]
    %v1528 = vld [vmem:[#allocation11 + $0x1240] sm:$0xff]
    %v1529 = vld [vmem:[#allocation11 + $0x1248] sm:$0xff]
    %v1530 = vld [vmem:[#allocation11 + $0x1250] sm:$0xff]
    %v1531 = vld [vmem:[#allocation11 + $0x1258] sm:$0xff]
    %v1532 = vld [vmem:[#allocation11 + $0x1260] sm:$0xff]
    %v1533 = vld [vmem:[#allocation11 + $0x1268] sm:$0xff]
    %v1534 = vld [vmem:[#allocation11 + $0x1270] sm:$0xff]
    %v1535 = vld [vmem:[#allocation11 + $0x1278] sm:$0xff]
    %v1536 = vld [vmem:[#allocation11 + $0x1280] sm:$0xff]
    %v1537 = vld [vmem:[#allocation11 + $0x1288] sm:$0xff]
    %v1538 = vld [vmem:[#allocation11 + $0x1290] sm:$0xff]
    %v1539 = vld [vmem:[#allocation11 + $0x1298] sm:$0xff]
    %v1540 = vld [vmem:[#allocation11 + $0x12a0] sm:$0xff]
    %v1541 = vld [vmem:[#allocation11 + $0x12a8] sm:$0xff]
    %v1542 = vld [vmem:[#allocation11 + $0x12b0] sm:$0xff]
    %v1543 = vld [vmem:[#allocation11 + $0x12b8] sm:$0xff]
    %v1544 = vld [vmem:[#allocation11 + $0x12c0] sm:$0xff]
    %v1545 = vld [vmem:[#allocation11 + $0x12c8] sm:$0xff]
    %v1546 = vld [vmem:[#allocation11 + $0x12d0] sm:$0xff]
    %v1547 = vld [vmem:[#allocation11 + $0x12d8] sm:$0xff]
    %v1548 = vld [vmem:[#allocation11 + $0x12e0] sm:$0xff]
    %v1549 = vld [vmem:[#allocation11 + $0x12e8] sm:$0xff]
    %v1550 = vld [vmem:[#allocation11 + $0x12f0] sm:$0xff]
    %v1551 = vld [vmem:[#allocation11 + $0x12f8] sm:$0xff]
    %v1552 = vld [vmem:[#allocation11 + $0x1300] sm:$0xff]
    %v1553 = vld [vmem:[#allocation11 + $0x1308] sm:$0xff]
    %v1554 = vld [vmem:[#allocation11 + $0x1310] sm:$0xff]
    %v1555 = vld [vmem:[#allocation11 + $0x1318] sm:$0xff]
    %v1556 = vld [vmem:[#allocation11 + $0x1320] sm:$0xff]
    %v1557 = vld [vmem:[#allocation11 + $0x1328] sm:$0xff]
    %v1558 = vld [vmem:[#allocation11 + $0x1330] sm:$0xff]
    %v1559 = vld [vmem:[#allocation11 + $0x1338] sm:$0xff]
    %v1560 = vld [vmem:[#allocation11 + $0x1340] sm:$0xff]
    %v1561 = vld [vmem:[#allocation11 + $0x1348] sm:$0xff]
    %v1562 = vld [vmem:[#allocation11 + $0x1350] sm:$0xff]
    %v1563 = vld [vmem:[#allocation11 + $0x1358] sm:$0xff]
    %v1564 = vld [vmem:[#allocation11 + $0x1360] sm:$0xff]
    %v1565 = vld [vmem:[#allocation11 + $0x1368] sm:$0xff]
    %v1566 = vld [vmem:[#allocation11 + $0x1370] sm:$0xff]
    %v1567 = vld [vmem:[#allocation11 + $0x1378] sm:$0xff]
    %v1568 = vld [vmem:[#allocation11 + $0x1380] sm:$0xff]
    %v1569 = vld [vmem:[#allocation11 + $0x1388] sm:$0xff]
    %v1570 = vld [vmem:[#allocation11 + $0x1390] sm:$0xff]
    %v1571 = vld [vmem:[#allocation11 + $0x1398] sm:$0xff]
    %v1572 = vld [vmem:[#allocation11 + $0x13a0] sm:$0xff]
    %v1573 = vld [vmem:[#allocation11 + $0x13a8] sm:$0xff]
    %v1574 = vld [vmem:[#allocation11 + $0x13b0] sm:$0xff]
    %v1575 = vld [vmem:[#allocation11 + $0x13b8] sm:$0xff]
    %v1576 = vld [vmem:[#allocation11 + $0x13c0] sm:$0xff]
    %v1577 = vld [vmem:[#allocation11 + $0x13c8] sm:$0xff]
    %v1578 = vld [vmem:[#allocation11 + $0x13d0] sm:$0xff]
    %v1579 = vld [vmem:[#allocation11 + $0x13d8] sm:$0xff]
    %v1580 = vld [vmem:[#allocation11 + $0x13e0] sm:$0xff]
    %v1581 = vld [vmem:[#allocation11 + $0x13e8] sm:$0xff]
    %v1582 = vld [vmem:[#allocation11 + $0x13f0] sm:$0xff]
    %v1583 = vld [vmem:[#allocation11 + $0x13f8] sm:$0xff]
    %v1584 = vld [vmem:[#allocation11 + $0x1400] sm:$0xff]
    %v1585 = vld [vmem:[#allocation11 + $0x1408] sm:$0xff]
    %v1586 = vld [vmem:[#allocation11 + $0x1410] sm:$0xff]
    %v1587 = vld [vmem:[#allocation11 + $0x1418] sm:$0xff]
    %v1588 = vld [vmem:[#allocation11 + $0x1420] sm:$0xff]
    %v1589 = vld [vmem:[#allocation11 + $0x1428] sm:$0xff]
    %v1590 = vld [vmem:[#allocation11 + $0x1430] sm:$0xff]
    %v1591 = vld [vmem:[#allocation11 + $0x1438] sm:$0xff]
    %v1592 = vld [vmem:[#allocation11 + $0x1440] sm:$0xff]
    %v1593 = vld [vmem:[#allocation11 + $0x1448] sm:$0xff]
    %v1594 = vld [vmem:[#allocation11 + $0x1450] sm:$0xff]
    %v1595 = vld [vmem:[#allocation11 + $0x1458] sm:$0xff]
    %v1596 = vld [vmem:[#allocation11 + $0x1460] sm:$0xff]
    %v1597 = vld [vmem:[#allocation11 + $0x1468] sm:$0xff]
    %v1598 = vld [vmem:[#allocation11 + $0x1470] sm:$0xff]
    %v1599 = vld [vmem:[#allocation11 + $0x1478] sm:$0xff]
    %v1600 = vld [vmem:[#allocation11 + $0x1480] sm:$0xff]
    %v1601 = vld [vmem:[#allocation11 + $0x1488] sm:$0xff]
    %v1602 = vld [vmem:[#allocation11 + $0x1490] sm:$0xff]
    %v1603 = vld [vmem:[#allocation11 + $0x1498] sm:$0xff]
    %v1604 = vld [vmem:[#allocation11 + $0x14a0] sm:$0xff]
    %v1605 = vld [vmem:[#allocation11 + $0x14a8] sm:$0xff]
    %v1606 = vld [vmem:[#allocation11 + $0x14b0] sm:$0xff]
    %v1607 = vld [vmem:[#allocation11 + $0x14b8] sm:$0xff]
    %v1608 = vld [vmem:[#allocation11 + $0x14c0] sm:$0xff]
    %v1609 = vld [vmem:[#allocation11 + $0x14c8] sm:$0xff]
    %v1610 = vld [vmem:[#allocation11 + $0x14d0] sm:$0xff]
    %v1611 = vld [vmem:[#allocation11 + $0x14d8] sm:$0xff]
    %v1612 = vld [vmem:[#allocation11 + $0x14e0] sm:$0xff]
    %v1613 = vld [vmem:[#allocation11 + $0x14e8] sm:$0xff]
    %v1614 = vld [vmem:[#allocation11 + $0x14f0] sm:$0xff]
    %v1615 = vld [vmem:[#allocation11 + $0x14f8] sm:$0xff]
    %v1616 = vld [vmem:[#allocation11 + $0x1500] sm:$0xff]
    %v1617 = vld [vmem:[#allocation11 + $0x1508] sm:$0xff]
    %v1618 = vld [vmem:[#allocation11 + $0x1510] sm:$0xff]
    %v1619 = vld [vmem:[#allocation11 + $0x1518] sm:$0xff]
    %v1620 = vld [vmem:[#allocation11 + $0x1520] sm:$0xff]
    %v1621 = vld [vmem:[#allocation11 + $0x1528] sm:$0xff]
    %v1622 = vld [vmem:[#allocation11 + $0x1530] sm:$0xff]
    %v1623 = vld [vmem:[#allocation11 + $0x1538] sm:$0xff]
    %v1624 = vld [vmem:[#allocation11 + $0x1540] sm:$0xff]
    %v1625 = vld [vmem:[#allocation11 + $0x1548] sm:$0xff]
    %v1626 = vld [vmem:[#allocation11 + $0x1550] sm:$0xff]
    %v1627 = vld [vmem:[#allocation11 + $0x1558] sm:$0xff]
    %v1628 = vld [vmem:[#allocation11 + $0x1560] sm:$0xff]
    %v1629 = vld [vmem:[#allocation11 + $0x1568] sm:$0xff]
    %v1630 = vld [vmem:[#allocation11 + $0x1570] sm:$0xff]
    %v1631 = vld [vmem:[#allocation11 + $0x1578] sm:$0xff]
    %v1632 = vld [vmem:[#allocation11 + $0x1580] sm:$0xff]
    %v1633 = vld [vmem:[#allocation11 + $0x1588] sm:$0xff]
    %v1634 = vld [vmem:[#allocation11 + $0x1590] sm:$0xff]
    %v1635 = vld [vmem:[#allocation11 + $0x1598] sm:$0xff]
    %v1636 = vld [vmem:[#allocation11 + $0x15a0] sm:$0xff]
    %v1637 = vld [vmem:[#allocation11 + $0x15a8] sm:$0xff]
    %v1638 = vld [vmem:[#allocation11 + $0x15b0] sm:$0xff]
    %v1639 = vld [vmem:[#allocation11 + $0x15b8] sm:$0xff]
    %v1640 = vld [vmem:[#allocation11 + $0x15c0] sm:$0xff]
    %v1641 = vld [vmem:[#allocation11 + $0x15c8] sm:$0xff]
    %v1642 = vld [vmem:[#allocation11 + $0x15d0] sm:$0xff]
    %v1643 = vld [vmem:[#allocation11 + $0x15d8] sm:$0xff]
    %v1644 = vld [vmem:[#allocation11 + $0x15e0] sm:$0xff]
    %v1645 = vld [vmem:[#allocation11 + $0x15e8] sm:$0xff]
    %v1646 = vld [vmem:[#allocation11 + $0x15f0] sm:$0xff]
    %v1647 = vld [vmem:[#allocation11 + $0x15f8] sm:$0xff]
    %v1648 = vld [vmem:[#allocation11 + $0x1600] sm:$0xff]
    %v1649 = vld [vmem:[#allocation11 + $0x1608] sm:$0xff]
    %v1650 = vld [vmem:[#allocation11 + $0x1610] sm:$0xff]
    %v1651 = vld [vmem:[#allocation11 + $0x1618] sm:$0xff]
    %v1652 = vld [vmem:[#allocation11 + $0x1620] sm:$0xff]
    %v1653 = vld [vmem:[#allocation11 + $0x1628] sm:$0xff]
    %v1654 = vld [vmem:[#allocation11 + $0x1630] sm:$0xff]
    %v1655 = vld [vmem:[#allocation11 + $0x1638] sm:$0xff]
    %v1656 = vld [vmem:[#allocation11 + $0x1640] sm:$0xff]
    %v1657 = vld [vmem:[#allocation11 + $0x1648] sm:$0xff]
    %v1658 = vld [vmem:[#allocation11 + $0x1650] sm:$0xff]
    %v1659 = vld [vmem:[#allocation11 + $0x1658] sm:$0xff]
    %v1660 = vld [vmem:[#allocation11 + $0x1660] sm:$0xff]
    %v1661 = vld [vmem:[#allocation11 + $0x1668] sm:$0xff]
    %v1662 = vld [vmem:[#allocation11 + $0x1670] sm:$0xff]
    %v1663 = vld [vmem:[#allocation11 + $0x1678] sm:$0xff]
    %v1664 = vld [vmem:[#allocation11 + $0x1680] sm:$0xff]
    %v1665 = vld [vmem:[#allocation11 + $0x1688] sm:$0xff]
    %v1666 = vld [vmem:[#allocation11 + $0x1690] sm:$0xff]
    %v1667 = vld [vmem:[#allocation11 + $0x1698] sm:$0xff]
    %v1668 = vld [vmem:[#allocation11 + $0x16a0] sm:$0xff]
    %v1669 = vld [vmem:[#allocation11 + $0x16a8] sm:$0xff]
    %v1670 = vld [vmem:[#allocation11 + $0x16b0] sm:$0xff]
    %v1671 = vld [vmem:[#allocation11 + $0x16b8] sm:$0xff]
    %v1672 = vld [vmem:[#allocation11 + $0x16c0] sm:$0xff]
    %v1673 = vld [vmem:[#allocation11 + $0x16c8] sm:$0xff]
    %v1674 = vld [vmem:[#allocation11 + $0x16d0] sm:$0xff]
    %v1675 = vld [vmem:[#allocation11 + $0x16d8] sm:$0xff]
    %v1676 = vld [vmem:[#allocation11 + $0x16e0] sm:$0xff]
    %v1677 = vld [vmem:[#allocation11 + $0x16e8] sm:$0xff]
    %v1678 = vld [vmem:[#allocation11 + $0x16f0] sm:$0xff]
    %v1679 = vld [vmem:[#allocation11 + $0x16f8] sm:$0xff]
    %v1680 = vld [vmem:[#allocation11 + $0x1700] sm:$0xff]
    %v1681 = vld [vmem:[#allocation11 + $0x1708] sm:$0xff]
    %v1682 = vld [vmem:[#allocation11 + $0x1710] sm:$0xff]
    %v1683 = vld [vmem:[#allocation11 + $0x1718] sm:$0xff]
    %v1684 = vld [vmem:[#allocation11 + $0x1720] sm:$0xff]
    %v1685 = vld [vmem:[#allocation11 + $0x1728] sm:$0xff]
    %v1686 = vld [vmem:[#allocation11 + $0x1730] sm:$0xff]
    %v1687 = vld [vmem:[#allocation11 + $0x1738] sm:$0xff]
    %v1688 = vld [vmem:[#allocation11 + $0x1740] sm:$0xff]
    %v1689 = vld [vmem:[#allocation11 + $0x1748] sm:$0xff]
    %v1690 = vld [vmem:[#allocation11 + $0x1750] sm:$0xff]
    %v1691 = vld [vmem:[#allocation11 + $0x1758] sm:$0xff]
    %v1692 = vld [vmem:[#allocation11 + $0x1760] sm:$0xff]
    %v1693 = vld [vmem:[#allocation11 + $0x1768] sm:$0xff]
    %v1694 = vld [vmem:[#allocation11 + $0x1770] sm:$0xff]
    %v1695 = vld [vmem:[#allocation11 + $0x1778] sm:$0xff]
    %v1696 = vld [vmem:[#allocation11 + $0x1780] sm:$0xff]
    %v1697 = vld [vmem:[#allocation11 + $0x1788] sm:$0xff]
    %v1698 = vld [vmem:[#allocation11 + $0x1790] sm:$0xff]
    %v1699 = vld [vmem:[#allocation11 + $0x1798] sm:$0xff]
    %v1700 = vld [vmem:[#allocation11 + $0x17a0] sm:$0xff]
    %v1701 = vld [vmem:[#allocation11 + $0x17a8] sm:$0xff]
    %v1702 = vld [vmem:[#allocation11 + $0x17b0] sm:$0xff]
    %v1703 = vld [vmem:[#allocation11 + $0x17b8] sm:$0xff]
    %v1704 = vld [vmem:[#allocation11 + $0x17c0] sm:$0xff]
    %v1705 = vld [vmem:[#allocation11 + $0x17c8] sm:$0xff]
    %v1706 = vld [vmem:[#allocation11 + $0x17d0] sm:$0xff]
    %v1707 = vld [vmem:[#allocation11 + $0x17d8] sm:$0xff]
    %v1708 = vld [vmem:[#allocation11 + $0x17e0] sm:$0xff]
    %v1709 = vld [vmem:[#allocation11 + $0x17e8] sm:$0xff]
    %v1710 = vld [vmem:[#allocation11 + $0x17f0] sm:$0xff]
    %v1711 = vld [vmem:[#allocation11 + $0x17f8] sm:$0xff]
    %v1712 = vld [vmem:[#allocation11 + $0x1800] sm:$0xff]
    %v1713 = vld [vmem:[#allocation11 + $0x1808] sm:$0xff]
    %v1714 = vld [vmem:[#allocation11 + $0x1810] sm:$0xff]
    %v1715 = vld [vmem:[#allocation11 + $0x1818] sm:$0xff]
    %v1716 = vld [vmem:[#allocation11 + $0x1820] sm:$0xff]
    %v1717 = vld [vmem:[#allocation11 + $0x1828] sm:$0xff]
    %v1718 = vld [vmem:[#allocation11 + $0x1830] sm:$0xff]
    %v1719 = vld [vmem:[#allocation11 + $0x1838] sm:$0xff]
    %v1720 = vld [vmem:[#allocation11 + $0x1840] sm:$0xff]
    %v1721 = vld [vmem:[#allocation11 + $0x1848] sm:$0xff]
    %v1722 = vld [vmem:[#allocation11 + $0x1850] sm:$0xff]
    %v1723 = vld [vmem:[#allocation11 + $0x1858] sm:$0xff]
    %v1724 = vld [vmem:[#allocation11 + $0x1860] sm:$0xff]
    %v1725 = vld [vmem:[#allocation11 + $0x1868] sm:$0xff]
    %v1726 = vld [vmem:[#allocation11 + $0x1870] sm:$0xff]
    %v1727 = vld [vmem:[#allocation11 + $0x1878] sm:$0xff]
    %v1728 = vld [vmem:[#allocation11 + $0x1880] sm:$0xff]
    %v1729 = vld [vmem:[#allocation11 + $0x1888] sm:$0xff]
    %v1730 = vld [vmem:[#allocation11 + $0x1890] sm:$0xff]
    %v1731 = vld [vmem:[#allocation11 + $0x1898] sm:$0xff]
    %v1732 = vld [vmem:[#allocation11 + $0x18a0] sm:$0xff]
    %v1733 = vld [vmem:[#allocation11 + $0x18a8] sm:$0xff]
    %v1734 = vld [vmem:[#allocation11 + $0x18b0] sm:$0xff]
    %v1735 = vld [vmem:[#allocation11 + $0x18b8] sm:$0xff]
    %v1736 = vld [vmem:[#allocation11 + $0x18c0] sm:$0xff]
    %v1737 = vld [vmem:[#allocation11 + $0x18c8] sm:$0xff]
    %v1738 = vld [vmem:[#allocation11 + $0x18d0] sm:$0xff]
    %v1739 = vld [vmem:[#allocation11 + $0x18d8] sm:$0xff]
    %v1740 = vld [vmem:[#allocation11 + $0x18e0] sm:$0xff]
    %v1741 = vld [vmem:[#allocation11 + $0x18e8] sm:$0xff]
    %v1742 = vld [vmem:[#allocation11 + $0x18f0] sm:$0xff]
    %v1743 = vld [vmem:[#allocation11 + $0x18f8] sm:$0xff]
    %v1744 = vld [vmem:[#allocation11 + $0x1900] sm:$0xff]
    %v1745 = vld [vmem:[#allocation11 + $0x1908] sm:$0xff]
    %v1746 = vld [vmem:[#allocation11 + $0x1910] sm:$0xff]
    %v1747 = vld [vmem:[#allocation11 + $0x1918] sm:$0xff]
    %v1748 = vld [vmem:[#allocation11 + $0x1920] sm:$0xff]
    %v1749 = vld [vmem:[#allocation11 + $0x1928] sm:$0xff]
    %v1750 = vld [vmem:[#allocation11 + $0x1930] sm:$0xff]
    %v1751 = vld [vmem:[#allocation11 + $0x1938] sm:$0xff]
    %v1752 = vld [vmem:[#allocation11 + $0x1940] sm:$0xff]
    %v1753 = vld [vmem:[#allocation11 + $0x1948] sm:$0xff]
    %v1754 = vld [vmem:[#allocation11 + $0x1950] sm:$0xff]
    %v1755 = vld [vmem:[#allocation11 + $0x1958] sm:$0xff]
    %v1756 = vld [vmem:[#allocation11 + $0x1960] sm:$0xff]
    %v1757 = vld [vmem:[#allocation11 + $0x1968] sm:$0xff]
    %v1758 = vld [vmem:[#allocation11 + $0x1970] sm:$0xff]
    %v1759 = vld [vmem:[#allocation11 + $0x1978] sm:$0xff]
    %v1760 = vld [vmem:[#allocation11 + $0x1980] sm:$0xff]
    %v1761 = vld [vmem:[#allocation11 + $0x1988] sm:$0xff]
    %v1762 = vld [vmem:[#allocation11 + $0x1990] sm:$0xff]
    %v1763 = vld [vmem:[#allocation11 + $0x1998] sm:$0xff]
    %v1764 = vld [vmem:[#allocation11 + $0x19a0] sm:$0xff]
    %v1765 = vld [vmem:[#allocation11 + $0x19a8] sm:$0xff]
    %v1766 = vld [vmem:[#allocation11 + $0x19b0] sm:$0xff]
    %v1767 = vld [vmem:[#allocation11 + $0x19b8] sm:$0xff]
    %v1768 = vld [vmem:[#allocation11 + $0x19c0] sm:$0xff]
    %v1769 = vld [vmem:[#allocation11 + $0x19c8] sm:$0xff]
    %v1770 = vld [vmem:[#allocation11 + $0x19d0] sm:$0xff]
    %v1771 = vld [vmem:[#allocation11 + $0x19d8] sm:$0xff]
    %v1772 = vld [vmem:[#allocation11 + $0x19e0] sm:$0xff]
    %v1773 = vld [vmem:[#allocation11 + $0x19e8] sm:$0xff]
    %v1774 = vld [vmem:[#allocation11 + $0x19f0] sm:$0xff]
    %v1775 = vld [vmem:[#allocation11 + $0x19f8] sm:$0xff]
    %v1776 = vld [vmem:[#allocation11 + $0x1a00] sm:$0xff]
    %v1777 = vld [vmem:[#allocation11 + $0x1a08] sm:$0xff]
    %v1778 = vld [vmem:[#allocation11 + $0x1a10] sm:$0xff]
    %v1779 = vld [vmem:[#allocation11 + $0x1a18] sm:$0xff]
    %v1780 = vld [vmem:[#allocation11 + $0x1a20] sm:$0xff]
    %v1781 = vld [vmem:[#allocation11 + $0x1a28] sm:$0xff]
    %v1782 = vld [vmem:[#allocation11 + $0x1a30] sm:$0xff]
    %v1783 = vld [vmem:[#allocation11 + $0x1a38] sm:$0xff]
    %v1784 = vld [vmem:[#allocation11 + $0x1a40] sm:$0xff]
    %v1785 = vld [vmem:[#allocation11 + $0x1a48] sm:$0xff]
    %v1786 = vld [vmem:[#allocation11 + $0x1a50] sm:$0xff]
    %v1787 = vld [vmem:[#allocation11 + $0x1a58] sm:$0xff]
    %v1788 = vld [vmem:[#allocation11 + $0x1a60] sm:$0xff]
    %v1789 = vld [vmem:[#allocation11 + $0x1a68] sm:$0xff]
    %v1790 = vld [vmem:[#allocation11 + $0x1a70] sm:$0xff]
    %v1791 = vld [vmem:[#allocation11 + $0x1a78] sm:$0xff]
    %v1792 = vld [vmem:[#allocation11 + $0x1a80] sm:$0xff]
    %v1793 = vld [vmem:[#allocation11 + $0x1a88] sm:$0xff]
    %v1794 = vld [vmem:[#allocation11 + $0x1a90] sm:$0xff]
    %v1795 = vld [vmem:[#allocation11 + $0x1a98] sm:$0xff]
    %v1796 = vld [vmem:[#allocation11 + $0x1aa0] sm:$0xff]
    %v1797 = vld [vmem:[#allocation11 + $0x1aa8] sm:$0xff]
    %v1798 = vld [vmem:[#allocation11 + $0x1ab0] sm:$0xff]
    %v1799 = vld [vmem:[#allocation11 + $0x1ab8] sm:$0xff]
    %v1800 = vld [vmem:[#allocation11 + $0x1ac0] sm:$0xff]
    %v1801 = vld [vmem:[#allocation11 + $0x1ac8] sm:$0xff]
    %v1802 = vld [vmem:[#allocation11 + $0x1ad0] sm:$0xff]
    %v1803 = vld [vmem:[#allocation11 + $0x1ad8] sm:$0xff]
    %v1804 = vld [vmem:[#allocation11 + $0x1ae0] sm:$0xff]
    %v1805 = vld [vmem:[#allocation11 + $0x1ae8] sm:$0xff]
    %v1806 = vld [vmem:[#allocation11 + $0x1af0] sm:$0xff]
    %v1807 = vld [vmem:[#allocation11 + $0x1af8] sm:$0xff]
    %v1808 = vld [vmem:[#allocation11 + $0x1b00] sm:$0xff]
    %v1809 = vld [vmem:[#allocation11 + $0x1b08] sm:$0xff]
    %v1810 = vld [vmem:[#allocation11 + $0x1b10] sm:$0xff]
    %v1811 = vld [vmem:[#allocation11 + $0x1b18] sm:$0xff]
    %v1812 = vld [vmem:[#allocation11 + $0x1b20] sm:$0xff]
    %v1813 = vld [vmem:[#allocation11 + $0x1b28] sm:$0xff]
    %v1814 = vld [vmem:[#allocation11 + $0x1b30] sm:$0xff]
    %v1815 = vld [vmem:[#allocation11 + $0x1b38] sm:$0xff]
    %v1816 = vld [vmem:[#allocation11 + $0x1b40] sm:$0xff]
    %v1817 = vld [vmem:[#allocation11 + $0x1b48] sm:$0xff]
    %v1818 = vld [vmem:[#allocation11 + $0x1b50] sm:$0xff]
    %v1819 = vld [vmem:[#allocation11 + $0x1b58] sm:$0xff]
    %v1820 = vld [vmem:[#allocation11 + $0x1b60] sm:$0xff]
    %v1821 = vld [vmem:[#allocation11 + $0x1b68] sm:$0xff]
    %v1822 = vld [vmem:[#allocation11 + $0x1b70] sm:$0xff]
    %v1823 = vld [vmem:[#allocation11 + $0x1b78] sm:$0xff]
    %v1824 = vld [vmem:[#allocation11 + $0x1b80] sm:$0xff]
    %v1825 = vld [vmem:[#allocation11 + $0x1b88] sm:$0xff]
    %v1826 = vld [vmem:[#allocation11 + $0x1b90] sm:$0xff]
    %v1827 = vld [vmem:[#allocation11 + $0x1b98] sm:$0xff]
    %v1828 = vld [vmem:[#allocation11 + $0x1ba0] sm:$0xff]
    %v1829 = vld [vmem:[#allocation11 + $0x1ba8] sm:$0xff]
    %v1830 = vld [vmem:[#allocation11 + $0x1bb0] sm:$0xff]
    %v1831 = vld [vmem:[#allocation11 + $0x1bb8] sm:$0xff]
    %v1832 = vld [vmem:[#allocation11 + $0x1bc0] sm:$0xff]
    %v1833 = vld [vmem:[#allocation11 + $0x1bc8] sm:$0xff]
    %v1834 = vld [vmem:[#allocation11 + $0x1bd0] sm:$0xff]
    %v1835 = vld [vmem:[#allocation11 + $0x1bd8] sm:$0xff]
    %v1836 = vld [vmem:[#allocation11 + $0x1be0] sm:$0xff]
    %v1837 = vld [vmem:[#allocation11 + $0x1be8] sm:$0xff]
    %v1838 = vld [vmem:[#allocation11 + $0x1bf0] sm:$0xff]
    %v1839 = vld [vmem:[#allocation11 + $0x1bf8] sm:$0xff]
    %v1840 = vld [vmem:[#allocation11 + $0x1c00] sm:$0xff]
    %v1841 = vld [vmem:[#allocation11 + $0x1c08] sm:$0xff]
    %v1842 = vld [vmem:[#allocation11 + $0x1c10] sm:$0xff]
    %v1843 = vld [vmem:[#allocation11 + $0x1c18] sm:$0xff]
    %v1844 = vld [vmem:[#allocation11 + $0x1c20] sm:$0xff]
    %v1845 = vld [vmem:[#allocation11 + $0x1c28] sm:$0xff]
    %v1846 = vld [vmem:[#allocation11 + $0x1c30] sm:$0xff]
    %v1847 = vld [vmem:[#allocation11 + $0x1c38] sm:$0xff]
    %v1848 = vld [vmem:[#allocation11 + $0x1c40] sm:$0xff]
    %v1849 = vld [vmem:[#allocation11 + $0x1c48] sm:$0xff]
    %v1850 = vld [vmem:[#allocation11 + $0x1c50] sm:$0xff]
    %v1851 = vld [vmem:[#allocation11 + $0x1c58] sm:$0xff]
    %v1852 = vld [vmem:[#allocation11 + $0x1c60] sm:$0xff]
    %v1853 = vld [vmem:[#allocation11 + $0x1c68] sm:$0xff]
    %v1854 = vld [vmem:[#allocation11 + $0x1c70] sm:$0xff]
    %v1855 = vld [vmem:[#allocation11 + $0x1c78] sm:$0xff]
    %v1856 = vld [vmem:[#allocation11 + $0x1c80] sm:$0xff]
    %v1857 = vld [vmem:[#allocation11 + $0x1c88] sm:$0xff]
    %v1858 = vld [vmem:[#allocation11 + $0x1c90] sm:$0xff]
    %v1859 = vld [vmem:[#allocation11 + $0x1c98] sm:$0xff]
    %v1860 = vld [vmem:[#allocation11 + $0x1ca0] sm:$0xff]
    %v1861 = vld [vmem:[#allocation11 + $0x1ca8] sm:$0xff]
    %v1862 = vld [vmem:[#allocation11 + $0x1cb0] sm:$0xff]
    %v1863 = vld [vmem:[#allocation11 + $0x1cb8] sm:$0xff]
    %v1864 = vld [vmem:[#allocation11 + $0x1cc0] sm:$0xff]
    %v1865 = vld [vmem:[#allocation11 + $0x1cc8] sm:$0xff]
    %v1866 = vld [vmem:[#allocation11 + $0x1cd0] sm:$0xff]
    %v1867 = vld [vmem:[#allocation11 + $0x1cd8] sm:$0xff]
    %v1868 = vld [vmem:[#allocation11 + $0x1ce0] sm:$0xff]
    %v1869 = vld [vmem:[#allocation11 + $0x1ce8] sm:$0xff]
    %v1870 = vld [vmem:[#allocation11 + $0x1cf0] sm:$0xff]
    %v1871 = vld [vmem:[#allocation11 + $0x1cf8] sm:$0xff]
    %v1872 = vld [vmem:[#allocation11 + $0x1d00] sm:$0xff]
    %v1873 = vld [vmem:[#allocation11 + $0x1d08] sm:$0xff]
    %v1874 = vld [vmem:[#allocation11 + $0x1d10] sm:$0xff]
    %v1875 = vld [vmem:[#allocation11 + $0x1d18] sm:$0xff]
    %v1876 = vld [vmem:[#allocation11 + $0x1d20] sm:$0xff]
    %v1877 = vld [vmem:[#allocation11 + $0x1d28] sm:$0xff]
    %v1878 = vld [vmem:[#allocation11 + $0x1d30] sm:$0xff]
    %v1879 = vld [vmem:[#allocation11 + $0x1d38] sm:$0xff]
    %v1880 = vld [vmem:[#allocation11 + $0x1d40] sm:$0xff]
    %v1881 = vld [vmem:[#allocation11 + $0x1d48] sm:$0xff]
    %v1882 = vld [vmem:[#allocation11 + $0x1d50] sm:$0xff]
    %v1883 = vld [vmem:[#allocation11 + $0x1d58] sm:$0xff]
    %v1884 = vld [vmem:[#allocation11 + $0x1d60] sm:$0xff]
    %v1885 = vld [vmem:[#allocation11 + $0x1d68] sm:$0xff]
    %v1886 = vld [vmem:[#allocation11 + $0x1d70] sm:$0xff]
    %v1887 = vld [vmem:[#allocation11 + $0x1d78] sm:$0xff]
    %v1888 = vld [vmem:[#allocation11 + $0x1d80] sm:$0xff]
    %v1889 = vld [vmem:[#allocation11 + $0x1d88] sm:$0xff]
    %v1890 = vld [vmem:[#allocation11 + $0x1d90] sm:$0xff]
    %v1891 = vld [vmem:[#allocation11 + $0x1d98] sm:$0xff]
    %v1892 = vld [vmem:[#allocation11 + $0x1da0] sm:$0xff]
    %v1893 = vld [vmem:[#allocation11 + $0x1da8] sm:$0xff]
    %v1894 = vld [vmem:[#allocation11 + $0x1db0] sm:$0xff]
    %v1895 = vld [vmem:[#allocation11 + $0x1db8] sm:$0xff]
    %v1896 = vld [vmem:[#allocation11 + $0x1dc0] sm:$0xff]
    %v1897 = vld [vmem:[#allocation11 + $0x1dc8] sm:$0xff]
    %v1898 = vld [vmem:[#allocation11 + $0x1dd0] sm:$0xff]
    %v1899 = vld [vmem:[#allocation11 + $0x1dd8] sm:$0xff]
    %v1900 = vld [vmem:[#allocation11 + $0x1de0] sm:$0xff]
    %v1901 = vld [vmem:[#allocation11 + $0x1de8] sm:$0xff]
    %v1902 = vld [vmem:[#allocation11 + $0x1df0] sm:$0xff]
    %v1903 = vld [vmem:[#allocation11 + $0x1df8] sm:$0xff]
    %v1904 = vld [vmem:[#allocation11 + $0x1e00] sm:$0xff]
    %v1905 = vld [vmem:[#allocation11 + $0x1e08] sm:$0xff]
    %v1906 = vld [vmem:[#allocation11 + $0x1e10] sm:$0xff]
    %v1907 = vld [vmem:[#allocation11 + $0x1e18] sm:$0xff]
    %v1908 = vld [vmem:[#allocation11 + $0x1e20] sm:$0xff]
    %v1909 = vld [vmem:[#allocation11 + $0x1e28] sm:$0xff]
    %v1910 = vld [vmem:[#allocation11 + $0x1e30] sm:$0xff]
    %v1911 = vld [vmem:[#allocation11 + $0x1e38] sm:$0xff]
    %v1912 = vld [vmem:[#allocation11 + $0x1e40] sm:$0xff]
    %v1913 = vld [vmem:[#allocation11 + $0x1e48] sm:$0xff]
    %v1914 = vld [vmem:[#allocation11 + $0x1e50] sm:$0xff]
    %v1915 = vld [vmem:[#allocation11 + $0x1e58] sm:$0xff]
    %v1916 = vld [vmem:[#allocation11 + $0x1e60] sm:$0xff]
    %v1917 = vld [vmem:[#allocation11 + $0x1e68] sm:$0xff]
    %v1918 = vld [vmem:[#allocation11 + $0x1e70] sm:$0xff]
    %v1919 = vld [vmem:[#allocation11 + $0x1e78] sm:$0xff]
    %v1920 = vld [vmem:[#allocation11 + $0x1e80] sm:$0xff]
    %v1921 = vld [vmem:[#allocation11 + $0x1e88] sm:$0xff]
    %v1922 = vld [vmem:[#allocation11 + $0x1e90] sm:$0xff]
    %v1923 = vld [vmem:[#allocation11 + $0x1e98] sm:$0xff]
    %v1924 = vld [vmem:[#allocation11 + $0x1ea0] sm:$0xff]
    %v1925 = vld [vmem:[#allocation11 + $0x1ea8] sm:$0xff]
    %v1926 = vld [vmem:[#allocation11 + $0x1eb0] sm:$0xff]
    %v1927 = vld [vmem:[#allocation11 + $0x1eb8] sm:$0xff]
    %v1928 = vld [vmem:[#allocation11 + $0x1ec0] sm:$0xff]
    %v1929 = vld [vmem:[#allocation11 + $0x1ec8] sm:$0xff]
    %v1930 = vld [vmem:[#allocation11 + $0x1ed0] sm:$0xff]
    %v1931 = vld [vmem:[#allocation11 + $0x1ed8] sm:$0xff]
    %v1932 = vld [vmem:[#allocation11 + $0x1ee0] sm:$0xff]
    %v1933 = vld [vmem:[#allocation11 + $0x1ee8] sm:$0xff]
    %v1934 = vld [vmem:[#allocation11 + $0x1ef0] sm:$0xff]
    %v1935 = vld [vmem:[#allocation11 + $0x1ef8] sm:$0xff]
    %v1936 = vld [vmem:[#allocation11 + $0x1f00] sm:$0xff]
    %v1937 = vld [vmem:[#allocation11 + $0x1f08] sm:$0xff]
    %v1938 = vld [vmem:[#allocation11 + $0x1f10] sm:$0xff]
    %v1939 = vld [vmem:[#allocation11 + $0x1f18] sm:$0xff]
    %v1940 = vld [vmem:[#allocation11 + $0x1f20] sm:$0xff]
    %v1941 = vld [vmem:[#allocation11 + $0x1f28] sm:$0xff]
    %v1942 = vld [vmem:[#allocation11 + $0x1f30] sm:$0xff]
    %v1943 = vld [vmem:[#allocation11 + $0x1f38] sm:$0xff]
    %v1944 = vld [vmem:[#allocation11 + $0x1f40] sm:$0xff]
    %v1945 = vld [vmem:[#allocation11 + $0x1f48] sm:$0xff]
    %v1946 = vld [vmem:[#allocation11 + $0x1f50] sm:$0xff]
    %v1947 = vld [vmem:[#allocation11 + $0x1f58] sm:$0xff]
    %v1948 = vld [vmem:[#allocation11 + $0x1f60] sm:$0xff]
    %v1949 = vld [vmem:[#allocation11 + $0x1f68] sm:$0xff]
    %v1950 = vld [vmem:[#allocation11 + $0x1f70] sm:$0xff]
    %v1951 = vld [vmem:[#allocation11 + $0x1f78] sm:$0xff]
    %v1952 = vld [vmem:[#allocation11 + $0x1f80] sm:$0xff]
    %v1953 = vld [vmem:[#allocation11 + $0x1f88] sm:$0xff]
    %v1954 = vld [vmem:[#allocation11 + $0x1f90] sm:$0xff]
    %v1955 = vld [vmem:[#allocation11 + $0x1f98] sm:$0xff]
    %v1956 = vld [vmem:[#allocation11 + $0x1fa0] sm:$0xff]
    %v1957 = vld [vmem:[#allocation11 + $0x1fa8] sm:$0xff]
    %v1958 = vld [vmem:[#allocation11 + $0x1fb0] sm:$0xff]
    %v1959 = vld [vmem:[#allocation11 + $0x1fb8] sm:$0xff]
    %v1960 = vld [vmem:[#allocation11 + $0x1fc0] sm:$0xff]
    %v1961 = vld [vmem:[#allocation11 + $0x1fc8] sm:$0xff]
    %v1962 = vld [vmem:[#allocation11 + $0x1fd0] sm:$0xff]
    %v1963 = vld [vmem:[#allocation11 + $0x1fd8] sm:$0xff]
    %v1964 = vld [vmem:[#allocation11 + $0x1fe0] sm:$0xff]
    %v1965 = vld [vmem:[#allocation11 + $0x1fe8] sm:$0xff]
    %v1966 = vld [vmem:[#allocation11 + $0x1ff0] sm:$0xff]
    %v1967 = vld [vmem:[#allocation11 + $0x1ff8] sm:$0xff]
    %v1968 = vld [vmem:[#allocation13] sm:$0xff]
    %v1969 = vld [vmem:[#allocation13 + $0x8] sm:$0xff]
    %v1972 = vlaneseq
    %v1973 = vshrl.u32 %v1972, 7
    %v1974 = vsub.s32 0, %v1973
    %v1975 = vrot.slane %v1968, %v1974
    %v1976 = vlaneseq
    %v1977 = vshrl.u32 %v1976, 7
    %v1978 = vsub.s32 1, %v1977
    %v1979 = vrot.slane %v1968, %v1978
    %v1980 = vlaneseq
    %v1981 = vshrl.u32 %v1980, 7
    %v1982 = vsub.s32 2, %v1981
    %v1983 = vrot.slane %v1968, %v1982
    %v1984 = vlaneseq
    %v1985 = vshrl.u32 %v1984, 7
    %v1986 = vsub.s32 3, %v1985
    %v1987 = vrot.slane %v1968, %v1986
    %v1988 = vlaneseq
    %v1989 = vshrl.u32 %v1988, 7
    %v1990 = vsub.s32 4, %v1989
    %v1991 = vrot.slane %v1968, %v1990
    %v1992 = vlaneseq
    %v1993 = vshrl.u32 %v1992, 7
    %v1994 = vsub.s32 5, %v1993
    %v1995 = vrot.slane %v1968, %v1994
    %v1996 = vlaneseq
    %v1997 = vshrl.u32 %v1996, 7
    %v1998 = vsub.s32 6, %v1997
    %v1999 = vrot.slane %v1968, %v1998
    %v2000 = vlaneseq
    %v2001 = vshrl.u32 %v2000, 7
    %v2002 = vsub.s32 7, %v2001
    %v2003 = vrot.slane %v1968, %v2002
    %v2004 = vlaneseq
    %v2005 = vshrl.u32 %v2004, 7
    %v2006 = vsub.s32 0, %v2005
    %v2007 = vrot.slane %v1969, %v2006
    %v2008 = vlaneseq
    %v2009 = vshrl.u32 %v2008, 7
    %v2010 = vsub.s32 1, %v2009
    %v2011 = vrot.slane %v1969, %v2010
    %v2012 = vlaneseq
    %v2013 = vshrl.u32 %v2012, 7
    %v2014 = vsub.s32 2, %v2013
    %v2015 = vrot.slane %v1969, %v2014
    %v2016 = vlaneseq
    %v2017 = vshrl.u32 %v2016, 7
    %v2018 = vsub.s32 3, %v2017
    %v2019 = vrot.slane %v1969, %v2018
    %v2020 = vlaneseq
    %v2021 = vshrl.u32 %v2020, 7
    %v2022 = vsub.s32 4, %v2021
    %v2023 = vrot.slane %v1969, %v2022
    %v2024 = vlaneseq
    %v2025 = vshrl.u32 %v2024, 7
    %v2026 = vsub.s32 5, %v2025
    %v2027 = vrot.slane %v1969, %v2026
    %v2028 = vlaneseq
    %v2029 = vshrl.u32 %v2028, 7
    %v2030 = vsub.s32 6, %v2029
    %v2031 = vrot.slane %v1969, %v2030
    %v2032 = vlaneseq
    %v2033 = vshrl.u32 %v2032, 7
    %v2034 = vsub.s32 7, %v2033
    %v2035 = vrot.slane %v1969, %v2034
    %2052 = vmatprep.subr.mxu0 %v945
    %2053 = vmatpush1.msra.mxu0 %v944
    %2054 = vmatprep.subr.mxu0 %v961
    %2055 = vmatpush1.msra.mxu0 %v960
    %2056 = vmatprep.subr.mxu0 %v977
    %2057 = vmatpush1.msra.mxu0 %v976
    %2058 = vmatprep.subr.mxu0 %v993
    %2059 = vmatpush1.msra.mxu0 %v992
    %2060 = vmatprep.subr.mxu0 %v1009
    %2061 = vmatpush1.msra.mxu0 %v1008
    %2062 = vmatprep.subr.mxu0 %v1025
    %2063 = vmatpush1.msra.mxu0 %v1024
    %2064 = vmatprep.subr.mxu0 %v1041
    %2065 = vmatpush1.msra.mxu0 %v1040
    %2066 = vmatprep.subr.mxu0 %v1057
    %2067 = vmatpush1.msra.mxu0 %v1056
    %2068 = vmatprep.subr.mxu0 %v1073
    %2069 = vmatpush1.msra.mxu0 %v1072
    %2070 = vmatprep.subr.mxu0 %v1089
    %2071 = vmatpush1.msra.mxu0 %v1088
    %2072 = vmatprep.subr.mxu0 %v1105
    %2073 = vmatpush1.msra.mxu0 %v1104
    %2074 = vmatprep.subr.mxu0 %v1121
    %2075 = vmatpush1.msra.mxu0 %v1120
    %2076 = vmatprep.subr.mxu0 %v1137
    %2077 = vmatpush1.msra.mxu0 %v1136
    %2078 = vmatprep.subr.mxu0 %v1153
    %2079 = vmatpush1.msra.mxu0 %v1152
    %2080 = vmatprep.subr.mxu0 %v1169
    %2081 = vmatpush1.msra.mxu0 %v1168
    %2082 = vmatprep.subr.mxu0 %v1185
    %2083 = vmatpush1.msra.mxu0 %v1184
    %2084 = vmatprep.subr.mxu0 %v1201
    %2085 = vmatpush1.msra.mxu0 %v1200
    %2086 = vmatprep.subr.mxu0 %v1217
    %2087 = vmatpush1.msra.mxu0 %v1216
    %2088 = vmatprep.subr.mxu0 %v1233
    %2089 = vmatpush1.msra.mxu0 %v1232
    %2090 = vmatprep.subr.mxu0 %v1249
    %2091 = vmatpush1.msra.mxu0 %v1248
    %2092 = vmatprep.subr.mxu0 %v1265
    %2093 = vmatpush1.msra.mxu0 %v1264
    %2094 = vmatprep.subr.mxu0 %v1281
    %2095 = vmatpush1.msra.mxu0 %v1280
    %2096 = vmatprep.subr.mxu0 %v1297
    %2097 = vmatpush1.msra.mxu0 %v1296
    %2098 = vmatprep.subr.mxu0 %v1313
    %2099 = vmatpush1.msra.mxu0 %v1312
    %2100 = vmatprep.subr.mxu0 %v1329
    %2101 = vmatpush1.msra.mxu0 %v1328
    %2102 = vmatprep.subr.mxu0 %v1345
    %2103 = vmatpush1.msra.mxu0 %v1344
    %2104 = vmatprep.subr.mxu0 %v1361
    %2105 = vmatpush1.msra.mxu0 %v1360
    %2106 = vmatprep.subr.mxu0 %v1377
    %2107 = vmatpush1.msra.mxu0 %v1376
    %2108 = vmatprep.subr.mxu0 %v1393
    %2109 = vmatpush1.msra.mxu0 %v1392
    %2110 = vmatprep.subr.mxu0 %v1409
    %2111 = vmatpush1.msra.mxu0 %v1408
    %2112 = vmatprep.subr.mxu0 %v1425
    %2113 = vmatpush1.msra.mxu0 %v1424
    %2114 = vmatprep.subr.mxu0 %v1441
    %2115 = vmatpush1.msra.mxu0 %v1440
    %2116 = vmatprep.mubr.f32.mxu0 %v941
    %2117 = vmatmul.mubr.f32.gmra.mrb[0].mxu0 %v940
    %v2118 = vpop.f32.mrb[0].mxu0
    %v2119 = vadd.f32 %v1975, %v2118
    %v2120 = vpop.f32.mrb[0].mxu0
    %v2121 = vadd.f32 %v1979, %v2120
    %2122 = vdwg.mxu0
    %2123 = vmatprep.subr.mxu0 %v1457
    %2124 = vmatpush1.msra.mxu0 %v1456
    %2125 = vmatprep.subr.mxu0 %v1473
    %2126 = vmatpush1.msra.mxu0 %v1472
    %2127 = vmatprep.subr.mxu0 %v1489
    %2128 = vmatpush1.msra.mxu0 %v1488
    %2129 = vmatprep.subr.mxu0 %v1505
    %2130 = vmatpush1.msra.mxu0 %v1504
    %2131 = vmatprep.subr.mxu0 %v1521
    %2132 = vmatpush1.msra.mxu0 %v1520
    %2133 = vmatprep.subr.mxu0 %v1537
    %2134 = vmatpush1.msra.mxu0 %v1536
    %2135 = vmatprep.subr.mxu0 %v1553
    %2136 = vmatpush1.msra.mxu0 %v1552
    %2137 = vmatprep.subr.mxu0 %v1569
    %2138 = vmatpush1.msra.mxu0 %v1568
    %2139 = vmatprep.subr.mxu0 %v1585
    %2140 = vmatpush1.msra.mxu0 %v1584
    %2141 = vmatprep.subr.mxu0 %v1601
    %2142 = vmatpush1.msra.mxu0 %v1600
    %2143 = vmatprep.subr.mxu0 %v1617
    %2144 = vmatpush1.msra.mxu0 %v1616
    %2145 = vmatprep.subr.mxu0 %v1633
    %2146 = vmatpush1.msra.mxu0 %v1632
    %2147 = vmatprep.subr.mxu0 %v1649
    %2148 = vmatpush1.msra.mxu0 %v1648
    %2149 = vmatprep.subr.mxu0 %v1665
    %2150 = vmatpush1.msra.mxu0 %v1664
    %2151 = vmatprep.subr.mxu0 %v1681
    %2152 = vmatpush1.msra.mxu0 %v1680
    %2153 = vmatprep.subr.mxu0 %v1697
    %2154 = vmatpush1.msra.mxu0 %v1696
    %2155 = vmatprep.subr.mxu0 %v1713
    %2156 = vmatpush1.msra.mxu0 %v1712
    %2157 = vmatprep.subr.mxu0 %v1729
    %2158 = vmatpush1.msra.mxu0 %v1728
    %2159 = vmatprep.subr.mxu0 %v1745
    %2160 = vmatpush1.msra.mxu0 %v1744
    %2161 = vmatprep.subr.mxu0 %v1761
    %2162 = vmatpush1.msra.mxu0 %v1760
    %2163 = vmatprep.subr.mxu0 %v1777
    %2164 = vmatpush1.msra.mxu0 %v1776
    %2165 = vmatprep.subr.mxu0 %v1793
    %2166 = vmatpush1.msra.mxu0 %v1792
    %2167 = vmatprep.subr.mxu0 %v1809
    %2168 = vmatpush1.msra.mxu0 %v1808
    %2169 = vmatprep.subr.mxu0 %v1825
    %2170 = vmatpush1.msra.mxu0 %v1824
    %2171 = vmatprep.subr.mxu0 %v1841
    %2172 = vmatpush1.msra.mxu0 %v1840
    %2173 = vmatprep.subr.mxu0 %v1857
    %2174 = vmatpush1.msra.mxu0 %v1856
    %2175 = vmatprep.subr.mxu0 %v1873
    %2176 = vmatpush1.msra.mxu0 %v1872
    %2177 = vmatprep.subr.mxu0 %v1889
    %2178 = vmatpush1.msra.mxu0 %v1888
    %2179 = vmatprep.subr.mxu0 %v1905
    %2180 = vmatpush1.msra.mxu0 %v1904
    %2181 = vmatprep.subr.mxu0 %v1921
    %2182 = vmatpush1.msra.mxu0 %v1920
    %2183 = vmatprep.subr.mxu0 %v1937
    %2184 = vmatpush1.msra.mxu0 %v1936
    %2185 = vmatprep.subr.mxu0 %v1953
    %2186 = vmatpush1.msra.mxu0 %v1952
    %2187 = vmatprep.mubr.f32.mxu0 %v943
    %2188 = vmatmul.mubr.f32.gmra.mrb[0].mxu0 %v942
    %v2189 = vpop.f32.mrb[0].mxu0
    %v2190 = vadd.f32 %v2119, %v2189
    %v2191 = vpop.f32.mrb[0].mxu0
    %v2192 = vadd.f32 %v2121, %v2191
    %2193 = vdwg.mxu0
    %2194 = vmatprep.subr.mxu0 %v947
    %2195 = vmatpush1.msra.mxu0 %v946
    %2196 = vmatprep.subr.mxu0 %v963
    %2197 = vmatpush1.msra.mxu0 %v962
    %2198 = vmatprep.subr.mxu0 %v979
    %2199 = vmatpush1.msra.mxu0 %v978
    %2200 = vmatprep.subr.mxu0 %v995
    %2201 = vmatpush1.msra.mxu0 %v994
    %2202 = vmatprep.subr.mxu0 %v1011
    %2203 = vmatpush1.msra.mxu0 %v1010
    %2204 = vmatprep.subr.mxu0 %v1027
    %2205 = vmatpush1.msra.mxu0 %v1026
    %2206 = vmatprep.subr.mxu0 %v1043
    %2207 = vmatpush1.msra.mxu0 %v1042
    %2208 = vmatprep.subr.mxu0 %v1059
    %2209 = vmatpush1.msra.mxu0 %v1058
    %2210 = vmatprep.subr.mxu0 %v1075
    %2211 = vmatpush1.msra.mxu0 %v1074
    %2212 = vmatprep.subr.mxu0 %v1091
    %2213 = vmatpush1.msra.mxu0 %v1090
    %2214 = vmatprep.subr.mxu0 %v1107
    %2215 = vmatpush1.msra.mxu0 %v1106
    %2216 = vmatprep.subr.mxu0 %v1123
    %2217 = vmatpush1.msra.mxu0 %v1122
    %2218 = vmatprep.subr.mxu0 %v1139
    %2219 = vmatpush1.msra.mxu0 %v1138
    %2220 = vmatprep.subr.mxu0 %v1155
    %2221 = vmatpush1.msra.mxu0 %v1154
    %2222 = vmatprep.subr.mxu0 %v1171
    %2223 = vmatpush1.msra.mxu0 %v1170
    %2224 = vmatprep.subr.mxu0 %v1187
    %2225 = vmatpush1.msra.mxu0 %v1186
    %2226 = vmatprep.subr.mxu0 %v1203
    %2227 = vmatpush1.msra.mxu0 %v1202
    %2228 = vmatprep.subr.mxu0 %v1219
    %2229 = vmatpush1.msra.mxu0 %v1218
    %2230 = vmatprep.subr.mxu0 %v1235
    %2231 = vmatpush1.msra.mxu0 %v1234
    %2232 = vmatprep.subr.mxu0 %v1251
    %2233 = vmatpush1.msra.mxu0 %v1250
    %2234 = vmatprep.subr.mxu0 %v1267
    %2235 = vmatpush1.msra.mxu0 %v1266
    %2236 = vmatprep.subr.mxu0 %v1283
    %2237 = vmatpush1.msra.mxu0 %v1282
    %2238 = vmatprep.subr.mxu0 %v1299
    %2239 = vmatpush1.msra.mxu0 %v1298
    %2240 = vmatprep.subr.mxu0 %v1315
    %2241 = vmatpush1.msra.mxu0 %v1314
    %2242 = vmatprep.subr.mxu0 %v1331
    %2243 = vmatpush1.msra.mxu0 %v1330
    %2244 = vmatprep.subr.mxu0 %v1347
    %2245 = vmatpush1.msra.mxu0 %v1346
    %2246 = vmatprep.subr.mxu0 %v1363
    %2247 = vmatpush1.msra.mxu0 %v1362
    %2248 = vmatprep.subr.mxu0 %v1379
    %2249 = vmatpush1.msra.mxu0 %v1378
    %2250 = vmatprep.subr.mxu0 %v1395
    %2251 = vmatpush1.msra.mxu0 %v1394
    %2252 = vmatprep.subr.mxu0 %v1411
    %2253 = vmatpush1.msra.mxu0 %v1410
    %2254 = vmatprep.subr.mxu0 %v1427
    %2255 = vmatpush1.msra.mxu0 %v1426
    %2256 = vmatprep.subr.mxu0 %v1443
    %2257 = vmatpush1.msra.mxu0 %v1442
    %2258 = vmatprep.mubr.f32.mxu0 %v941
    %2259 = vmatmul.mubr.f32.gmra.mrb[0].mxu0 %v940
    %v2260 = vpop.f32.mrb[0].mxu0
    %v2261 = vadd.f32 %v1983, %v2260
    %v2262 = vpop.f32.mrb[0].mxu0
    %v2263 = vadd.f32 %v1987, %v2262
    %2264 = vdwg.mxu0
    %2265 = vmatprep.subr.mxu0 %v1459
    %2266 = vmatpush1.msra.mxu0 %v1458
    %2267 = vmatprep.subr.mxu0 %v1475
    %2268 = vmatpush1.msra.mxu0 %v1474
    %2269 = vmatprep.subr.mxu0 %v1491
    %2270 = vmatpush1.msra.mxu0 %v1490
    %2271 = vmatprep.subr.mxu0 %v1507
    %2272 = vmatpush1.msra.mxu0 %v1506
    %2273 = vmatprep.subr.mxu0 %v1523
    %2274 = vmatpush1.msra.mxu0 %v1522
    %2275 = vmatprep.subr.mxu0 %v1539
    %2276 = vmatpush1.msra.mxu0 %v1538
    %2277 = vmatprep.subr.mxu0 %v1555
    %2278 = vmatpush1.msra.mxu0 %v1554
    %2279 = vmatprep.subr.mxu0 %v1571
    %2280 = vmatpush1.msra.mxu0 %v1570
    %2281 = vmatprep.subr.mxu0 %v1587
    %2282 = vmatpush1.msra.mxu0 %v1586
    %2283 = vmatprep.subr.mxu0 %v1603
    %2284 = vmatpush1.msra.mxu0 %v1602
    %2285 = vmatprep.subr.mxu0 %v1619
    %2286 = vmatpush1.msra.mxu0 %v1618
    %2287 = vmatprep.subr.mxu0 %v1635
    %2288 = vmatpush1.msra.mxu0 %v1634
    %2289 = vmatprep.subr.mxu0 %v1651
    %2290 = vmatpush1.msra.mxu0 %v1650
    %2291 = vmatprep.subr.mxu0 %v1667
    %2292 = vmatpush1.msra.mxu0 %v1666
    %2293 = vmatprep.subr.mxu0 %v1683
    %2294 = vmatpush1.msra.mxu0 %v1682
    %2295 = vmatprep.subr.mxu0 %v1699
    %2296 = vmatpush1.msra.mxu0 %v1698
    %2297 = vmatprep.subr.mxu0 %v1715
    %2298 = vmatpush1.msra.mxu0 %v1714
    %2299 = vmatprep.subr.mxu0 %v1731
    %2300 = vmatpush1.msra.mxu0 %v1730
    %2301 = vmatprep.subr.mxu0 %v1747
    %2302 = vmatpush1.msra.mxu0 %v1746
    %2303 = vmatprep.subr.mxu0 %v1763
    %2304 = vmatpush1.msra.mxu0 %v1762
    %2305 = vmatprep.subr.mxu0 %v1779
    %2306 = vmatpush1.msra.mxu0 %v1778
    %2307 = vmatprep.subr.mxu0 %v1795
    %2308 = vmatpush1.msra.mxu0 %v1794
    %2309 = vmatprep.subr.mxu0 %v1811
    %2310 = vmatpush1.msra.mxu0 %v1810
    %2311 = vmatprep.subr.mxu0 %v1827
    %2312 = vmatpush1.msra.mxu0 %v1826
    %2313 = vmatprep.subr.mxu0 %v1843
    %2314 = vmatpush1.msra.mxu0 %v1842
    %2315 = vmatprep.subr.mxu0 %v1859
    %2316 = vmatpush1.msra.mxu0 %v1858
    %2317 = vmatprep.subr.mxu0 %v1875
    %2318 = vmatpush1.msra.mxu0 %v1874
    %2319 = vmatprep.subr.mxu0 %v1891
    %2320 = vmatpush1.msra.mxu0 %v1890
    %2321 = vmatprep.subr.mxu0 %v1907
    %2322 = vmatpush1.msra.mxu0 %v1906
    %2323 = vmatprep.subr.mxu0 %v1923
    %2324 = vmatpush1.msra.mxu0 %v1922
    %2325 = vmatprep.subr.mxu0 %v1939
    %2326 = vmatpush1.msra.mxu0 %v1938
    %2327 = vmatprep.subr.mxu0 %v1955
    %2328 = vmatpush1.msra.mxu0 %v1954
    %2329 = vmatprep.mubr.f32.mxu0 %v943
    %2330 = vmatmul.mubr.f32.gmra.mrb[0].mxu0 %v942
    %v2331 = vpop.f32.mrb[0].mxu0
    %v2332 = vadd.f32 %v2261, %v2331
    %v2333 = vpop.f32.mrb[0].mxu0
    %v2334 = vadd.f32 %v2263, %v2333
    %2335 = vdwg.mxu0
    %2336 = vmatprep.subr.mxu0 %v949
    %2337 = vmatpush1.msra.mxu0 %v948
    %2338 = vmatprep.subr.mxu0 %v965
    %2339 = vmatpush1.msra.mxu0 %v964
    %2340 = vmatprep.subr.mxu0 %v981
    %2341 = vmatpush1.msra.mxu0 %v980
    %2342 = vmatprep.subr.mxu0 %v997
    %2343 = vmatpush1.msra.mxu0 %v996
    %2344 = vmatprep.subr.mxu0 %v1013
    %2345 = vmatpush1.msra.mxu0 %v1012
    %2346 = vmatprep.subr.mxu0 %v1029
    %2347 = vmatpush1.msra.mxu0 %v1028
    %2348 = vmatprep.subr.mxu0 %v1045
    %2349 = vmatpush1.msra.mxu0 %v1044
    %2350 = vmatprep.subr.mxu0 %v1061
    %2351 = vmatpush1.msra.mxu0 %v1060
    %2352 = vmatprep.subr.mxu0 %v1077
    %2353 = vmatpush1.msra.mxu0 %v1076
    %2354 = vmatprep.subr.mxu0 %v1093
    %2355 = vmatpush1.msra.mxu0 %v1092
    %2356 = vmatprep.subr.mxu0 %v1109
    %2357 = vmatpush1.msra.mxu0 %v1108
    %2358 = vmatprep.subr.mxu0 %v1125
    %2359 = vmatpush1.msra.mxu0 %v1124
    %2360 = vmatprep.subr.mxu0 %v1141
    %2361 = vmatpush1.msra.mxu0 %v1140
    %2362 = vmatprep.subr.mxu0 %v1157
    %2363 = vmatpush1.msra.mxu0 %v1156
    %2364 = vmatprep.subr.mxu0 %v1173
    %2365 = vmatpush1.msra.mxu0 %v1172
    %2366 = vmatprep.subr.mxu0 %v1189
    %2367 = vmatpush1.msra.mxu0 %v1188
    %2368 = vmatprep.subr.mxu0 %v1205
    %2369 = vmatpush1.msra.mxu0 %v1204
    %2370 = vmatprep.subr.mxu0 %v1221
    %2371 = vmatpush1.msra.mxu0 %v1220
    %2372 = vmatprep.subr.mxu0 %v1237
    %2373 = vmatpush1.msra.mxu0 %v1236
    %2374 = vmatprep.subr.mxu0 %v1253
    %2375 = vmatpush1.msra.mxu0 %v1252
    %2376 = vmatprep.subr.mxu0 %v1269
    %2377 = vmatpush1.msra.mxu0 %v1268
    %2378 = vmatprep.subr.mxu0 %v1285
    %2379 = vmatpush1.msra.mxu0 %v1284
    %2380 = vmatprep.subr.mxu0 %v1301
    %2381 = vmatpush1.msra.mxu0 %v1300
    %2382 = vmatprep.subr.mxu0 %v1317
    %2383 = vmatpush1.msra.mxu0 %v1316
    %2384 = vmatprep.subr.mxu0 %v1333
    %2385 = vmatpush1.msra.mxu0 %v1332
    %2386 = vmatprep.subr.mxu0 %v1349
    %2387 = vmatpush1.msra.mxu0 %v1348
    %2388 = vmatprep.subr.mxu0 %v1365
    %2389 = vmatpush1.msra.mxu0 %v1364
    %2390 = vmatprep.subr.mxu0 %v1381
    %2391 = vmatpush1.msra.mxu0 %v1380
    %2392 = vmatprep.subr.mxu0 %v1397
    %2393 = vmatpush1.msra.mxu0 %v1396
    %2394 = vmatprep.subr.mxu0 %v1413
    %2395 = vmatpush1.msra.mxu0 %v1412
    %2396 = vmatprep.subr.mxu0 %v1429
    %2397 = vmatpush1.msra.mxu0 %v1428
    %2398 = vmatprep.subr.mxu0 %v1445
    %2399 = vmatpush1.msra.mxu0 %v1444
    %2400 = vmatprep.mubr.f32.mxu0 %v941
    %2401 = vmatmul.mubr.f32.gmra.mrb[0].mxu0 %v940
    %v2402 = vpop.f32.mrb[0].mxu0
    %v2403 = vadd.f32 %v1991, %v2402
    %v2404 = vpop.f32.mrb[0].mxu0
    %v2405 = vadd.f32 %v1995, %v2404
    %2406 = vdwg.mxu0
    %2407 = vmatprep.subr.mxu0 %v1461
    %2408 = vmatpush1.msra.mxu0 %v1460
    %2409 = vmatprep.subr.mxu0 %v1477
    %2410 = vmatpush1.msra.mxu0 %v1476
    %2411 = vmatprep.subr.mxu0 %v1493
    %2412 = vmatpush1.msra.mxu0 %v1492
    %2413 = vmatprep.subr.mxu0 %v1509
    %2414 = vmatpush1.msra.mxu0 %v1508
    %2415 = vmatprep.subr.mxu0 %v1525
    %2416 = vmatpush1.msra.mxu0 %v1524
    %2417 = vmatprep.subr.mxu0 %v1541
    %2418 = vmatpush1.msra.mxu0 %v1540
    %2419 = vmatprep.subr.mxu0 %v1557
    %2420 = vmatpush1.msra.mxu0 %v1556
    %2421 = vmatprep.subr.mxu0 %v1573
    %2422 = vmatpush1.msra.mxu0 %v1572
    %2423 = vmatprep.subr.mxu0 %v1589
    %2424 = vmatpush1.msra.mxu0 %v1588
    %2425 = vmatprep.subr.mxu0 %v1605
    %2426 = vmatpush1.msra.mxu0 %v1604
    %2427 = vmatprep.subr.mxu0 %v1621
    %2428 = vmatpush1.msra.mxu0 %v1620
    %2429 = vmatprep.subr.mxu0 %v1637
    %2430 = vmatpush1.msra.mxu0 %v1636
    %2431 = vmatprep.subr.mxu0 %v1653
    %2432 = vmatpush1.msra.mxu0 %v1652
    %2433 = vmatprep.subr.mxu0 %v1669
    %2434 = vmatpush1.msra.mxu0 %v1668
    %2435 = vmatprep.subr.mxu0 %v1685
    %2436 = vmatpush1.msra.mxu0 %v1684
    %2437 = vmatprep.subr.mxu0 %v1701
    %2438 = vmatpush1.msra.mxu0 %v1700
    %2439 = vmatprep.subr.mxu0 %v1717
    %2440 = vmatpush1.msra.mxu0 %v1716
    %2441 = vmatprep.subr.mxu0 %v1733
    %2442 = vmatpush1.msra.mxu0 %v1732
    %2443 = vmatprep.subr.mxu0 %v1749
    %2444 = vmatpush1.msra.mxu0 %v1748
    %2445 = vmatprep.subr.mxu0 %v1765
    %2446 = vmatpush1.msra.mxu0 %v1764
    %2447 = vmatprep.subr.mxu0 %v1781
    %2448 = vmatpush1.msra.mxu0 %v1780
    %2449 = vmatprep.subr.mxu0 %v1797
    %2450 = vmatpush1.msra.mxu0 %v1796
    %2451 = vmatprep.subr.mxu0 %v1813
    %2452 = vmatpush1.msra.mxu0 %v1812
    %2453 = vmatprep.subr.mxu0 %v1829
    %2454 = vmatpush1.msra.mxu0 %v1828
    %2455 = vmatprep.subr.mxu0 %v1845
    %2456 = vmatpush1.msra.mxu0 %v1844
    %2457 = vmatprep.subr.mxu0 %v1861
    %2458 = vmatpush1.msra.mxu0 %v1860
    %2459 = vmatprep.subr.mxu0 %v1877
    %2460 = vmatpush1.msra.mxu0 %v1876
    %2461 = vmatprep.subr.mxu0 %v1893
    %2462 = vmatpush1.msra.mxu0 %v1892
    %2463 = vmatprep.subr.mxu0 %v1909
    %2464 = vmatpush1.msra.mxu0 %v1908
    %2465 = vmatprep.subr.mxu0 %v1925
    %2466 = vmatpush1.msra.mxu0 %v1924
    %2467 = vmatprep.subr.mxu0 %v1941
    %2468 = vmatpush1.msra.mxu0 %v1940
    %2469 = vmatprep.subr.mxu0 %v1957
    %2470 = vmatpush1.msra.mxu0 %v1956
    %2471 = vmatprep.mubr.f32.mxu0 %v943
    %2472 = vmatmul.mubr.f32.gmra.mrb[0].mxu0 %v942
    %v2473 = vpop.f32.mrb[0].mxu0
    %v2474 = vadd.f32 %v2403, %v2473
    %v2475 = vpop.f32.mrb[0].mxu0
    %v2476 = vadd.f32 %v2405, %v2475
    %2477 = vdwg.mxu0
    %2478 = vmatprep.subr.mxu0 %v951
    %2479 = vmatpush1.msra.mxu0 %v950
    %2480 = vmatprep.subr.mxu0 %v967
    %2481 = vmatpush1.msra.mxu0 %v966
    %2482 = vmatprep.subr.mxu0 %v983
    %2483 = vmatpush1.msra.mxu0 %v982
    %2484 = vmatprep.subr.mxu0 %v999
    %2485 = vmatpush1.msra.mxu0 %v998
    %2486 = vmatprep.subr.mxu0 %v1015
    %2487 = vmatpush1.msra.mxu0 %v1014
    %2488 = vmatprep.subr.mxu0 %v1031
    %2489 = vmatpush1.msra.mxu0 %v1030
    %2490 = vmatprep.subr.mxu0 %v1047
    %2491 = vmatpush1.msra.mxu0 %v1046
    %2492 = vmatprep.subr.mxu0 %v1063
    %2493 = vmatpush1.msra.mxu0 %v1062
    %2494 = vmatprep.subr.mxu0 %v1079
    %2495 = vmatpush1.msra.mxu0 %v1078
    %2496 = vmatprep.subr.mxu0 %v1095
    %2497 = vmatpush1.msra.mxu0 %v1094
    %2498 = vmatprep.subr.mxu0 %v1111
    %2499 = vmatpush1.msra.mxu0 %v1110
    %2500 = vmatprep.subr.mxu0 %v1127
    %2501 = vmatpush1.msra.mxu0 %v1126
    %2502 = vmatprep.subr.mxu0 %v1143
    %2503 = vmatpush1.msra.mxu0 %v1142
    %2504 = vmatprep.subr.mxu0 %v1159
    %2505 = vmatpush1.msra.mxu0 %v1158
    %2506 = vmatprep.subr.mxu0 %v1175
    %2507 = vmatpush1.msra.mxu0 %v1174
    %2508 = vmatprep.subr.mxu0 %v1191
    %2509 = vmatpush1.msra.mxu0 %v1190
    %2510 = vmatprep.subr.mxu0 %v1207
    %2511 = vmatpush1.msra.mxu0 %v1206
    %2512 = vmatprep.subr.mxu0 %v1223
    %2513 = vmatpush1.msra.mxu0 %v1222
    %2514 = vmatprep.subr.mxu0 %v1239
    %2515 = vmatpush1.msra.mxu0 %v1238
    %2516 = vmatprep.subr.mxu0 %v1255
    %2517 = vmatpush1.msra.mxu0 %v1254
    %2518 = vmatprep.subr.mxu0 %v1271
    %2519 = vmatpush1.msra.mxu0 %v1270
    %2520 = vmatprep.subr.mxu0 %v1287
    %2521 = vmatpush1.msra.mxu0 %v1286
    %2522 = vmatprep.subr.mxu0 %v1303
    %2523 = vmatpush1.msra.mxu0 %v1302
    %2524 = vmatprep.subr.mxu0 %v1319
    %2525 = vmatpush1.msra.mxu0 %v1318
    %2526 = vmatprep.subr.mxu0 %v1335
    %2527 = vmatpush1.msra.mxu0 %v1334
    %2528 = vmatprep.subr.mxu0 %v1351
    %2529 = vmatpush1.msra.mxu0 %v1350
    %2530 = vmatprep.subr.mxu0 %v1367
    %2531 = vmatpush1.msra.mxu0 %v1366
    %2532 = vmatprep.subr.mxu0 %v1383
    %2533 = vmatpush1.msra.mxu0 %v1382
    %2534 = vmatprep.subr.mxu0 %v1399
    %2535 = vmatpush1.msra.mxu0 %v1398
    %2536 = vmatprep.subr.mxu0 %v1415
    %2537 = vmatpush1.msra.mxu0 %v1414
    %2538 = vmatprep.subr.mxu0 %v1431
    %2539 = vmatpush1.msra.mxu0 %v1430
    %2540 = vmatprep.subr.mxu0 %v1447
    %2541 = vmatpush1.msra.mxu0 %v1446
    %2542 = vmatprep.mubr.f32.mxu0 %v941
    %2543 = vmatmul.mubr.f32.gmra.mrb[0].mxu0 %v940
    %v2544 = vpop.f32.mrb[0].mxu0
    %v2545 = vadd.f32 %v1999, %v2544
    %v2546 = vpop.f32.mrb[0].mxu0
    %v2547 = vadd.f32 %v2003, %v2546
    %2548 = vdwg.mxu0
    %2549 = vmatprep.subr.mxu0 %v1463
    %2550 = vmatpush1.msra.mxu0 %v1462
    %2551 = vmatprep.subr.mxu0 %v1479
    %2552 = vmatpush1.msra.mxu0 %v1478
    %2553 = vmatprep.subr.mxu0 %v1495
    %2554 = vmatpush1.msra.mxu0 %v1494
    %2555 = vmatprep.subr.mxu0 %v1511
    %2556 = vmatpush1.msra.mxu0 %v1510
    %2557 = vmatprep.subr.mxu0 %v1527
    %2558 = vmatpush1.msra.mxu0 %v1526
    %2559 = vmatprep.subr.mxu0 %v1543
    %2560 = vmatpush1.msra.mxu0 %v1542
    %2561 = vmatprep.subr.mxu0 %v1559
    %2562 = vmatpush1.msra.mxu0 %v1558
    %2563 = vmatprep.subr.mxu0 %v1575
    %2564 = vmatpush1.msra.mxu0 %v1574
    %2565 = vmatprep.subr.mxu0 %v1591
    %2566 = vmatpush1.msra.mxu0 %v1590
    %2567 = vmatprep.subr.mxu0 %v1607
    %2568 = vmatpush1.msra.mxu0 %v1606
    %2569 = vmatprep.subr.mxu0 %v1623
    %2570 = vmatpush1.msra.mxu0 %v1622
    %2571 = vmatprep.subr.mxu0 %v1639
    %2572 = vmatpush1.msra.mxu0 %v1638
    %2573 = vmatprep.subr.mxu0 %v1655
    %2574 = vmatpush1.msra.mxu0 %v1654
    %2575 = vmatprep.subr.mxu0 %v1671
    %2576 = vmatpush1.msra.mxu0 %v1670
    %2577 = vmatprep.subr.mxu0 %v1687
    %2578 = vmatpush1.msra.mxu0 %v1686
    %2579 = vmatprep.subr.mxu0 %v1703
    %2580 = vmatpush1.msra.mxu0 %v1702
    %2581 = vmatprep.subr.mxu0 %v1719
    %2582 = vmatpush1.msra.mxu0 %v1718
    %2583 = vmatprep.subr.mxu0 %v1735
    %2584 = vmatpush1.msra.mxu0 %v1734
    %2585 = vmatprep.subr.mxu0 %v1751
    %2586 = vmatpush1.msra.mxu0 %v1750
    %2587 = vmatprep.subr.mxu0 %v1767
    %2588 = vmatpush1.msra.mxu0 %v1766
    %2589 = vmatprep.subr.mxu0 %v1783
    %2590 = vmatpush1.msra.mxu0 %v1782
    %2591 = vmatprep.subr.mxu0 %v1799
    %2592 = vmatpush1.msra.mxu0 %v1798
    %2593 = vmatprep.subr.mxu0 %v1815
    %2594 = vmatpush1.msra.mxu0 %v1814
    %2595 = vmatprep.subr.mxu0 %v1831
    %2596 = vmatpush1.msra.mxu0 %v1830
    %2597 = vmatprep.subr.mxu0 %v1847
    %2598 = vmatpush1.msra.mxu0 %v1846
    %2599 = vmatprep.subr.mxu0 %v1863
    %2600 = vmatpush1.msra.mxu0 %v1862
    %2601 = vmatprep.subr.mxu0 %v1879
    %2602 = vmatpush1.msra.mxu0 %v1878
    %2603 = vmatprep.subr.mxu0 %v1895
    %2604 = vmatpush1.msra.mxu0 %v1894
    %2605 = vmatprep.subr.mxu0 %v1911
    %2606 = vmatpush1.msra.mxu0 %v1910
    %2607 = vmatprep.subr.mxu0 %v1927
    %2608 = vmatpush1.msra.mxu0 %v1926
    %2609 = vmatprep.subr.mxu0 %v1943
    %2610 = vmatpush1.msra.mxu0 %v1942
    %2611 = vmatprep.subr.mxu0 %v1959
    %2612 = vmatpush1.msra.mxu0 %v1958
    %2613 = vmatprep.mubr.f32.mxu0 %v943
    %2614 = vmatmul.mubr.f32.gmra.mrb[0].mxu0 %v942
    %v2615 = vpop.f32.mrb[0].mxu0
    %v2616 = vadd.f32 %v2545, %v2615
    %v2617 = vpop.f32.mrb[0].mxu0
    %v2618 = vadd.f32 %v2547, %v2617
    %2619 = vdwg.mxu0
    %2620 = vmatprep.subr.mxu0 %v953
    %2621 = vmatpush1.msra.mxu0 %v952
    %2622 = vmatprep.subr.mxu0 %v969
    %2623 = vmatpush1.msra.mxu0 %v968
    %2624 = vmatprep.subr.mxu0 %v985
    %2625 = vmatpush1.msra.mxu0 %v984
    %2626 = vmatprep.subr.mxu0 %v1001
    %2627 = vmatpush1.msra.mxu0 %v1000
    %2628 = vmatprep.subr.mxu0 %v1017
    %2629 = vmatpush1.msra.mxu0 %v1016
    %2630 = vmatprep.subr.mxu0 %v1033
    %2631 = vmatpush1.msra.mxu0 %v1032
    %2632 = vmatprep.subr.mxu0 %v1049
    %2633 = vmatpush1.msra.mxu0 %v1048
    %2634 = vmatprep.subr.mxu0 %v1065
    %2635 = vmatpush1.msra.mxu0 %v1064
    %2636 = vmatprep.subr.mxu0 %v1081
    %2637 = vmatpush1.msra.mxu0 %v1080
    %2638 = vmatprep.subr.mxu0 %v1097
    %2639 = vmatpush1.msra.mxu0 %v1096
    %2640 = vmatprep.subr.mxu0 %v1113
    %2641 = vmatpush1.msra.mxu0 %v1112
    %2642 = vmatprep.subr.mxu0 %v1129
    %2643 = vmatpush1.msra.mxu0 %v1128
    %2644 = vmatprep.subr.mxu0 %v1145
    %2645 = vmatpush1.msra.mxu0 %v1144
    %2646 = vmatprep.subr.mxu0 %v1161
    %2647 = vmatpush1.msra.mxu0 %v1160
    %2648 = vmatprep.subr.mxu0 %v1177
    %2649 = vmatpush1.msra.mxu0 %v1176
    %2650 = vmatprep.subr.mxu0 %v1193
    %2651 = vmatpush1.msra.mxu0 %v1192
    %2652 = vmatprep.subr.mxu0 %v1209
    %2653 = vmatpush1.msra.mxu0 %v1208
    %2654 = vmatprep.subr.mxu0 %v1225
    %2655 = vmatpush1.msra.mxu0 %v1224
    %2656 = vmatprep.subr.mxu0 %v1241
    %2657 = vmatpush1.msra.mxu0 %v1240
    %2658 = vmatprep.subr.mxu0 %v1257
    %2659 = vmatpush1.msra.mxu0 %v1256
    %2660 = vmatprep.subr.mxu0 %v1273
    %2661 = vmatpush1.msra.mxu0 %v1272
    %2662 = vmatprep.subr.mxu0 %v1289
    %2663 = vmatpush1.msra.mxu0 %v1288
    %2664 = vmatprep.subr.mxu0 %v1305
    %2665 = vmatpush1.msra.mxu0 %v1304
    %2666 = vmatprep.subr.mxu0 %v1321
    %2667 = vmatpush1.msra.mxu0 %v1320
    %2668 = vmatprep.subr.mxu0 %v1337
    %2669 = vmatpush1.msra.mxu0 %v1336
    %2670 = vmatprep.subr.mxu0 %v1353
    %2671 = vmatpush1.msra.mxu0 %v1352
    %2672 = vmatprep.subr.mxu0 %v1369
    %2673 = vmatpush1.msra.mxu0 %v1368
    %2674 = vmatprep.subr.mxu0 %v1385
    %2675 = vmatpush1.msra.mxu0 %v1384
    %2676 = vmatprep.subr.mxu0 %v1401
    %2677 = vmatpush1.msra.mxu0 %v1400
    %2678 = vmatprep.subr.mxu0 %v1417
    %2679 = vmatpush1.msra.mxu0 %v1416
    %2680 = vmatprep.subr.mxu0 %v1433
    %2681 = vmatpush1.msra.mxu0 %v1432
    %2682 = vmatprep.subr.mxu0 %v1449
    %2683 = vmatpush1.msra.mxu0 %v1448
    %2684 = vmatprep.mubr.f32.mxu0 %v941
    %2685 = vmatmul.mubr.f32.gmra.mrb[0].mxu0 %v940
    %v2686 = vpop.f32.mrb[0].mxu0
    %v2687 = vadd.f32 %v2007, %v2686
    %v2688 = vpop.f32.mrb[0].mxu0
    %v2689 = vadd.f32 %v2011, %v2688
    %2690 = vdwg.mxu0
    %2691 = vmatprep.subr.mxu0 %v1465
    %2692 = vmatpush1.msra.mxu0 %v1464
    %2693 = vmatprep.subr.mxu0 %v1481
    %2694 = vmatpush1.msra.mxu0 %v1480
    %2695 = vmatprep.subr.mxu0 %v1497
    %2696 = vmatpush1.msra.mxu0 %v1496
    %2697 = vmatprep.subr.mxu0 %v1513
    %2698 = vmatpush1.msra.mxu0 %v1512
    %2699 = vmatprep.subr.mxu0 %v1529
    %2700 = vmatpush1.msra.mxu0 %v1528
    %2701 = vmatprep.subr.mxu0 %v1545
    %2702 = vmatpush1.msra.mxu0 %v1544
    %2703 = vmatprep.subr.mxu0 %v1561
    %2704 = vmatpush1.msra.mxu0 %v1560
    %2705 = vmatprep.subr.mxu0 %v1577
    %2706 = vmatpush1.msra.mxu0 %v1576
    %2707 = vmatprep.subr.mxu0 %v1593
    %2708 = vmatpush1.msra.mxu0 %v1592
    %2709 = vmatprep.subr.mxu0 %v1609
    %2710 = vmatpush1.msra.mxu0 %v1608
    %2711 = vmatprep.subr.mxu0 %v1625
    %2712 = vmatpush1.msra.mxu0 %v1624
    %2713 = vmatprep.subr.mxu0 %v1641
    %2714 = vmatpush1.msra.mxu0 %v1640
    %2715 = vmatprep.subr.mxu0 %v1657
    %2716 = vmatpush1.msra.mxu0 %v1656
    %2717 = vmatprep.subr.mxu0 %v1673
    %2718 = vmatpush1.msra.mxu0 %v1672
    %2719 = vmatprep.subr.mxu0 %v1689
    %2720 = vmatpush1.msra.mxu0 %v1688
    %2721 = vmatprep.subr.mxu0 %v1705
    %2722 = vmatpush1.msra.mxu0 %v1704
    %2723 = vmatprep.subr.mxu0 %v1721
    %2724 = vmatpush1.msra.mxu0 %v1720
    %2725 = vmatprep.subr.mxu0 %v1737
    %2726 = vmatpush1.msra.mxu0 %v1736
    %2727 = vmatprep.subr.mxu0 %v1753
    %2728 = vmatpush1.msra.mxu0 %v1752
    %2729 = vmatprep.subr.mxu0 %v1769
    %2730 = vmatpush1.msra.mxu0 %v1768
    %2731 = vmatprep.subr.mxu0 %v1785
    %2732 = vmatpush1.msra.mxu0 %v1784
    %2733 = vmatprep.subr.mxu0 %v1801
    %2734 = vmatpush1.msra.mxu0 %v1800
    %2735 = vmatprep.subr.mxu0 %v1817
    %2736 = vmatpush1.msra.mxu0 %v1816
    %2737 = vmatprep.subr.mxu0 %v1833
    %2738 = vmatpush1.msra.mxu0 %v1832
    %2739 = vmatprep.subr.mxu0 %v1849
    %2740 = vmatpush1.msra.mxu0 %v1848
    %2741 = vmatprep.subr.mxu0 %v1865
    %2742 = vmatpush1.msra.mxu0 %v1864
    %2743 = vmatprep.subr.mxu0 %v1881
    %2744 = vmatpush1.msra.mxu0 %v1880
    %2745 = vmatprep.subr.mxu0 %v1897
    %2746 = vmatpush1.msra.mxu0 %v1896
    %2747 = vmatprep.subr.mxu0 %v1913
    %2748 = vmatpush1.msra.mxu0 %v1912
    %2749 = vmatprep.subr.mxu0 %v1929
    %2750 = vmatpush1.msra.mxu0 %v1928
    %2751 = vmatprep.subr.mxu0 %v1945
    %2752 = vmatpush1.msra.mxu0 %v1944
    %2753 = vmatprep.subr.mxu0 %v1961
    %2754 = vmatpush1.msra.mxu0 %v1960
    %2755 = vmatprep.mubr.f32.mxu0 %v943
    %2756 = vmatmul.mubr.f32.gmra.mrb[0].mxu0 %v942
    %v2757 = vpop.f32.mrb[0].mxu0
    %v2758 = vadd.f32 %v2687, %v2757
    %v2759 = vpop.f32.mrb[0].mxu0
    %v2760 = vadd.f32 %v2689, %v2759
    %2761 = vdwg.mxu0
    %2762 = vmatprep.subr.mxu0 %v955
    %2763 = vmatpush1.msra.mxu0 %v954
    %2764 = vmatprep.subr.mxu0 %v971
    %2765 = vmatpush1.msra.mxu0 %v970
    %2766 = vmatprep.subr.mxu0 %v987
    %2767 = vmatpush1.msra.mxu0 %v986
    %2768 = vmatprep.subr.mxu0 %v1003
    %2769 = vmatpush1.msra.mxu0 %v1002
    %2770 = vmatprep.subr.mxu0 %v1019
    %2771 = vmatpush1.msra.mxu0 %v1018
    %2772 = vmatprep.subr.mxu0 %v1035
    %2773 = vmatpush1.msra.mxu0 %v1034
    %2774 = vmatprep.subr.mxu0 %v1051
    %2775 = vmatpush1.msra.mxu0 %v1050
    %2776 = vmatprep.subr.mxu0 %v1067
    %2777 = vmatpush1.msra.mxu0 %v1066
    %2778 = vmatprep.subr.mxu0 %v1083
    %2779 = vmatpush1.msra.mxu0 %v1082
    %2780 = vmatprep.subr.mxu0 %v1099
    %2781 = vmatpush1.msra.mxu0 %v1098
    %2782 = vmatprep.subr.mxu0 %v1115
    %2783 = vmatpush1.msra.mxu0 %v1114
    %2784 = vmatprep.subr.mxu0 %v1131
    %2785 = vmatpush1.msra.mxu0 %v1130
    %2786 = vmatprep.subr.mxu0 %v1147
    %2787 = vmatpush1.msra.mxu0 %v1146
    %2788 = vmatprep.subr.mxu0 %v1163
    %2789 = vmatpush1.msra.mxu0 %v1162
    %2790 = vmatprep.subr.mxu0 %v1179
    %2791 = vmatpush1.msra.mxu0 %v1178
    %2792 = vmatprep.subr.mxu0 %v1195
    %2793 = vmatpush1.msra.mxu0 %v1194
    %2794 = vmatprep.subr.mxu0 %v1211
    %2795 = vmatpush1.msra.mxu0 %v1210
    %2796 = vmatprep.subr.mxu0 %v1227
    %2797 = vmatpush1.msra.mxu0 %v1226
    %2798 = vmatprep.subr.mxu0 %v1243
    %2799 = vmatpush1.msra.mxu0 %v1242
    %2800 = vmatprep.subr.mxu0 %v1259
    %2801 = vmatpush1.msra.mxu0 %v1258
    %2802 = vmatprep.subr.mxu0 %v1275
    %2803 = vmatpush1.msra.mxu0 %v1274
    %2804 = vmatprep.subr.mxu0 %v1291
    %2805 = vmatpush1.msra.mxu0 %v1290
    %2806 = vmatprep.subr.mxu0 %v1307
    %2807 = vmatpush1.msra.mxu0 %v1306
    %2808 = vmatprep.subr.mxu0 %v1323
    %2809 = vmatpush1.msra.mxu0 %v1322
    %2810 = vmatprep.subr.mxu0 %v1339
    %2811 = vmatpush1.msra.mxu0 %v1338
    %2812 = vmatprep.subr.mxu0 %v1355
    %2813 = vmatpush1.msra.mxu0 %v1354
    %2814 = vmatprep.subr.mxu0 %v1371
    %2815 = vmatpush1.msra.mxu0 %v1370
    %2816 = vmatprep.subr.mxu0 %v1387
    %2817 = vmatpush1.msra.mxu0 %v1386
    %2818 = vmatprep.subr.mxu0 %v1403
    %2819 = vmatpush1.msra.mxu0 %v1402
    %2820 = vmatprep.subr.mxu0 %v1419
    %2821 = vmatpush1.msra.mxu0 %v1418
    %2822 = vmatprep.subr.mxu0 %v1435
    %2823 = vmatpush1.msra.mxu0 %v1434
    %2824 = vmatprep.subr.mxu0 %v1451
    %2825 = vmatpush1.msra.mxu0 %v1450
    %2826 = vmatprep.mubr.f32.mxu0 %v941
    %2827 = vmatmul.mubr.f32.gmra.mrb[0].mxu0 %v940
    %v2828 = vpop.f32.mrb[0].mxu0
    %v2829 = vadd.f32 %v2015, %v2828
    %v2830 = vpop.f32.mrb[0].mxu0
    %v2831 = vadd.f32 %v2019, %v2830
    %2832 = vdwg.mxu0
    %2833 = vmatprep.subr.mxu0 %v1467
    %2834 = vmatpush1.msra.mxu0 %v1466
    %2835 = vmatprep.subr.mxu0 %v1483
    %2836 = vmatpush1.msra.mxu0 %v1482
    %2837 = vmatprep.subr.mxu0 %v1499
    %2838 = vmatpush1.msra.mxu0 %v1498
    %2839 = vmatprep.subr.mxu0 %v1515
    %2840 = vmatpush1.msra.mxu0 %v1514
    %2841 = vmatprep.subr.mxu0 %v1531
    %2842 = vmatpush1.msra.mxu0 %v1530
    %2843 = vmatprep.subr.mxu0 %v1547
    %2844 = vmatpush1.msra.mxu0 %v1546
    %2845 = vmatprep.subr.mxu0 %v1563
    %2846 = vmatpush1.msra.mxu0 %v1562
    %2847 = vmatprep.subr.mxu0 %v1579
    %2848 = vmatpush1.msra.mxu0 %v1578
    %2849 = vmatprep.subr.mxu0 %v1595
    %2850 = vmatpush1.msra.mxu0 %v1594
    %2851 = vmatprep.subr.mxu0 %v1611
    %2852 = vmatpush1.msra.mxu0 %v1610
    %2853 = vmatprep.subr.mxu0 %v1627
    %2854 = vmatpush1.msra.mxu0 %v1626
    %2855 = vmatprep.subr.mxu0 %v1643
    %2856 = vmatpush1.msra.mxu0 %v1642
    %2857 = vmatprep.subr.mxu0 %v1659
    %2858 = vmatpush1.msra.mxu0 %v1658
    %2859 = vmatprep.subr.mxu0 %v1675
    %2860 = vmatpush1.msra.mxu0 %v1674
    %2861 = vmatprep.subr.mxu0 %v1691
    %2862 = vmatpush1.msra.mxu0 %v1690
    %2863 = vmatprep.subr.mxu0 %v1707
    %2864 = vmatpush1.msra.mxu0 %v1706
    %2865 = vmatprep.subr.mxu0 %v1723
    %2866 = vmatpush1.msra.mxu0 %v1722
    %2867 = vmatprep.subr.mxu0 %v1739
    %2868 = vmatpush1.msra.mxu0 %v1738
    %2869 = vmatprep.subr.mxu0 %v1755
    %2870 = vmatpush1.msra.mxu0 %v1754
    %2871 = vmatprep.subr.mxu0 %v1771
    %2872 = vmatpush1.msra.mxu0 %v1770
    %2873 = vmatprep.subr.mxu0 %v1787
    %2874 = vmatpush1.msra.mxu0 %v1786
    %2875 = vmatprep.subr.mxu0 %v1803
    %2876 = vmatpush1.msra.mxu0 %v1802
    %2877 = vmatprep.subr.mxu0 %v1819
    %2878 = vmatpush1.msra.mxu0 %v1818
    %2879 = vmatprep.subr.mxu0 %v1835
    %2880 = vmatpush1.msra.mxu0 %v1834
    %2881 = vmatprep.subr.mxu0 %v1851
    %2882 = vmatpush1.msra.mxu0 %v1850
    %2883 = vmatprep.subr.mxu0 %v1867
    %2884 = vmatpush1.msra.mxu0 %v1866
    %2885 = vmatprep.subr.mxu0 %v1883
    %2886 = vmatpush1.msra.mxu0 %v1882
    %2887 = vmatprep.subr.mxu0 %v1899
    %2888 = vmatpush1.msra.mxu0 %v1898
    %2889 = vmatprep.subr.mxu0 %v1915
    %2890 = vmatpush1.msra.mxu0 %v1914
    %2891 = vmatprep.subr.mxu0 %v1931
    %2892 = vmatpush1.msra.mxu0 %v1930
    %2893 = vmatprep.subr.mxu0 %v1947
    %2894 = vmatpush1.msra.mxu0 %v1946
    %2895 = vmatprep.subr.mxu0 %v1963
    %2896 = vmatpush1.msra.mxu0 %v1962
    %2897 = vmatprep.mubr.f32.mxu0 %v943
    %2898 = vmatmul.mubr.f32.gmra.mrb[0].mxu0 %v942
    %v2899 = vpop.f32.mrb[0].mxu0
    %v2900 = vadd.f32 %v2829, %v2899
    %v2901 = vpop.f32.mrb[0].mxu0
    %v2902 = vadd.f32 %v2831, %v2901
    %2903 = vdwg.mxu0
    %2904 = vmatprep.subr.mxu0 %v957
    %2905 = vmatpush1.msra.mxu0 %v956
    %2906 = vmatprep.subr.mxu0 %v973
    %2907 = vmatpush1.msra.mxu0 %v972
    %2908 = vmatprep.subr.mxu0 %v989
    %2909 = vmatpush1.msra.mxu0 %v988
    %2910 = vmatprep.subr.mxu0 %v1005
    %2911 = vmatpush1.msra.mxu0 %v1004
    %2912 = vmatprep.subr.mxu0 %v1021
    %2913 = vmatpush1.msra.mxu0 %v1020
    %2914 = vmatprep.subr.mxu0 %v1037
    %2915 = vmatpush1.msra.mxu0 %v1036
    %2916 = vmatprep.subr.mxu0 %v1053
    %2917 = vmatpush1.msra.mxu0 %v1052
    %2918 = vmatprep.subr.mxu0 %v1069
    %2919 = vmatpush1.msra.mxu0 %v1068
    %2920 = vmatprep.subr.mxu0 %v1085
    %2921 = vmatpush1.msra.mxu0 %v1084
    %2922 = vmatprep.subr.mxu0 %v1101
    %2923 = vmatpush1.msra.mxu0 %v1100
    %2924 = vmatprep.subr.mxu0 %v1117
    %2925 = vmatpush1.msra.mxu0 %v1116
    %2926 = vmatprep.subr.mxu0 %v1133
    %2927 = vmatpush1.msra.mxu0 %v1132
    %2928 = vmatprep.subr.mxu0 %v1149
    %2929 = vmatpush1.msra.mxu0 %v1148
    %2930 = vmatprep.subr.mxu0 %v1165
    %2931 = vmatpush1.msra.mxu0 %v1164
    %2932 = vmatprep.subr.mxu0 %v1181
    %2933 = vmatpush1.msra.mxu0 %v1180
    %2934 = vmatprep.subr.mxu0 %v1197
    %2935 = vmatpush1.msra.mxu0 %v1196
    %2936 = vmatprep.subr.mxu0 %v1213
    %2937 = vmatpush1.msra.mxu0 %v1212
    %2938 = vmatprep.subr.mxu0 %v1229
    %2939 = vmatpush1.msra.mxu0 %v1228
    %2940 = vmatprep.subr.mxu0 %v1245
    %2941 = vmatpush1.msra.mxu0 %v1244
    %2942 = vmatprep.subr.mxu0 %v1261
    %2943 = vmatpush1.msra.mxu0 %v1260
    %2944 = vmatprep.subr.mxu0 %v1277
    %2945 = vmatpush1.msra.mxu0 %v1276
    %2946 = vmatprep.subr.mxu0 %v1293
    %2947 = vmatpush1.msra.mxu0 %v1292
    %2948 = vmatprep.subr.mxu0 %v1309
    %2949 = vmatpush1.msra.mxu0 %v1308
    %2950 = vmatprep.subr.mxu0 %v1325
    %2951 = vmatpush1.msra.mxu0 %v1324
    %2952 = vmatprep.subr.mxu0 %v1341
    %2953 = vmatpush1.msra.mxu0 %v1340
    %2954 = vmatprep.subr.mxu0 %v1357
    %2955 = vmatpush1.msra.mxu0 %v1356
    %2956 = vmatprep.subr.mxu0 %v1373
    %2957 = vmatpush1.msra.mxu0 %v1372
    %2958 = vmatprep.subr.mxu0 %v1389
    %2959 = vmatpush1.msra.mxu0 %v1388
    %2960 = vmatprep.subr.mxu0 %v1405
    %2961 = vmatpush1.msra.mxu0 %v1404
    %2962 = vmatprep.subr.mxu0 %v1421
    %2963 = vmatpush1.msra.mxu0 %v1420
    %2964 = vmatprep.subr.mxu0 %v1437
    %2965 = vmatpush1.msra.mxu0 %v1436
    %2966 = vmatprep.subr.mxu0 %v1453
    %2967 = vmatpush1.msra.mxu0 %v1452
    %2968 = vmatprep.mubr.f32.mxu0 %v941
    %2969 = vmatmul.mubr.f32.gmra.mrb[0].mxu0 %v940
    %v2970 = vpop.f32.mrb[0].mxu0
    %v2971 = vadd.f32 %v2023, %v2970
    %v2972 = vpop.f32.mrb[0].mxu0
    %v2973 = vadd.f32 %v2027, %v2972
    %2974 = vdwg.mxu0
    %2975 = vmatprep.subr.mxu0 %v1469
    %2976 = vmatpush1.msra.mxu0 %v1468
    %2977 = vmatprep.subr.mxu0 %v1485
    %2978 = vmatpush1.msra.mxu0 %v1484
    %2979 = vmatprep.subr.mxu0 %v1501
    %2980 = vmatpush1.msra.mxu0 %v1500
    %2981 = vmatprep.subr.mxu0 %v1517
    %2982 = vmatpush1.msra.mxu0 %v1516
    %2983 = vmatprep.subr.mxu0 %v1533
    %2984 = vmatpush1.msra.mxu0 %v1532
    %2985 = vmatprep.subr.mxu0 %v1549
    %2986 = vmatpush1.msra.mxu0 %v1548
    %2987 = vmatprep.subr.mxu0 %v1565
    %2988 = vmatpush1.msra.mxu0 %v1564
    %2989 = vmatprep.subr.mxu0 %v1581
    %2990 = vmatpush1.msra.mxu0 %v1580
    %2991 = vmatprep.subr.mxu0 %v1597
    %2992 = vmatpush1.msra.mxu0 %v1596
    %2993 = vmatprep.subr.mxu0 %v1613
    %2994 = vmatpush1.msra.mxu0 %v1612
    %2995 = vmatprep.subr.mxu0 %v1629
    %2996 = vmatpush1.msra.mxu0 %v1628
    %2997 = vmatprep.subr.mxu0 %v1645
    %2998 = vmatpush1.msra.mxu0 %v1644
    %2999 = vmatprep.subr.mxu0 %v1661
    %3000 = vmatpush1.msra.mxu0 %v1660
    %3001 = vmatprep.subr.mxu0 %v1677
    %3002 = vmatpush1.msra.mxu0 %v1676
    %3003 = vmatprep.subr.mxu0 %v1693
    %3004 = vmatpush1.msra.mxu0 %v1692
    %3005 = vmatprep.subr.mxu0 %v1709
    %3006 = vmatpush1.msra.mxu0 %v1708
    %3007 = vmatprep.subr.mxu0 %v1725
    %3008 = vmatpush1.msra.mxu0 %v1724
    %3009 = vmatprep.subr.mxu0 %v1741
    %3010 = vmatpush1.msra.mxu0 %v1740
    %3011 = vmatprep.subr.mxu0 %v1757
    %3012 = vmatpush1.msra.mxu0 %v1756
    %3013 = vmatprep.subr.mxu0 %v1773
    %3014 = vmatpush1.msra.mxu0 %v1772
    %3015 = vmatprep.subr.mxu0 %v1789
    %3016 = vmatpush1.msra.mxu0 %v1788
    %3017 = vmatprep.subr.mxu0 %v1805
    %3018 = vmatpush1.msra.mxu0 %v1804
    %3019 = vmatprep.subr.mxu0 %v1821
    %3020 = vmatpush1.msra.mxu0 %v1820
    %3021 = vmatprep.subr.mxu0 %v1837
    %3022 = vmatpush1.msra.mxu0 %v1836
    %3023 = vmatprep.subr.mxu0 %v1853
    %3024 = vmatpush1.msra.mxu0 %v1852
    %3025 = vmatprep.subr.mxu0 %v1869
    %3026 = vmatpush1.msra.mxu0 %v1868
    %3027 = vmatprep.subr.mxu0 %v1885
    %3028 = vmatpush1.msra.mxu0 %v1884
    %3029 = vmatprep.subr.mxu0 %v1901
    %3030 = vmatpush1.msra.mxu0 %v1900
    %3031 = vmatprep.subr.mxu0 %v1917
    %3032 = vmatpush1.msra.mxu0 %v1916
    %3033 = vmatprep.subr.mxu0 %v1933
    %3034 = vmatpush1.msra.mxu0 %v1932
    %3035 = vmatprep.subr.mxu0 %v1949
    %3036 = vmatpush1.msra.mxu0 %v1948
    %3037 = vmatprep.subr.mxu0 %v1965
    %3038 = vmatpush1.msra.mxu0 %v1964
    %3039 = vmatprep.mubr.f32.mxu0 %v943
    %3040 = vmatmul.mubr.f32.gmra.mrb[0].mxu0 %v942
    %v3041 = vpop.f32.mrb[0].mxu0
    %v3042 = vadd.f32 %v2971, %v3041
    %v3043 = vpop.f32.mrb[0].mxu0
    %v3044 = vadd.f32 %v2973, %v3043
    %3045 = vdwg.mxu0
    %3046 = vmatprep.subr.mxu0 %v959
    %3047 = vmatpush1.msra.mxu0 %v958
    %3048 = vmatprep.subr.mxu0 %v975
    %3049 = vmatpush1.msra.mxu0 %v974
    %3050 = vmatprep.subr.mxu0 %v991
    %3051 = vmatpush1.msra.mxu0 %v990
    %3052 = vmatprep.subr.mxu0 %v1007
    %3053 = vmatpush1.msra.mxu0 %v1006
    %3054 = vmatprep.subr.mxu0 %v1023
    %3055 = vmatpush1.msra.mxu0 %v1022
    %3056 = vmatprep.subr.mxu0 %v1039
    %3057 = vmatpush1.msra.mxu0 %v1038
    %3058 = vmatprep.subr.mxu0 %v1055
    %3059 = vmatpush1.msra.mxu0 %v1054
    %3060 = vmatprep.subr.mxu0 %v1071
    %3061 = vmatpush1.msra.mxu0 %v1070
    %3062 = vmatprep.subr.mxu0 %v1087
    %3063 = vmatpush1.msra.mxu0 %v1086
    %3064 = vmatprep.subr.mxu0 %v1103
    %3065 = vmatpush1.msra.mxu0 %v1102
    %3066 = vmatprep.subr.mxu0 %v1119
    %3067 = vmatpush1.msra.mxu0 %v1118
    %3068 = vmatprep.subr.mxu0 %v1135
    %3069 = vmatpush1.msra.mxu0 %v1134
    %3070 = vmatprep.subr.mxu0 %v1151
    %3071 = vmatpush1.msra.mxu0 %v1150
    %3072 = vmatprep.subr.mxu0 %v1167
    %3073 = vmatpush1.msra.mxu0 %v1166
    %3074 = vmatprep.subr.mxu0 %v1183
    %3075 = vmatpush1.msra.mxu0 %v1182
    %3076 = vmatprep.subr.mxu0 %v1199
    %3077 = vmatpush1.msra.mxu0 %v1198
    %3078 = vmatprep.subr.mxu0 %v1215
    %3079 = vmatpush1.msra.mxu0 %v1214
    %3080 = vmatprep.subr.mxu0 %v1231
    %3081 = vmatpush1.msra.mxu0 %v1230
    %3082 = vmatprep.subr.mxu0 %v1247
    %3083 = vmatpush1.msra.mxu0 %v1246
    %3084 = vmatprep.subr.mxu0 %v1263
    %3085 = vmatpush1.msra.mxu0 %v1262
    %3086 = vmatprep.subr.mxu0 %v1279
    %3087 = vmatpush1.msra.mxu0 %v1278
    %3088 = vmatprep.subr.mxu0 %v1295
    %3089 = vmatpush1.msra.mxu0 %v1294
    %3090 = vmatprep.subr.mxu0 %v1311
    %3091 = vmatpush1.msra.mxu0 %v1310
    %3092 = vmatprep.subr.mxu0 %v1327
    %3093 = vmatpush1.msra.mxu0 %v1326
    %3094 = vmatprep.subr.mxu0 %v1343
    %3095 = vmatpush1.msra.mxu0 %v1342
    %3096 = vmatprep.subr.mxu0 %v1359
    %3097 = vmatpush1.msra.mxu0 %v1358
    %3098 = vmatprep.subr.mxu0 %v1375
    %3099 = vmatpush1.msra.mxu0 %v1374
    %3100 = vmatprep.subr.mxu0 %v1391
    %3101 = vmatpush1.msra.mxu0 %v1390
    %3102 = vmatprep.subr.mxu0 %v1407
    %3103 = vmatpush1.msra.mxu0 %v1406
    %3104 = vmatprep.subr.mxu0 %v1423
    %3105 = vmatpush1.msra.mxu0 %v1422
    %3106 = vmatprep.subr.mxu0 %v1439
    %3107 = vmatpush1.msra.mxu0 %v1438
    %3108 = vmatprep.subr.mxu0 %v1455
    %3109 = vmatpush1.msra.mxu0 %v1454
    %3110 = vmatprep.mubr.f32.mxu0 %v941
    %3111 = vmatmul.mubr.f32.gmra.mrb[0].mxu0 %v940
    %v3112 = vpop.f32.mrb[0].mxu0
    %v3113 = vadd.f32 %v2031, %v3112
    %v3114 = vpop.f32.mrb[0].mxu0
    %v3115 = vadd.f32 %v2035, %v3114
    %3116 = vdwg.mxu0
    %3117 = vmatprep.subr.mxu0 %v1471
    %3118 = vmatpush1.msra.mxu0 %v1470
    %3119 = vmatprep.subr.mxu0 %v1487
    %3120 = vmatpush1.msra.mxu0 %v1486
    %3121 = vmatprep.subr.mxu0 %v1503
    %3122 = vmatpush1.msra.mxu0 %v1502
    %3123 = vmatprep.subr.mxu0 %v1519
    %3124 = vmatpush1.msra.mxu0 %v1518
    %3125 = vmatprep.subr.mxu0 %v1535
    %3126 = vmatpush1.msra.mxu0 %v1534
    %3127 = vmatprep.subr.mxu0 %v1551
    %3128 = vmatpush1.msra.mxu0 %v1550
    %3129 = vmatprep.subr.mxu0 %v1567
    %3130 = vmatpush1.msra.mxu0 %v1566
    %3131 = vmatprep.subr.mxu0 %v1583
    %3132 = vmatpush1.msra.mxu0 %v1582
    %3133 = vmatprep.subr.mxu0 %v1599
    %3134 = vmatpush1.msra.mxu0 %v1598
    %3135 = vmatprep.subr.mxu0 %v1615
    %3136 = vmatpush1.msra.mxu0 %v1614
    %3137 = vmatprep.subr.mxu0 %v1631
    %3138 = vmatpush1.msra.mxu0 %v1630
    %3139 = vmatprep.subr.mxu0 %v1647
    %3140 = vmatpush1.msra.mxu0 %v1646
    %3141 = vmatprep.subr.mxu0 %v1663
    %3142 = vmatpush1.msra.mxu0 %v1662
    %3143 = vmatprep.subr.mxu0 %v1679
    %3144 = vmatpush1.msra.mxu0 %v1678
    %3145 = vmatprep.subr.mxu0 %v1695
    %3146 = vmatpush1.msra.mxu0 %v1694
    %3147 = vmatprep.subr.mxu0 %v1711
    %3148 = vmatpush1.msra.mxu0 %v1710
    %3149 = vmatprep.subr.mxu0 %v1727
    %3150 = vmatpush1.msra.mxu0 %v1726
    %3151 = vmatprep.subr.mxu0 %v1743
    %3152 = vmatpush1.msra.mxu0 %v1742
    %3153 = vmatprep.subr.mxu0 %v1759
    %3154 = vmatpush1.msra.mxu0 %v1758
    %3155 = vmatprep.subr.mxu0 %v1775
    %3156 = vmatpush1.msra.mxu0 %v1774
    %3157 = vmatprep.subr.mxu0 %v1791
    %3158 = vmatpush1.msra.mxu0 %v1790
    %3159 = vmatprep.subr.mxu0 %v1807
    %3160 = vmatpush1.msra.mxu0 %v1806
    %3161 = vmatprep.subr.mxu0 %v1823
    %3162 = vmatpush1.msra.mxu0 %v1822
    %3163 = vmatprep.subr.mxu0 %v1839
    %3164 = vmatpush1.msra.mxu0 %v1838
    %3165 = vmatprep.subr.mxu0 %v1855
    %3166 = vmatpush1.msra.mxu0 %v1854
    %3167 = vmatprep.subr.mxu0 %v1871
    %3168 = vmatpush1.msra.mxu0 %v1870
    %3169 = vmatprep.subr.mxu0 %v1887
    %3170 = vmatpush1.msra.mxu0 %v1886
    %3171 = vmatprep.subr.mxu0 %v1903
    %3172 = vmatpush1.msra.mxu0 %v1902
    %3173 = vmatprep.subr.mxu0 %v1919
    %3174 = vmatpush1.msra.mxu0 %v1918
    %3175 = vmatprep.subr.mxu0 %v1935
    %3176 = vmatpush1.msra.mxu0 %v1934
    %3177 = vmatprep.subr.mxu0 %v1951
    %3178 = vmatpush1.msra.mxu0 %v1950
    %3179 = vmatprep.subr.mxu0 %v1967
    %3180 = vmatpush1.msra.mxu0 %v1966
    %3181 = vmatprep.mubr.f32.mxu0 %v943
    %3182 = vmatmul.mubr.f32.gmra.mrb[0].mxu0 %v942
    %v3183 = vpop.f32.mrb[0].mxu0
    %v3184 = vadd.f32 %v3113, %v3183
    %v3185 = vpop.f32.mrb[0].mxu0
    %v3186 = vadd.f32 %v3115, %v3185
    %3187 = vdwg.mxu0
    %v3188 = vmax.f32 %v2190, 0.0
    %v3189 = vmax.f32 %v2192, 0.0
    %v3190 = vmax.f32 %v2332, 0.0
    %v3191 = vmax.f32 %v2334, 0.0
    %v3192 = vmax.f32 %v2474, 0.0
    %v3193 = vmax.f32 %v2476, 0.0
    %v3194 = vmax.f32 %v2616, 0.0
    %v3195 = vmax.f32 %v2618, 0.0
    %v3196 = vmax.f32 %v2758, 0.0
    %v3197 = vmax.f32 %v2760, 0.0
    %v3198 = vmax.f32 %v2900, 0.0
    %v3199 = vmax.f32 %v2902, 0.0
    %v3200 = vmax.f32 %v3042, 0.0
    %v3201 = vmax.f32 %v3044, 0.0
    %v3202 = vmax.f32 %v3184, 0.0
    %v3203 = vmax.f32 %v3186, 0.0
    %v3204 = vld [vmem:[#allocation14] sm:$0xff]
    %v3205 = vld [vmem:[#allocation14 + $0x8] sm:$0xff]
    %v3206 = vld [vmem:[#allocation14 + $0x10] sm:$0xff]
    %v3207 = vld [vmem:[#allocation14 + $0x18] sm:$0xff]
    %v3208 = vld [vmem:[#allocation14 + $0x20] sm:$0xff]
    %v3209 = vld [vmem:[#allocation14 + $0x28] sm:$0xff]
    %v3210 = vld [vmem:[#allocation14 + $0x30] sm:$0xff]
    %v3211 = vld [vmem:[#allocation14 + $0x38] sm:$0xff]
    %v3212 = vld [vmem:[#allocation14 + $0x40] sm:$0xff]
    %v3213 = vld [vmem:[#allocation14 + $0x48] sm:$0xff]
    %v3214 = vld [vmem:[#allocation14 + $0x50] sm:$0xff]
    %v3215 = vld [vmem:[#allocation14 + $0x58] sm:$0xff]
    %v3216 = vld [vmem:[#allocation14 + $0x60] sm:$0xff]
    %v3217 = vld [vmem:[#allocation14 + $0x68] sm:$0xff]
    %v3218 = vld [vmem:[#allocation14 + $0x70] sm:$0xff]
    %v3219 = vld [vmem:[#allocation14 + $0x78] sm:$0xff]
    %v3220 = vld [vmem:[#allocation14 + $0x80] sm:$0xff]
    %v3221 = vld [vmem:[#allocation14 + $0x88] sm:$0xff]
    %v3222 = vld [vmem:[#allocation14 + $0x90] sm:$0xff]
    %v3223 = vld [vmem:[#allocation14 + $0x98] sm:$0xff]
    %v3224 = vld [vmem:[#allocation14 + $0xa0] sm:$0xff]
    %v3225 = vld [vmem:[#allocation14 + $0xa8] sm:$0xff]
    %v3226 = vld [vmem:[#allocation14 + $0xb0] sm:$0xff]
    %v3227 = vld [vmem:[#allocation14 + $0xb8] sm:$0xff]
    %v3228 = vld [vmem:[#allocation14 + $0xc0] sm:$0xff]
    %v3229 = vld [vmem:[#allocation14 + $0xc8] sm:$0xff]
    %v3230 = vld [vmem:[#allocation14 + $0xd0] sm:$0xff]
    %v3231 = vld [vmem:[#allocation14 + $0xd8] sm:$0xff]
    %v3232 = vld [vmem:[#allocation14 + $0xe0] sm:$0xff]
    %v3233 = vld [vmem:[#allocation14 + $0xe8] sm:$0xff]
    %v3234 = vld [vmem:[#allocation14 + $0xf0] sm:$0xff]
    %v3235 = vld [vmem:[#allocation14 + $0xf8] sm:$0xff]
    %v3236 = vld [vmem:[#allocation14 + $0x100] sm:$0xff]
    %v3237 = vld [vmem:[#allocation14 + $0x108] sm:$0xff]
    %v3238 = vld [vmem:[#allocation14 + $0x110] sm:$0xff]
    %v3239 = vld [vmem:[#allocation14 + $0x118] sm:$0xff]
    %v3240 = vld [vmem:[#allocation14 + $0x120] sm:$0xff]
    %v3241 = vld [vmem:[#allocation14 + $0x128] sm:$0xff]
    %v3242 = vld [vmem:[#allocation14 + $0x130] sm:$0xff]
    %v3243 = vld [vmem:[#allocation14 + $0x138] sm:$0xff]
    %v3244 = vld [vmem:[#allocation14 + $0x140] sm:$0xff]
    %v3245 = vld [vmem:[#allocation14 + $0x148] sm:$0xff]
    %v3246 = vld [vmem:[#allocation14 + $0x150] sm:$0xff]
    %v3247 = vld [vmem:[#allocation14 + $0x158] sm:$0xff]
    %v3248 = vld [vmem:[#allocation14 + $0x160] sm:$0xff]
    %v3249 = vld [vmem:[#allocation14 + $0x168] sm:$0xff]
    %v3250 = vld [vmem:[#allocation14 + $0x170] sm:$0xff]
    %v3251 = vld [vmem:[#allocation14 + $0x178] sm:$0xff]
    %v3252 = vld [vmem:[#allocation14 + $0x180] sm:$0xff]
    %v3253 = vld [vmem:[#allocation14 + $0x188] sm:$0xff]
    %v3254 = vld [vmem:[#allocation14 + $0x190] sm:$0xff]
    %v3255 = vld [vmem:[#allocation14 + $0x198] sm:$0xff]
    %v3256 = vld [vmem:[#allocation14 + $0x1a0] sm:$0xff]
    %v3257 = vld [vmem:[#allocation14 + $0x1a8] sm:$0xff]
    %v3258 = vld [vmem:[#allocation14 + $0x1b0] sm:$0xff]
    %v3259 = vld [vmem:[#allocation14 + $0x1b8] sm:$0xff]
    %v3260 = vld [vmem:[#allocation14 + $0x1c0] sm:$0xff]
    %v3261 = vld [vmem:[#allocation14 + $0x1c8] sm:$0xff]
    %v3262 = vld [vmem:[#allocation14 + $0x1d0] sm:$0xff]
    %v3263 = vld [vmem:[#allocation14 + $0x1d8] sm:$0xff]
    %v3264 = vld [vmem:[#allocation14 + $0x1e0] sm:$0xff]
    %v3265 = vld [vmem:[#allocation14 + $0x1e8] sm:$0xff]
    %v3266 = vld [vmem:[#allocation14 + $0x1f0] sm:$0xff]
    %v3267 = vld [vmem:[#allocation14 + $0x1f8] sm:$0xff]
    %v3268 = vld [vmem:[#allocation14 + $0x200] sm:$0xff]
    %v3269 = vld [vmem:[#allocation14 + $0x208] sm:$0xff]
    %v3270 = vld [vmem:[#allocation14 + $0x210] sm:$0xff]
    %v3271 = vld [vmem:[#allocation14 + $0x218] sm:$0xff]
    %v3272 = vld [vmem:[#allocation14 + $0x220] sm:$0xff]
    %v3273 = vld [vmem:[#allocation14 + $0x228] sm:$0xff]
    %v3274 = vld [vmem:[#allocation14 + $0x230] sm:$0xff]
    %v3275 = vld [vmem:[#allocation14 + $0x238] sm:$0xff]
    %v3276 = vld [vmem:[#allocation14 + $0x240] sm:$0xff]
    %v3277 = vld [vmem:[#allocation14 + $0x248] sm:$0xff]
    %v3278 = vld [vmem:[#allocation14 + $0x250] sm:$0xff]
    %v3279 = vld [vmem:[#allocation14 + $0x258] sm:$0xff]
    %v3280 = vld [vmem:[#allocation14 + $0x260] sm:$0xff]
    %v3281 = vld [vmem:[#allocation14 + $0x268] sm:$0xff]
    %v3282 = vld [vmem:[#allocation14 + $0x270] sm:$0xff]
    %v3283 = vld [vmem:[#allocation14 + $0x278] sm:$0xff]
    %v3284 = vld [vmem:[#allocation14 + $0x280] sm:$0xff]
    %v3285 = vld [vmem:[#allocation14 + $0x288] sm:$0xff]
    %v3286 = vld [vmem:[#allocation14 + $0x290] sm:$0xff]
    %v3287 = vld [vmem:[#allocation14 + $0x298] sm:$0xff]
    %v3288 = vld [vmem:[#allocation14 + $0x2a0] sm:$0xff]
    %v3289 = vld [vmem:[#allocation14 + $0x2a8] sm:$0xff]
    %v3290 = vld [vmem:[#allocation14 + $0x2b0] sm:$0xff]
    %v3291 = vld [vmem:[#allocation14 + $0x2b8] sm:$0xff]
    %v3292 = vld [vmem:[#allocation14 + $0x2c0] sm:$0xff]
    %v3293 = vld [vmem:[#allocation14 + $0x2c8] sm:$0xff]
    %v3294 = vld [vmem:[#allocation14 + $0x2d0] sm:$0xff]
    %v3295 = vld [vmem:[#allocation14 + $0x2d8] sm:$0xff]
    %v3296 = vld [vmem:[#allocation14 + $0x2e0] sm:$0xff]
    %v3297 = vld [vmem:[#allocation14 + $0x2e8] sm:$0xff]
    %v3298 = vld [vmem:[#allocation14 + $0x2f0] sm:$0xff]
    %v3299 = vld [vmem:[#allocation14 + $0x2f8] sm:$0xff]
    %v3300 = vld [vmem:[#allocation14 + $0x300] sm:$0xff]
    %v3301 = vld [vmem:[#allocation14 + $0x308] sm:$0xff]
    %v3302 = vld [vmem:[#allocation14 + $0x310] sm:$0xff]
    %v3303 = vld [vmem:[#allocation14 + $0x318] sm:$0xff]
    %v3304 = vld [vmem:[#allocation14 + $0x320] sm:$0xff]
    %v3305 = vld [vmem:[#allocation14 + $0x328] sm:$0xff]
    %v3306 = vld [vmem:[#allocation14 + $0x330] sm:$0xff]
    %v3307 = vld [vmem:[#allocation14 + $0x338] sm:$0xff]
    %v3308 = vld [vmem:[#allocation14 + $0x340] sm:$0xff]
    %v3309 = vld [vmem:[#allocation14 + $0x348] sm:$0xff]
    %v3310 = vld [vmem:[#allocation14 + $0x350] sm:$0xff]
    %v3311 = vld [vmem:[#allocation14 + $0x358] sm:$0xff]
    %v3312 = vld [vmem:[#allocation14 + $0x360] sm:$0xff]
    %v3313 = vld [vmem:[#allocation14 + $0x368] sm:$0xff]
    %v3314 = vld [vmem:[#allocation14 + $0x370] sm:$0xff]
    %v3315 = vld [vmem:[#allocation14 + $0x378] sm:$0xff]
    %v3316 = vld [vmem:[#allocation14 + $0x380] sm:$0xff]
    %v3317 = vld [vmem:[#allocation14 + $0x388] sm:$0xff]
    %v3318 = vld [vmem:[#allocation14 + $0x390] sm:$0xff]
    %v3319 = vld [vmem:[#allocation14 + $0x398] sm:$0xff]
    %v3320 = vld [vmem:[#allocation14 + $0x3a0] sm:$0xff]
    %v3321 = vld [vmem:[#allocation14 + $0x3a8] sm:$0xff]
    %v3322 = vld [vmem:[#allocation14 + $0x3b0] sm:$0xff]
    %v3323 = vld [vmem:[#allocation14 + $0x3b8] sm:$0xff]
    %v3324 = vld [vmem:[#allocation14 + $0x3c0] sm:$0xff]
    %v3325 = vld [vmem:[#allocation14 + $0x3c8] sm:$0xff]
    %v3326 = vld [vmem:[#allocation14 + $0x3d0] sm:$0xff]
    %v3327 = vld [vmem:[#allocation14 + $0x3d8] sm:$0xff]
    %v3328 = vld [vmem:[#allocation14 + $0x3e0] sm:$0xff]
    %v3329 = vld [vmem:[#allocation14 + $0x3e8] sm:$0xff]
    %v3330 = vld [vmem:[#allocation14 + $0x3f0] sm:$0xff]
    %v3331 = vld [vmem:[#allocation14 + $0x3f8] sm:$0xff]
    %v3332 = vld [vmem:[#allocation14 + $0x400] sm:$0xff]
    %v3333 = vld [vmem:[#allocation14 + $0x408] sm:$0xff]
    %v3334 = vld [vmem:[#allocation14 + $0x410] sm:$0xff]
    %v3335 = vld [vmem:[#allocation14 + $0x418] sm:$0xff]
    %v3336 = vld [vmem:[#allocation14 + $0x420] sm:$0xff]
    %v3337 = vld [vmem:[#allocation14 + $0x428] sm:$0xff]
    %v3338 = vld [vmem:[#allocation14 + $0x430] sm:$0xff]
    %v3339 = vld [vmem:[#allocation14 + $0x438] sm:$0xff]
    %v3340 = vld [vmem:[#allocation14 + $0x440] sm:$0xff]
    %v3341 = vld [vmem:[#allocation14 + $0x448] sm:$0xff]
    %v3342 = vld [vmem:[#allocation14 + $0x450] sm:$0xff]
    %v3343 = vld [vmem:[#allocation14 + $0x458] sm:$0xff]
    %v3344 = vld [vmem:[#allocation14 + $0x460] sm:$0xff]
    %v3345 = vld [vmem:[#allocation14 + $0x468] sm:$0xff]
    %v3346 = vld [vmem:[#allocation14 + $0x470] sm:$0xff]
    %v3347 = vld [vmem:[#allocation14 + $0x478] sm:$0xff]
    %v3348 = vld [vmem:[#allocation14 + $0x480] sm:$0xff]
    %v3349 = vld [vmem:[#allocation14 + $0x488] sm:$0xff]
    %v3350 = vld [vmem:[#allocation14 + $0x490] sm:$0xff]
    %v3351 = vld [vmem:[#allocation14 + $0x498] sm:$0xff]
    %v3352 = vld [vmem:[#allocation14 + $0x4a0] sm:$0xff]
    %v3353 = vld [vmem:[#allocation14 + $0x4a8] sm:$0xff]
    %v3354 = vld [vmem:[#allocation14 + $0x4b0] sm:$0xff]
    %v3355 = vld [vmem:[#allocation14 + $0x4b8] sm:$0xff]
    %v3356 = vld [vmem:[#allocation14 + $0x4c0] sm:$0xff]
    %v3357 = vld [vmem:[#allocation14 + $0x4c8] sm:$0xff]
    %v3358 = vld [vmem:[#allocation14 + $0x4d0] sm:$0xff]
    %v3359 = vld [vmem:[#allocation14 + $0x4d8] sm:$0xff]
    %v3360 = vld [vmem:[#allocation14 + $0x4e0] sm:$0xff]
    %v3361 = vld [vmem:[#allocation14 + $0x4e8] sm:$0xff]
    %v3362 = vld [vmem:[#allocation14 + $0x4f0] sm:$0xff]
    %v3363 = vld [vmem:[#allocation14 + $0x4f8] sm:$0xff]
    %v3364 = vld [vmem:[#allocation14 + $0x500] sm:$0xff]
    %v3365 = vld [vmem:[#allocation14 + $0x508] sm:$0xff]
    %v3366 = vld [vmem:[#allocation14 + $0x510] sm:$0xff]
    %v3367 = vld [vmem:[#allocation14 + $0x518] sm:$0xff]
    %v3368 = vld [vmem:[#allocation14 + $0x520] sm:$0xff]
    %v3369 = vld [vmem:[#allocation14 + $0x528] sm:$0xff]
    %v3370 = vld [vmem:[#allocation14 + $0x530] sm:$0xff]
    %v3371 = vld [vmem:[#allocation14 + $0x538] sm:$0xff]
    %v3372 = vld [vmem:[#allocation14 + $0x540] sm:$0xff]
    %v3373 = vld [vmem:[#allocation14 + $0x548] sm:$0xff]
    %v3374 = vld [vmem:[#allocation14 + $0x550] sm:$0xff]
    %v3375 = vld [vmem:[#allocation14 + $0x558] sm:$0xff]
    %v3376 = vld [vmem:[#allocation14 + $0x560] sm:$0xff]
    %v3377 = vld [vmem:[#allocation14 + $0x568] sm:$0xff]
    %v3378 = vld [vmem:[#allocation14 + $0x570] sm:$0xff]
    %v3379 = vld [vmem:[#allocation14 + $0x578] sm:$0xff]
    %v3380 = vld [vmem:[#allocation14 + $0x580] sm:$0xff]
    %v3381 = vld [vmem:[#allocation14 + $0x588] sm:$0xff]
    %v3382 = vld [vmem:[#allocation14 + $0x590] sm:$0xff]
    %v3383 = vld [vmem:[#allocation14 + $0x598] sm:$0xff]
    %v3384 = vld [vmem:[#allocation14 + $0x5a0] sm:$0xff]
    %v3385 = vld [vmem:[#allocation14 + $0x5a8] sm:$0xff]
    %v3386 = vld [vmem:[#allocation14 + $0x5b0] sm:$0xff]
    %v3387 = vld [vmem:[#allocation14 + $0x5b8] sm:$0xff]
    %v3388 = vld [vmem:[#allocation14 + $0x5c0] sm:$0xff]
    %v3389 = vld [vmem:[#allocation14 + $0x5c8] sm:$0xff]
    %v3390 = vld [vmem:[#allocation14 + $0x5d0] sm:$0xff]
    %v3391 = vld [vmem:[#allocation14 + $0x5d8] sm:$0xff]
    %v3392 = vld [vmem:[#allocation14 + $0x5e0] sm:$0xff]
    %v3393 = vld [vmem:[#allocation14 + $0x5e8] sm:$0xff]
    %v3394 = vld [vmem:[#allocation14 + $0x5f0] sm:$0xff]
    %v3395 = vld [vmem:[#allocation14 + $0x5f8] sm:$0xff]
    %v3396 = vld [vmem:[#allocation14 + $0x600] sm:$0xff]
    %v3397 = vld [vmem:[#allocation14 + $0x608] sm:$0xff]
    %v3398 = vld [vmem:[#allocation14 + $0x610] sm:$0xff]
    %v3399 = vld [vmem:[#allocation14 + $0x618] sm:$0xff]
    %v3400 = vld [vmem:[#allocation14 + $0x620] sm:$0xff]
    %v3401 = vld [vmem:[#allocation14 + $0x628] sm:$0xff]
    %v3402 = vld [vmem:[#allocation14 + $0x630] sm:$0xff]
    %v3403 = vld [vmem:[#allocation14 + $0x638] sm:$0xff]
    %v3404 = vld [vmem:[#allocation14 + $0x640] sm:$0xff]
    %v3405 = vld [vmem:[#allocation14 + $0x648] sm:$0xff]
    %v3406 = vld [vmem:[#allocation14 + $0x650] sm:$0xff]
    %v3407 = vld [vmem:[#allocation14 + $0x658] sm:$0xff]
    %v3408 = vld [vmem:[#allocation14 + $0x660] sm:$0xff]
    %v3409 = vld [vmem:[#allocation14 + $0x668] sm:$0xff]
    %v3410 = vld [vmem:[#allocation14 + $0x670] sm:$0xff]
    %v3411 = vld [vmem:[#allocation14 + $0x678] sm:$0xff]
    %v3412 = vld [vmem:[#allocation14 + $0x680] sm:$0xff]
    %v3413 = vld [vmem:[#allocation14 + $0x688] sm:$0xff]
    %v3414 = vld [vmem:[#allocation14 + $0x690] sm:$0xff]
    %v3415 = vld [vmem:[#allocation14 + $0x698] sm:$0xff]
    %v3416 = vld [vmem:[#allocation14 + $0x6a0] sm:$0xff]
    %v3417 = vld [vmem:[#allocation14 + $0x6a8] sm:$0xff]
    %v3418 = vld [vmem:[#allocation14 + $0x6b0] sm:$0xff]
    %v3419 = vld [vmem:[#allocation14 + $0x6b8] sm:$0xff]
    %v3420 = vld [vmem:[#allocation14 + $0x6c0] sm:$0xff]
    %v3421 = vld [vmem:[#allocation14 + $0x6c8] sm:$0xff]
    %v3422 = vld [vmem:[#allocation14 + $0x6d0] sm:$0xff]
    %v3423 = vld [vmem:[#allocation14 + $0x6d8] sm:$0xff]
    %v3424 = vld [vmem:[#allocation14 + $0x6e0] sm:$0xff]
    %v3425 = vld [vmem:[#allocation14 + $0x6e8] sm:$0xff]
    %v3426 = vld [vmem:[#allocation14 + $0x6f0] sm:$0xff]
    %v3427 = vld [vmem:[#allocation14 + $0x6f8] sm:$0xff]
    %v3428 = vld [vmem:[#allocation14 + $0x700] sm:$0xff]
    %v3429 = vld [vmem:[#allocation14 + $0x708] sm:$0xff]
    %v3430 = vld [vmem:[#allocation14 + $0x710] sm:$0xff]
    %v3431 = vld [vmem:[#allocation14 + $0x718] sm:$0xff]
    %v3432 = vld [vmem:[#allocation14 + $0x720] sm:$0xff]
    %v3433 = vld [vmem:[#allocation14 + $0x728] sm:$0xff]
    %v3434 = vld [vmem:[#allocation14 + $0x730] sm:$0xff]
    %v3435 = vld [vmem:[#allocation14 + $0x738] sm:$0xff]
    %v3436 = vld [vmem:[#allocation14 + $0x740] sm:$0xff]
    %v3437 = vld [vmem:[#allocation14 + $0x748] sm:$0xff]
    %v3438 = vld [vmem:[#allocation14 + $0x750] sm:$0xff]
    %v3439 = vld [vmem:[#allocation14 + $0x758] sm:$0xff]
    %v3440 = vld [vmem:[#allocation14 + $0x760] sm:$0xff]
    %v3441 = vld [vmem:[#allocation14 + $0x768] sm:$0xff]
    %v3442 = vld [vmem:[#allocation14 + $0x770] sm:$0xff]
    %v3443 = vld [vmem:[#allocation14 + $0x778] sm:$0xff]
    %v3444 = vld [vmem:[#allocation14 + $0x780] sm:$0xff]
    %v3445 = vld [vmem:[#allocation14 + $0x788] sm:$0xff]
    %v3446 = vld [vmem:[#allocation14 + $0x790] sm:$0xff]
    %v3447 = vld [vmem:[#allocation14 + $0x798] sm:$0xff]
    %v3448 = vld [vmem:[#allocation14 + $0x7a0] sm:$0xff]
    %v3449 = vld [vmem:[#allocation14 + $0x7a8] sm:$0xff]
    %v3450 = vld [vmem:[#allocation14 + $0x7b0] sm:$0xff]
    %v3451 = vld [vmem:[#allocation14 + $0x7b8] sm:$0xff]
    %v3452 = vld [vmem:[#allocation14 + $0x7c0] sm:$0xff]
    %v3453 = vld [vmem:[#allocation14 + $0x7c8] sm:$0xff]
    %v3454 = vld [vmem:[#allocation14 + $0x7d0] sm:$0xff]
    %v3455 = vld [vmem:[#allocation14 + $0x7d8] sm:$0xff]
    %v3456 = vld [vmem:[#allocation14 + $0x7e0] sm:$0xff]
    %v3457 = vld [vmem:[#allocation14 + $0x7e8] sm:$0xff]
    %v3458 = vld [vmem:[#allocation14 + $0x7f0] sm:$0xff]
    %v3459 = vld [vmem:[#allocation14 + $0x7f8] sm:$0xff]
    %v3460 = vld [vmem:[#allocation16] sm:$0x1]
    %v3462 = vlaneseq
    %v3463 = vshrl.u32 %v3462, 7
    %v3464 = vsub.s32 0, %v3463
    %v3465 = vrot.slane %v3460, %v3464
    %3467 = vmatprep.subr.mxu0 0.0
    %3468 = vmatpush1.msra.mxu0 %v3204
    %3469 = vmatprep.subr.mxu0 0.0
    %3470 = vmatpush1.msra.mxu0 %v3205
    %3471 = vmatprep.subr.mxu0 0.0
    %3472 = vmatpush1.msra.mxu0 %v3206
    %3473 = vmatprep.subr.mxu0 0.0
    %3474 = vmatpush1.msra.mxu0 %v3207
    %3475 = vmatprep.subr.mxu0 0.0
    %3476 = vmatpush1.msra.mxu0 %v3208
    %3477 = vmatprep.subr.mxu0 0.0
    %3478 = vmatpush1.msra.mxu0 %v3209
    %3479 = vmatprep.subr.mxu0 0.0
    %3480 = vmatpush1.msra.mxu0 %v3210
    %3481 = vmatprep.subr.mxu0 0.0
    %3482 = vmatpush1.msra.mxu0 %v3211
    %3483 = vmatprep.subr.mxu0 0.0
    %3484 = vmatpush1.msra.mxu0 %v3212
    %3485 = vmatprep.subr.mxu0 0.0
    %3486 = vmatpush1.msra.mxu0 %v3213
    %3487 = vmatprep.subr.mxu0 0.0
    %3488 = vmatpush1.msra.mxu0 %v3214
    %3489 = vmatprep.subr.mxu0 0.0
    %3490 = vmatpush1.msra.mxu0 %v3215
    %3491 = vmatprep.subr.mxu0 0.0
    %3492 = vmatpush1.msra.mxu0 %v3216
    %3493 = vmatprep.subr.mxu0 0.0
    %3494 = vmatpush1.msra.mxu0 %v3217
    %3495 = vmatprep.subr.mxu0 0.0
    %3496 = vmatpush1.msra.mxu0 %v3218
    %3497 = vmatprep.subr.mxu0 0.0
    %3498 = vmatpush1.msra.mxu0 %v3219
    %3499 = vmatprep.subr.mxu0 0.0
    %3500 = vmatpush1.msra.mxu0 %v3220
    %3501 = vmatprep.subr.mxu0 0.0
    %3502 = vmatpush1.msra.mxu0 %v3221
    %3503 = vmatprep.subr.mxu0 0.0
    %3504 = vmatpush1.msra.mxu0 %v3222
    %3505 = vmatprep.subr.mxu0 0.0
    %3506 = vmatpush1.msra.mxu0 %v3223
    %3507 = vmatprep.subr.mxu0 0.0
    %3508 = vmatpush1.msra.mxu0 %v3224
    %3509 = vmatprep.subr.mxu0 0.0
    %3510 = vmatpush1.msra.mxu0 %v3225
    %3511 = vmatprep.subr.mxu0 0.0
    %3512 = vmatpush1.msra.mxu0 %v3226
    %3513 = vmatprep.subr.mxu0 0.0
    %3514 = vmatpush1.msra.mxu0 %v3227
    %3515 = vmatprep.subr.mxu0 0.0
    %3516 = vmatpush1.msra.mxu0 %v3228
    %3517 = vmatprep.subr.mxu0 0.0
    %3518 = vmatpush1.msra.mxu0 %v3229
    %3519 = vmatprep.subr.mxu0 0.0
    %3520 = vmatpush1.msra.mxu0 %v3230
    %3521 = vmatprep.subr.mxu0 0.0
    %3522 = vmatpush1.msra.mxu0 %v3231
    %3523 = vmatprep.subr.mxu0 0.0
    %3524 = vmatpush1.msra.mxu0 %v3232
    %3525 = vmatprep.subr.mxu0 0.0
    %3526 = vmatpush1.msra.mxu0 %v3233
    %3527 = vmatprep.subr.mxu0 0.0
    %3528 = vmatpush1.msra.mxu0 %v3234
    %3529 = vmatprep.subr.mxu0 0.0
    %3530 = vmatpush1.msra.mxu0 %v3235
    %3531 = vmatprep.mubr.f32.mxu0 %v3189
    %3532 = vmatmul.mubr.f32.gmra.mrb[0].mxu0 %v3188
    %v3533 = vpop.f32.mrb[0].mxu0
    %v3534 = vadd.f32 %v3465, %v3533
    %v3535 = vpop.f32.mrb[0].mxu0
    %3536 = vdwg.mxu0
    %3537 = vmatprep.subr.mxu0 0.0
    %3538 = vmatpush1.msra.mxu0 %v3236
    %3539 = vmatprep.subr.mxu0 0.0
    %3540 = vmatpush1.msra.mxu0 %v3237
    %3541 = vmatprep.subr.mxu0 0.0
    %3542 = vmatpush1.msra.mxu0 %v3238
    %3543 = vmatprep.subr.mxu0 0.0
    %3544 = vmatpush1.msra.mxu0 %v3239
    %3545 = vmatprep.subr.mxu0 0.0
    %3546 = vmatpush1.msra.mxu0 %v3240
    %3547 = vmatprep.subr.mxu0 0.0
    %3548 = vmatpush1.msra.mxu0 %v3241
    %3549 = vmatprep.subr.mxu0 0.0
    %3550 = vmatpush1.msra.mxu0 %v3242
    %3551 = vmatprep.subr.mxu0 0.0
    %3552 = vmatpush1.msra.mxu0 %v3243
    %3553 = vmatprep.subr.mxu0 0.0
    %3554 = vmatpush1.msra.mxu0 %v3244
    %3555 = vmatprep.subr.mxu0 0.0
    %3556 = vmatpush1.msra.mxu0 %v3245
    %3557 = vmatprep.subr.mxu0 0.0
    %3558 = vmatpush1.msra.mxu0 %v3246
    %3559 = vmatprep.subr.mxu0 0.0
    %3560 = vmatpush1.msra.mxu0 %v3247
    %3561 = vmatprep.subr.mxu0 0.0
    %3562 = vmatpush1.msra.mxu0 %v3248
    %3563 = vmatprep.subr.mxu0 0.0
    %3564 = vmatpush1.msra.mxu0 %v3249
    %3565 = vmatprep.subr.mxu0 0.0
    %3566 = vmatpush1.msra.mxu0 %v3250
    %3567 = vmatprep.subr.mxu0 0.0
    %3568 = vmatpush1.msra.mxu0 %v3251
    %3569 = vmatprep.subr.mxu0 0.0
    %3570 = vmatpush1.msra.mxu0 %v3252
    %3571 = vmatprep.subr.mxu0 0.0
    %3572 = vmatpush1.msra.mxu0 %v3253
    %3573 = vmatprep.subr.mxu0 0.0
    %3574 = vmatpush1.msra.mxu0 %v3254
    %3575 = vmatprep.subr.mxu0 0.0
    %3576 = vmatpush1.msra.mxu0 %v3255
    %3577 = vmatprep.subr.mxu0 0.0
    %3578 = vmatpush1.msra.mxu0 %v3256
    %3579 = vmatprep.subr.mxu0 0.0
    %3580 = vmatpush1.msra.mxu0 %v3257
    %3581 = vmatprep.subr.mxu0 0.0
    %3582 = vmatpush1.msra.mxu0 %v3258
    %3583 = vmatprep.subr.mxu0 0.0
    %3584 = vmatpush1.msra.mxu0 %v3259
    %3585 = vmatprep.subr.mxu0 0.0
    %3586 = vmatpush1.msra.mxu0 %v3260
    %3587 = vmatprep.subr.mxu0 0.0
    %3588 = vmatpush1.msra.mxu0 %v3261
    %3589 = vmatprep.subr.mxu0 0.0
    %3590 = vmatpush1.msra.mxu0 %v3262
    %3591 = vmatprep.subr.mxu0 0.0
    %3592 = vmatpush1.msra.mxu0 %v3263
    %3593 = vmatprep.subr.mxu0 0.0
    %3594 = vmatpush1.msra.mxu0 %v3264
    %3595 = vmatprep.subr.mxu0 0.0
    %3596 = vmatpush1.msra.mxu0 %v3265
    %3597 = vmatprep.subr.mxu0 0.0
    %3598 = vmatpush1.msra.mxu0 %v3266
    %3599 = vmatprep.subr.mxu0 0.0
    %3600 = vmatpush1.msra.mxu0 %v3267
    %3601 = vmatprep.mubr.f32.mxu0 %v3191
    %3602 = vmatmul.mubr.f32.gmra.mrb[0].mxu0 %v3190
    %v3603 = vpop.f32.mrb[0].mxu0
    %v3604 = vadd.f32 %v3534, %v3603
    %v3605 = vpop.f32.mrb[0].mxu0
    %3606 = vdwg.mxu0
    %3607 = vmatprep.subr.mxu0 0.0
    %3608 = vmatpush1.msra.mxu0 %v3268
    %3609 = vmatprep.subr.mxu0 0.0
    %3610 = vmatpush1.msra.mxu0 %v3269
    %3611 = vmatprep.subr.mxu0 0.0
    %3612 = vmatpush1.msra.mxu0 %v3270
    %3613 = vmatprep.subr.mxu0 0.0
    %3614 = vmatpush1.msra.mxu0 %v3271
    %3615 = vmatprep.subr.mxu0 0.0
    %3616 = vmatpush1.msra.mxu0 %v3272
    %3617 = vmatprep.subr.mxu0 0.0
    %3618 = vmatpush1.msra.mxu0 %v3273
    %3619 = vmatprep.subr.mxu0 0.0
    %3620 = vmatpush1.msra.mxu0 %v3274
    %3621 = vmatprep.subr.mxu0 0.0
    %3622 = vmatpush1.msra.mxu0 %v3275
    %3623 = vmatprep.subr.mxu0 0.0
    %3624 = vmatpush1.msra.mxu0 %v3276
    %3625 = vmatprep.subr.mxu0 0.0
    %3626 = vmatpush1.msra.mxu0 %v3277
    %3627 = vmatprep.subr.mxu0 0.0
    %3628 = vmatpush1.msra.mxu0 %v3278
    %3629 = vmatprep.subr.mxu0 0.0
    %3630 = vmatpush1.msra.mxu0 %v3279
    %3631 = vmatprep.subr.mxu0 0.0
    %3632 = vmatpush1.msra.mxu0 %v3280
    %3633 = vmatprep.subr.mxu0 0.0
    %3634 = vmatpush1.msra.mxu0 %v3281
    %3635 = vmatprep.subr.mxu0 0.0
    %3636 = vmatpush1.msra.mxu0 %v3282
    %3637 = vmatprep.subr.mxu0 0.0
    %3638 = vmatpush1.msra.mxu0 %v3283
    %3639 = vmatprep.subr.mxu0 0.0
    %3640 = vmatpush1.msra.mxu0 %v3284
    %3641 = vmatprep.subr.mxu0 0.0
    %3642 = vmatpush1.msra.mxu0 %v3285
    %3643 = vmatprep.subr.mxu0 0.0
    %3644 = vmatpush1.msra.mxu0 %v3286
    %3645 = vmatprep.subr.mxu0 0.0
    %3646 = vmatpush1.msra.mxu0 %v3287
    %3647 = vmatprep.subr.mxu0 0.0
    %3648 = vmatpush1.msra.mxu0 %v3288
    %3649 = vmatprep.subr.mxu0 0.0
    %3650 = vmatpush1.msra.mxu0 %v3289
    %3651 = vmatprep.subr.mxu0 0.0
    %3652 = vmatpush1.msra.mxu0 %v3290
    %3653 = vmatprep.subr.mxu0 0.0
    %3654 = vmatpush1.msra.mxu0 %v3291
    %3655 = vmatprep.subr.mxu0 0.0
    %3656 = vmatpush1.msra.mxu0 %v3292
    %3657 = vmatprep.subr.mxu0 0.0
    %3658 = vmatpush1.msra.mxu0 %v3293
    %3659 = vmatprep.subr.mxu0 0.0
    %3660 = vmatpush1.msra.mxu0 %v3294
    %3661 = vmatprep.subr.mxu0 0.0
    %3662 = vmatpush1.msra.mxu0 %v3295
    %3663 = vmatprep.subr.mxu0 0.0
    %3664 = vmatpush1.msra.mxu0 %v3296
    %3665 = vmatprep.subr.mxu0 0.0
    %3666 = vmatpush1.msra.mxu0 %v3297
    %3667 = vmatprep.subr.mxu0 0.0
    %3668 = vmatpush1.msra.mxu0 %v3298
    %3669 = vmatprep.subr.mxu0 0.0
    %3670 = vmatpush1.msra.mxu0 %v3299
    %3671 = vmatprep.mubr.f32.mxu0 %v3193
    %3672 = vmatmul.mubr.f32.gmra.mrb[0].mxu0 %v3192
    %v3673 = vpop.f32.mrb[0].mxu0
    %v3674 = vadd.f32 %v3604, %v3673
    %v3675 = vpop.f32.mrb[0].mxu0
    %3676 = vdwg.mxu0
    %3677 = vmatprep.subr.mxu0 0.0
    %3678 = vmatpush1.msra.mxu0 %v3300
    %3679 = vmatprep.subr.mxu0 0.0
    %3680 = vmatpush1.msra.mxu0 %v3301
    %3681 = vmatprep.subr.mxu0 0.0
    %3682 = vmatpush1.msra.mxu0 %v3302
    %3683 = vmatprep.subr.mxu0 0.0
    %3684 = vmatpush1.msra.mxu0 %v3303
    %3685 = vmatprep.subr.mxu0 0.0
    %3686 = vmatpush1.msra.mxu0 %v3304
    %3687 = vmatprep.subr.mxu0 0.0
    %3688 = vmatpush1.msra.mxu0 %v3305
    %3689 = vmatprep.subr.mxu0 0.0
    %3690 = vmatpush1.msra.mxu0 %v3306
    %3691 = vmatprep.subr.mxu0 0.0
    %3692 = vmatpush1.msra.mxu0 %v3307
    %3693 = vmatprep.subr.mxu0 0.0
    %3694 = vmatpush1.msra.mxu0 %v3308
    %3695 = vmatprep.subr.mxu0 0.0
    %3696 = vmatpush1.msra.mxu0 %v3309
    %3697 = vmatprep.subr.mxu0 0.0
    %3698 = vmatpush1.msra.mxu0 %v3310
    %3699 = vmatprep.subr.mxu0 0.0
    %3700 = vmatpush1.msra.mxu0 %v3311
    %3701 = vmatprep.subr.mxu0 0.0
    %3702 = vmatpush1.msra.mxu0 %v3312
    %3703 = vmatprep.subr.mxu0 0.0
    %3704 = vmatpush1.msra.mxu0 %v3313
    %3705 = vmatprep.subr.mxu0 0.0
    %3706 = vmatpush1.msra.mxu0 %v3314
    %3707 = vmatprep.subr.mxu0 0.0
    %3708 = vmatpush1.msra.mxu0 %v3315
    %3709 = vmatprep.subr.mxu0 0.0
    %3710 = vmatpush1.msra.mxu0 %v3316
    %3711 = vmatprep.subr.mxu0 0.0
    %3712 = vmatpush1.msra.mxu0 %v3317
    %3713 = vmatprep.subr.mxu0 0.0
    %3714 = vmatpush1.msra.mxu0 %v3318
    %3715 = vmatprep.subr.mxu0 0.0
    %3716 = vmatpush1.msra.mxu0 %v3319
    %3717 = vmatprep.subr.mxu0 0.0
    %3718 = vmatpush1.msra.mxu0 %v3320
    %3719 = vmatprep.subr.mxu0 0.0
    %3720 = vmatpush1.msra.mxu0 %v3321
    %3721 = vmatprep.subr.mxu0 0.0
    %3722 = vmatpush1.msra.mxu0 %v3322
    %3723 = vmatprep.subr.mxu0 0.0
    %3724 = vmatpush1.msra.mxu0 %v3323
    %3725 = vmatprep.subr.mxu0 0.0
    %3726 = vmatpush1.msra.mxu0 %v3324
    %3727 = vmatprep.subr.mxu0 0.0
    %3728 = vmatpush1.msra.mxu0 %v3325
    %3729 = vmatprep.subr.mxu0 0.0
    %3730 = vmatpush1.msra.mxu0 %v3326
    %3731 = vmatprep.subr.mxu0 0.0
    %3732 = vmatpush1.msra.mxu0 %v3327
    %3733 = vmatprep.subr.mxu0 0.0
    %3734 = vmatpush1.msra.mxu0 %v3328
    %3735 = vmatprep.subr.mxu0 0.0
    %3736 = vmatpush1.msra.mxu0 %v3329
    %3737 = vmatprep.subr.mxu0 0.0
    %3738 = vmatpush1.msra.mxu0 %v3330
    %3739 = vmatprep.subr.mxu0 0.0
    %3740 = vmatpush1.msra.mxu0 %v3331
    %3741 = vmatprep.mubr.f32.mxu0 %v3195
    %3742 = vmatmul.mubr.f32.gmra.mrb[0].mxu0 %v3194
    %v3743 = vpop.f32.mrb[0].mxu0
    %v3744 = vadd.f32 %v3674, %v3743
    %v3745 = vpop.f32.mrb[0].mxu0
    %3746 = vdwg.mxu0
    %3747 = vmatprep.subr.mxu0 0.0
    %3748 = vmatpush1.msra.mxu0 %v3332
    %3749 = vmatprep.subr.mxu0 0.0
    %3750 = vmatpush1.msra.mxu0 %v3333
    %3751 = vmatprep.subr.mxu0 0.0
    %3752 = vmatpush1.msra.mxu0 %v3334
    %3753 = vmatprep.subr.mxu0 0.0
    %3754 = vmatpush1.msra.mxu0 %v3335
    %3755 = vmatprep.subr.mxu0 0.0
    %3756 = vmatpush1.msra.mxu0 %v3336
    %3757 = vmatprep.subr.mxu0 0.0
    %3758 = vmatpush1.msra.mxu0 %v3337
    %3759 = vmatprep.subr.mxu0 0.0
    %3760 = vmatpush1.msra.mxu0 %v3338
    %3761 = vmatprep.subr.mxu0 0.0
    %3762 = vmatpush1.msra.mxu0 %v3339
    %3763 = vmatprep.subr.mxu0 0.0
    %3764 = vmatpush1.msra.mxu0 %v3340
    %3765 = vmatprep.subr.mxu0 0.0
    %3766 = vmatpush1.msra.mxu0 %v3341
    %3767 = vmatprep.subr.mxu0 0.0
    %3768 = vmatpush1.msra.mxu0 %v3342
    %3769 = vmatprep.subr.mxu0 0.0
    %3770 = vmatpush1.msra.mxu0 %v3343
    %3771 = vmatprep.subr.mxu0 0.0
    %3772 = vmatpush1.msra.mxu0 %v3344
    %3773 = vmatprep.subr.mxu0 0.0
    %3774 = vmatpush1.msra.mxu0 %v3345
    %3775 = vmatprep.subr.mxu0 0.0
    %3776 = vmatpush1.msra.mxu0 %v3346
    %3777 = vmatprep.subr.mxu0 0.0
    %3778 = vmatpush1.msra.mxu0 %v3347
    %3779 = vmatprep.subr.mxu0 0.0
    %3780 = vmatpush1.msra.mxu0 %v3348
    %3781 = vmatprep.subr.mxu0 0.0
    %3782 = vmatpush1.msra.mxu0 %v3349
    %3783 = vmatprep.subr.mxu0 0.0
    %3784 = vmatpush1.msra.mxu0 %v3350
    %3785 = vmatprep.subr.mxu0 0.0
    %3786 = vmatpush1.msra.mxu0 %v3351
    %3787 = vmatprep.subr.mxu0 0.0
    %3788 = vmatpush1.msra.mxu0 %v3352
    %3789 = vmatprep.subr.mxu0 0.0
    %3790 = vmatpush1.msra.mxu0 %v3353
    %3791 = vmatprep.subr.mxu0 0.0
    %3792 = vmatpush1.msra.mxu0 %v3354
    %3793 = vmatprep.subr.mxu0 0.0
    %3794 = vmatpush1.msra.mxu0 %v3355
    %3795 = vmatprep.subr.mxu0 0.0
    %3796 = vmatpush1.msra.mxu0 %v3356
    %3797 = vmatprep.subr.mxu0 0.0
    %3798 = vmatpush1.msra.mxu0 %v3357
    %3799 = vmatprep.subr.mxu0 0.0
    %3800 = vmatpush1.msra.mxu0 %v3358
    %3801 = vmatprep.subr.mxu0 0.0
    %3802 = vmatpush1.msra.mxu0 %v3359
    %3803 = vmatprep.subr.mxu0 0.0
    %3804 = vmatpush1.msra.mxu0 %v3360
    %3805 = vmatprep.subr.mxu0 0.0
    %3806 = vmatpush1.msra.mxu0 %v3361
    %3807 = vmatprep.subr.mxu0 0.0
    %3808 = vmatpush1.msra.mxu0 %v3362
    %3809 = vmatprep.subr.mxu0 0.0
    %3810 = vmatpush1.msra.mxu0 %v3363
    %3811 = vmatprep.mubr.f32.mxu0 %v3197
    %3812 = vmatmul.mubr.f32.gmra.mrb[0].mxu0 %v3196
    %v3813 = vpop.f32.mrb[0].mxu0
    %v3814 = vadd.f32 %v3744, %v3813
    %v3815 = vpop.f32.mrb[0].mxu0
    %3816 = vdwg.mxu0
    %3817 = vmatprep.subr.mxu0 0.0
    %3818 = vmatpush1.msra.mxu0 %v3364
    %3819 = vmatprep.subr.mxu0 0.0
    %3820 = vmatpush1.msra.mxu0 %v3365
    %3821 = vmatprep.subr.mxu0 0.0
    %3822 = vmatpush1.msra.mxu0 %v3366
    %3823 = vmatprep.subr.mxu0 0.0
    %3824 = vmatpush1.msra.mxu0 %v3367
    %3825 = vmatprep.subr.mxu0 0.0
    %3826 = vmatpush1.msra.mxu0 %v3368
    %3827 = vmatprep.subr.mxu0 0.0
    %3828 = vmatpush1.msra.mxu0 %v3369
    %3829 = vmatprep.subr.mxu0 0.0
    %3830 = vmatpush1.msra.mxu0 %v3370
    %3831 = vmatprep.subr.mxu0 0.0
    %3832 = vmatpush1.msra.mxu0 %v3371
    %3833 = vmatprep.subr.mxu0 0.0
    %3834 = vmatpush1.msra.mxu0 %v3372
    %3835 = vmatprep.subr.mxu0 0.0
    %3836 = vmatpush1.msra.mxu0 %v3373
    %3837 = vmatprep.subr.mxu0 0.0
    %3838 = vmatpush1.msra.mxu0 %v3374
    %3839 = vmatprep.subr.mxu0 0.0
    %3840 = vmatpush1.msra.mxu0 %v3375
    %3841 = vmatprep.subr.mxu0 0.0
    %3842 = vmatpush1.msra.mxu0 %v3376
    %3843 = vmatprep.subr.mxu0 0.0
    %3844 = vmatpush1.msra.mxu0 %v3377
    %3845 = vmatprep.subr.mxu0 0.0
    %3846 = vmatpush1.msra.mxu0 %v3378
    %3847 = vmatprep.subr.mxu0 0.0
    %3848 = vmatpush1.msra.mxu0 %v3379
    %3849 = vmatprep.subr.mxu0 0.0
    %3850 = vmatpush1.msra.mxu0 %v3380
    %3851 = vmatprep.subr.mxu0 0.0
    %3852 = vmatpush1.msra.mxu0 %v3381
    %3853 = vmatprep.subr.mxu0 0.0
    %3854 = vmatpush1.msra.mxu0 %v3382
    %3855 = vmatprep.subr.mxu0 0.0
    %3856 = vmatpush1.msra.mxu0 %v3383
    %3857 = vmatprep.subr.mxu0 0.0
    %3858 = vmatpush1.msra.mxu0 %v3384
    %3859 = vmatprep.subr.mxu0 0.0
    %3860 = vmatpush1.msra.mxu0 %v3385
    %3861 = vmatprep.subr.mxu0 0.0
    %3862 = vmatpush1.msra.mxu0 %v3386
    %3863 = vmatprep.subr.mxu0 0.0
    %3864 = vmatpush1.msra.mxu0 %v3387
    %3865 = vmatprep.subr.mxu0 0.0
    %3866 = vmatpush1.msra.mxu0 %v3388
    %3867 = vmatprep.subr.mxu0 0.0
    %3868 = vmatpush1.msra.mxu0 %v3389
    %3869 = vmatprep.subr.mxu0 0.0
    %3870 = vmatpush1.msra.mxu0 %v3390
    %3871 = vmatprep.subr.mxu0 0.0
    %3872 = vmatpush1.msra.mxu0 %v3391
    %3873 = vmatprep.subr.mxu0 0.0
    %3874 = vmatpush1.msra.mxu0 %v3392
    %3875 = vmatprep.subr.mxu0 0.0
    %3876 = vmatpush1.msra.mxu0 %v3393
    %3877 = vmatprep.subr.mxu0 0.0
    %3878 = vmatpush1.msra.mxu0 %v3394
    %3879 = vmatprep.subr.mxu0 0.0
    %3880 = vmatpush1.msra.mxu0 %v3395
    %3881 = vmatprep.mubr.f32.mxu0 %v3199
    %3882 = vmatmul.mubr.f32.gmra.mrb[0].mxu0 %v3198
    %v3883 = vpop.f32.mrb[0].mxu0
    %v3884 = vadd.f32 %v3814, %v3883
    %v3885 = vpop.f32.mrb[0].mxu0
    %3886 = vdwg.mxu0
    %3887 = vmatprep.subr.mxu0 0.0
    %3888 = vmatpush1.msra.mxu0 %v3396
    %3889 = vmatprep.subr.mxu0 0.0
    %3890 = vmatpush1.msra.mxu0 %v3397
    %3891 = vmatprep.subr.mxu0 0.0
    %3892 = vmatpush1.msra.mxu0 %v3398
    %3893 = vmatprep.subr.mxu0 0.0
    %3894 = vmatpush1.msra.mxu0 %v3399
    %3895 = vmatprep.subr.mxu0 0.0
    %3896 = vmatpush1.msra.mxu0 %v3400
    %3897 = vmatprep.subr.mxu0 0.0
    %3898 = vmatpush1.msra.mxu0 %v3401
    %3899 = vmatprep.subr.mxu0 0.0
    %3900 = vmatpush1.msra.mxu0 %v3402
    %3901 = vmatprep.subr.mxu0 0.0
    %3902 = vmatpush1.msra.mxu0 %v3403
    %3903 = vmatprep.subr.mxu0 0.0
    %3904 = vmatpush1.msra.mxu0 %v3404
    %3905 = vmatprep.subr.mxu0 0.0
    %3906 = vmatpush1.msra.mxu0 %v3405
    %3907 = vmatprep.subr.mxu0 0.0
    %3908 = vmatpush1.msra.mxu0 %v3406
    %3909 = vmatprep.subr.mxu0 0.0
    %3910 = vmatpush1.msra.mxu0 %v3407
    %3911 = vmatprep.subr.mxu0 0.0
    %3912 = vmatpush1.msra.mxu0 %v3408
    %3913 = vmatprep.subr.mxu0 0.0
    %3914 = vmatpush1.msra.mxu0 %v3409
    %3915 = vmatprep.subr.mxu0 0.0
    %3916 = vmatpush1.msra.mxu0 %v3410
    %3917 = vmatprep.subr.mxu0 0.0
    %3918 = vmatpush1.msra.mxu0 %v3411
    %3919 = vmatprep.subr.mxu0 0.0
    %3920 = vmatpush1.msra.mxu0 %v3412
    %3921 = vmatprep.subr.mxu0 0.0
    %3922 = vmatpush1.msra.mxu0 %v3413
    %3923 = vmatprep.subr.mxu0 0.0
    %3924 = vmatpush1.msra.mxu0 %v3414
    %3925 = vmatprep.subr.mxu0 0.0
    %3926 = vmatpush1.msra.mxu0 %v3415
    %3927 = vmatprep.subr.mxu0 0.0
    %3928 = vmatpush1.msra.mxu0 %v3416
    %3929 = vmatprep.subr.mxu0 0.0
    %3930 = vmatpush1.msra.mxu0 %v3417
    %3931 = vmatprep.subr.mxu0 0.0
    %3932 = vmatpush1.msra.mxu0 %v3418
    %3933 = vmatprep.subr.mxu0 0.0
    %3934 = vmatpush1.msra.mxu0 %v3419
    %3935 = vmatprep.subr.mxu0 0.0
    %3936 = vmatpush1.msra.mxu0 %v3420
    %3937 = vmatprep.subr.mxu0 0.0
    %3938 = vmatpush1.msra.mxu0 %v3421
    %3939 = vmatprep.subr.mxu0 0.0
    %3940 = vmatpush1.msra.mxu0 %v3422
    %3941 = vmatprep.subr.mxu0 0.0
    %3942 = vmatpush1.msra.mxu0 %v3423
    %3943 = vmatprep.subr.mxu0 0.0
    %3944 = vmatpush1.msra.mxu0 %v3424
    %3945 = vmatprep.subr.mxu0 0.0
    %3946 = vmatpush1.msra.mxu0 %v3425
    %3947 = vmatprep.subr.mxu0 0.0
    %3948 = vmatpush1.msra.mxu0 %v3426
    %3949 = vmatprep.subr.mxu0 0.0
    %3950 = vmatpush1.msra.mxu0 %v3427
    %3951 = vmatprep.mubr.f32.mxu0 %v3201
    %3952 = vmatmul.mubr.f32.gmra.mrb[0].mxu0 %v3200
    %v3953 = vpop.f32.mrb[0].mxu0
    %v3954 = vadd.f32 %v3884, %v3953
    %v3955 = vpop.f32.mrb[0].mxu0
    %3956 = vdwg.mxu0
    %3957 = vmatprep.subr.mxu0 0.0
    %3958 = vmatpush1.msra.mxu0 %v3428
    %3959 = vmatprep.subr.mxu0 0.0
    %3960 = vmatpush1.msra.mxu0 %v3429
    %3961 = vmatprep.subr.mxu0 0.0
    %3962 = vmatpush1.msra.mxu0 %v3430
    %3963 = vmatprep.subr.mxu0 0.0
    %3964 = vmatpush1.msra.mxu0 %v3431
    %3965 = vmatprep.subr.mxu0 0.0
    %3966 = vmatpush1.msra.mxu0 %v3432
    %3967 = vmatprep.subr.mxu0 0.0
    %3968 = vmatpush1.msra.mxu0 %v3433
    %3969 = vmatprep.subr.mxu0 0.0
    %3970 = vmatpush1.msra.mxu0 %v3434
    %3971 = vmatprep.subr.mxu0 0.0
    %3972 = vmatpush1.msra.mxu0 %v3435
    %3973 = vmatprep.subr.mxu0 0.0
    %3974 = vmatpush1.msra.mxu0 %v3436
    %3975 = vmatprep.subr.mxu0 0.0
    %3976 = vmatpush1.msra.mxu0 %v3437
    %3977 = vmatprep.subr.mxu0 0.0
    %3978 = vmatpush1.msra.mxu0 %v3438
    %3979 = vmatprep.subr.mxu0 0.0
    %3980 = vmatpush1.msra.mxu0 %v3439
    %3981 = vmatprep.subr.mxu0 0.0
    %3982 = vmatpush1.msra.mxu0 %v3440
    %3983 = vmatprep.subr.mxu0 0.0
    %3984 = vmatpush1.msra.mxu0 %v3441
    %3985 = vmatprep.subr.mxu0 0.0
    %3986 = vmatpush1.msra.mxu0 %v3442
    %3987 = vmatprep.subr.mxu0 0.0
    %3988 = vmatpush1.msra.mxu0 %v3443
    %3989 = vmatprep.subr.mxu0 0.0
    %3990 = vmatpush1.msra.mxu0 %v3444
    %3991 = vmatprep.subr.mxu0 0.0
    %3992 = vmatpush1.msra.mxu0 %v3445
    %3993 = vmatprep.subr.mxu0 0.0
    %3994 = vmatpush1.msra.mxu0 %v3446
    %3995 = vmatprep.subr.mxu0 0.0
    %3996 = vmatpush1.msra.mxu0 %v3447
    %3997 = vmatprep.subr.mxu0 0.0
    %3998 = vmatpush1.msra.mxu0 %v3448
    %3999 = vmatprep.subr.mxu0 0.0
    %4000 = vmatpush1.msra.mxu0 %v3449
    %4001 = vmatprep.subr.mxu0 0.0
    %4002 = vmatpush1.msra.mxu0 %v3450
    %4003 = vmatprep.subr.mxu0 0.0
    %4004 = vmatpush1.msra.mxu0 %v3451
    %4005 = vmatprep.subr.mxu0 0.0
    %4006 = vmatpush1.msra.mxu0 %v3452
    %4007 = vmatprep.subr.mxu0 0.0
    %4008 = vmatpush1.msra.mxu0 %v3453
    %4009 = vmatprep.subr.mxu0 0.0
    %4010 = vmatpush1.msra.mxu0 %v3454
    %4011 = vmatprep.subr.mxu0 0.0
    %4012 = vmatpush1.msra.mxu0 %v3455
    %4013 = vmatprep.subr.mxu0 0.0
    %4014 = vmatpush1.msra.mxu0 %v3456
    %4015 = vmatprep.subr.mxu0 0.0
    %4016 = vmatpush1.msra.mxu0 %v3457
    %4017 = vmatprep.subr.mxu0 0.0
    %4018 = vmatpush1.msra.mxu0 %v3458
    %4019 = vmatprep.subr.mxu0 0.0
    %4020 = vmatpush1.msra.mxu0 %v3459
    %4021 = vmatprep.mubr.f32.mxu0 %v3203
    %4022 = vmatmul.mubr.f32.gmra.mrb[0].mxu0 %v3202
    %v4023 = vpop.f32.mrb[0].mxu0
    %v4024 = vadd.f32 %v3954, %v4023
    %v4025 = vpop.f32.mrb[0].mxu0
    %4026 = vdwg.mxu0
    %4027 = vst [vmem:[#allocation17] sm:$0xff] %v4024
    // Predicated region
    $region74: #{tpu_custom_call.1} parent=1 // pred_check
      _
    $region75: #{tpu_custom_call.1} parent=1 // pred_check_branch
      %4029 = sbr.rel (0) target = $region77
    $region76: #{tpu_custom_call.1} parent=1 // pred_region
      %s4031 = ssub.s32 128, 128
      %4032 = vsyncadd [#allocation4], %s4031
      %s4034 = sshll.u32 [#allocation17], 4
      %s4035 = int_to_ptr.vmem [resolvable:$true] %s4034
      %4037 = dma.vmem_to_hbm [thread:$0]  %s4035, 128, %s9, [#allocation4]
    $region77: #{tpu_custom_call.1} parent=1 // pred_fallthru
      _
    // Predicated region
    $region78: #{tpu_custom_call.1} parent=1 // pred_check
      _
    $region79: #{tpu_custom_call.1} parent=1 // pred_check_branch
      %4039 = sbr.rel (0) target = $region81
    $region80: #{tpu_custom_call.1} parent=1 // pred_region
      %4040 = dma.done [#allocation4], 128
    $region81: #{tpu_custom_call.1} parent=1 // pred_fallthru
      _
    %4041 = vsyncpa [#allocation3], 1
    %4042 = vsyncpa [#allocation6], 1
    %4043 = vsyncpa [#allocation9], 1
    %4044 = vsyncpa [#allocation12], 1
    %4045 = vsyncpa [#allocation15], 1
    %4046 = vsyncpa [#allocation4], 1

</llo_original>
